<compile_context>
chip_gen: v6e
topology: v6e:2x2x1
jax: 0.10.0
libtpu: 0.0.40
codegen_flags: <defaults>
</compile_context>

<pallas_src>
import functools
import math

import jax
import jax.numpy as jnp
from jax.experimental import pallas as pl
from jax.experimental.pallas import tpu as pltpu


# ----------------------------------------------------------------------------- in-kernel helpers

def _layer_norm(y, g, b, eps):
    # y: [L, D] f32 ; g, b: [1, D] f32
    mean = jnp.mean(y, axis=-1, keepdims=True)
    var = jnp.mean(jnp.square(y - mean), axis=-1, keepdims=True)
    return (y - mean) * jax.lax.rsqrt(var + eps) * g + b


def _attn_heads(q, k, v, mask, num_heads, dh, scale, attn_ref, ctx_ref):
    """Multi-head scaled-dot-product attention.

    q: [Lq, D] f32, k/v: [Lk, D] f32, mask: bool broadcastable to [H, Lq, Lk]
    (True == masked).  Stores softmax probs (all heads, one store) to attn_ref[0]
    and per-head context into lane slices of ctx_ref ([Lq, D] f32 VMEM scratch).
    Returns the concatenated context [Lq, D] f32.
    """
    scores = []
    for h in range(num_heads):                       # static unroll; tiny matmuls
        sl = slice(h * dh, (h + 1) * dh)
        s = jax.lax.dot_general(q[:, sl].astype(jnp.bfloat16),
                                k[:, sl].astype(jnp.bfloat16),
                                (((1,), (1,)), ((), ())),
                                preferred_element_type=jnp.float32)
        scores.append(s)
    s_all = jnp.stack(scores, axis=0) * scale        # [H, Lq, Lk] (leading-axis concat)
    s_all = jnp.where(mask, -1e30, s_all)            # mask applied once for all heads
    m = jnp.max(s_all, axis=-1, keepdims=True)
    p = jnp.exp(s_all - m)
    a_all = p / jnp.sum(p, axis=-1, keepdims=True)   # exact normalization
    attn_ref[0] = a_all.astype(attn_ref.dtype)       # single store for all heads
    for h in range(num_heads):
        sl = slice(h * dh, (h + 1) * dh)
        ctx_ref[:, sl] = jax.lax.dot_general(a_all[h].astype(jnp.bfloat16),
                                             v[:, sl].astype(jnp.bfloat16),
                                             (((1,), (0,)), ((), ())),
                                             preferred_element_type=jnp.float32)
    return ctx_ref[...]


# ----------------------------------------------------------------------------- kernels

def _enc_layer_kernel(x_ref, pad_ref, wqkv_ref, bqkv_ref, wo_ref,
                      w1_ref, b1_ref, w2_ref, vec_ref,
                      out_ref, attn_ref, ctx_scr, *, num_heads, scale, eps):
    # One program per batch element: full encoder layer (MHA + FFN + 2 LNs).
    D = x_ref.shape[2]
    dh = D // num_heads

    x = x_ref[0]                                     # [L, D] bf16
    x_f = x.astype(jnp.float32)
    mask = pad_ref[0] > 0.5                          # [1, L] bool (True == PAD key)
    vec = vec_ref[...]                               # [6, D] packed: bo, g1, b1, b2, g2, b2

    qkv = jnp.dot(x, wqkv_ref[...], preferred_element_type=jnp.float32) + bqkv_ref[...]
    ctx = _attn_heads(qkv[:, :D], qkv[:, D:2 * D], qkv[:, 2 * D:],
                      mask, num_heads, dh, scale, attn_ref, ctx_scr)

    o = jnp.dot(ctx.astype(jnp.bfloat16), wo_ref[...],
                preferred_element_type=jnp.float32) + vec[0:1]
    y = _layer_norm(o + x_f, vec[1:2], vec[2:3], eps)

    h = jnp.dot(y.astype(jnp.bfloat16), w1_ref[...],
                preferred_element_type=jnp.float32) + b1_ref[...]
    h = jnp.maximum(h, 0.0)
    f = jnp.dot(h.astype(jnp.bfloat16), w2_ref[...],
                preferred_element_type=jnp.float32) + vec[3:4]
    out_ref[0] = _layer_norm(f + y, vec[4:5], vec[5:6], eps).astype(out_ref.dtype)


def _dec_layer_kernel(x_ref, enc_ref, padt_ref, pads_ref,
                      wqkv_ref, bqkv_ref, wos_ref,
                      wqc_ref, wkvc_ref, bkvc_ref, woc_ref,
                      w1_ref, b1_ref, w2_ref, vec_ref,
                      out_ref, sattn_ref, cattn_ref, ctx_scr,
                      *, num_heads, scale, eps):
    # One program per batch element: full decoder layer
    # (masked self-attn + cross-attn + FFN, each with residual + LayerNorm).
    Lt = x_ref.shape[1]
    D = x_ref.shape[2]
    dh = D // num_heads

    x = x_ref[0]                                     # [Lt, D] bf16
    x_f = x.astype(jnp.float32)
    enc = enc_ref[0]                                 # [Ls, D] bf16
    vec = vec_ref[...]                               # [10, D] packed vectors

    # masked self-attention: padding OR causal (mask built in-kernel, no DMA)
    row = jax.lax.broadcasted_iota(jnp.int32, (Lt, Lt), 0)
    col = jax.lax.broadcasted_iota(jnp.int32, (Lt, Lt), 1)
    self_mask = jnp.logical_or((col > row)[None], padt_ref[0] > 0.5)   # [1, Lt, Lt]

    qkv = jnp.dot(x, wqkv_ref[...], preferred_element_type=jnp.float32) + bqkv_ref[...]
    ctx = _attn_heads(qkv[:, :D], qkv[:, D:2 * D], qkv[:, 2 * D:],
                      self_mask, num_heads, dh, scale, sattn_ref, ctx_scr)
    o = jnp.dot(ctx.astype(jnp.bfloat16), wos_ref[...],
                preferred_element_type=jnp.float32) + vec[0:1]
    y1 = _layer_norm(o + x_f, vec[1:2], vec[2:3], eps)

    # cross attention: Q from decoder state, K/V from encoder output
    ctx_mask = pads_ref[0] > 0.5                     # [1, Ls]
    q = jnp.dot(y1.astype(jnp.bfloat16), wqc_ref[...],
                preferred_element_type=jnp.float32) + vec[3:4]
    kv = jnp.dot(enc, wkvc_ref[...], preferred_element_type=jnp.float32) + bkvc_ref[...]
    ctx2 = _attn_heads(q, kv[:, :D], kv[:, D:],
                       ctx_mask, num_heads, dh, scale, cattn_ref, ctx_scr)
    o2 = jnp.dot(ctx2.astype(jnp.bfloat16), woc_ref[...],
                 preferred_element_type=jnp.float32) + vec[4:5]
    y2 = _layer_norm(o2 + y1, vec[5:6], vec[6:7], eps)

    # FFN (Conv1d kernel-1 == dense) + residual + LayerNorm
    h = jnp.dot(y2.astype(jnp.bfloat16), w1_ref[...],
                preferred_element_type=jnp.float32) + b1_ref[...]
    h = jnp.maximum(h, 0.0)
    f = jnp.dot(h.astype(jnp.bfloat16), w2_ref[...],
                preferred_element_type=jnp.float32) + vec[7:8]
    out_ref[0] = _layer_norm(f + y2, vec[8:9], vec[9:10], eps).astype(out_ref.dtype)


def _proj_softmax_kernel(x_ref, w_ref, o_ref):
    # final nn.Linear(model_dim, tgt_vocab, bias=False) + Softmax(dim=2)
    logits = jnp.dot(x_ref[...], w_ref[...], preferred_element_type=jnp.float32)
    m = jnp.max(logits, axis=-1, keepdims=True)
    e = jnp.exp(logits - m)
    o_ref[...] = e / jnp.sum(e, axis=-1, keepdims=True)


# ----------------------------------------------------------------------------- wrappers

def _row_tile(M, cap=256):
    """Row tile <= cap, multiple of 8, dividing M, preferring >=2 grid steps."""
    if M <= 8:
        return M
    t = min(cap, M)
    t -= t % 8
    best = M
    while t >= 8:
        if M % t == 0:
            if M // t >= 2:
                return t
            best = t
        t -= 8
    return best


def pallas_encoder_layer(lp, x, pad_src, num_heads, eps=1e-5):
    B, L, D = x.shape
    F = lp["w1"].shape[1]
    scale = 1.0 / math.sqrt(D // num_heads)
    kern = functools.partial(_enc_layer_kernel, num_heads=num_heads, scale=scale, eps=eps)
    out, attn = pl.pallas_call(
        kern,
        out_shape=(jax.ShapeDtypeStruct((B, L, D), jnp.bfloat16),
                   jax.ShapeDtypeStruct((B, num_heads, L, L), jnp.bfloat16)),
        grid=(B,),
        in_specs=[
            pl.BlockSpec((1, L, D), lambda b: (b, 0, 0)),          # activation (bf16)
            pl.BlockSpec((1, 1, L), lambda b: (b, 0, 0)),          # key-pad flags
            pl.BlockSpec((D, 3 * D), lambda b: (0, 0)),            # wqkv (bf16, resident)
            pl.BlockSpec((1, 3 * D), lambda b: (0, 0)),            # bqkv
            pl.BlockSpec((D, D), lambda b: (0, 0)),                # wo
            pl.BlockSpec((D, F), lambda b: (0, 0)),                # ffn w1
            pl.BlockSpec((1, F), lambda b: (0, 0)),                # ffn b1
            pl.BlockSpec((F, D), lambda b: (0, 0)),                # ffn w2
            pl.BlockSpec((6, D), lambda b: (0, 0)),                # packed bias/LN vectors
        ],
        out_specs=(pl.BlockSpec((1, L, D), lambda b: (b, 0, 0)),
                   pl.BlockSpec((1, num_heads, L, L), lambda b: (b, 0, 0, 0))),
        scratch_shapes=[pltpu.VMEM((L, D), jnp.float32)],
        compiler_params=pltpu.CompilerParams(dimension_semantics=("parallel",)),
    )(x, pad_src, lp["wqkv"], lp["bqkv"], lp["wo"],
      lp["w1"], lp["b1"], lp["w2"], lp["vec"])
    return out, attn.reshape(B * num_heads, L, L)


def pallas_decoder_layer(lp, x, enc_out, pad_tgt, pad_src, num_heads, eps=1e-5):
    B, Lt, D = x.shape
    Ls = enc_out.shape[1]
    F = lp["w1"].shape[1]
    scale = 1.0 / math.sqrt(D // num_heads)
    kern = functools.partial(_dec_layer_kernel, num_heads=num_heads, scale=scale, eps=eps)
    out, sattn, cattn = pl.pallas_call(
        kern,
        out_shape=(jax.ShapeDtypeStruct((B, Lt, D), jnp.bfloat16),
                   jax.ShapeDtypeStruct((B, num_heads, Lt, Lt), jnp.bfloat16),
                   jax.ShapeDtypeStruct((B, num_heads, Lt, Ls), jnp.bfloat16)),
        grid=(B,),
        in_specs=[
            pl.BlockSpec((1, Lt, D), lambda b: (b, 0, 0)),         # decoder activation
            pl.BlockSpec((1, Ls, D), lambda b: (b, 0, 0)),         # encoder output
            pl.BlockSpec((1, 1, Lt), lambda b: (b, 0, 0)),         # tgt key-pad flags
            pl.BlockSpec((1, 1, Ls), lambda b: (b, 0, 0)),         # src key-pad flags
            pl.BlockSpec((D, 3 * D), lambda b: (0, 0)),            # self wqkv
            pl.BlockSpec((1, 3 * D), lambda b: (0, 0)),            # self bqkv
            pl.BlockSpec((D, D), lambda b: (0, 0)),                # self wo
            pl.BlockSpec((D, D), lambda b: (0, 0)),                # cross wq
            pl.BlockSpec((D, 2 * D), lambda b: (0, 0)),            # cross wkv
            pl.BlockSpec((1, 2 * D), lambda b: (0, 0)),            # cross bkv
            pl.BlockSpec((D, D), lambda b: (0, 0)),                # cross wo
            pl.BlockSpec((D, F), lambda b: (0, 0)),                # ffn w1
            pl.BlockSpec((1, F), lambda b: (0, 0)),                # ffn b1
            pl.BlockSpec((F, D), lambda b: (0, 0)),                # ffn w2
            pl.BlockSpec((10, D), lambda b: (0, 0)),               # packed bias/LN vectors
        ],
        out_specs=(pl.BlockSpec((1, Lt, D), lambda b: (b, 0, 0)),
                   pl.BlockSpec((1, num_heads, Lt, Lt), lambda b: (b, 0, 0, 0)),
                   pl.BlockSpec((1, num_heads, Lt, Ls), lambda b: (b, 0, 0, 0))),
        scratch_shapes=[pltpu.VMEM((Lt, D), jnp.float32)],
        compiler_params=pltpu.CompilerParams(dimension_semantics=("parallel",)),
    )(x, enc_out, pad_tgt, pad_src,
      lp["wqkv"], lp["bqkv"], lp["wos"],
      lp["wqc"], lp["wkvc"], lp["bkvc"], lp["woc"],
      lp["w1"], lp["b1"], lp["w2"], lp["vec"])
    return (out,
            sattn.reshape(B * num_heads, Lt, Lt),
            cattn.reshape(B * num_heads, Lt, Ls))


def pallas_proj_softmax(x2d, w):
    M, D = x2d.shape
    V = w.shape[1]
    tm = _row_tile(M)
    return pl.pallas_call(
        _proj_softmax_kernel,
        out_shape=jax.ShapeDtypeStruct((M, V), jnp.float32),
        grid=(M // tm,),
        in_specs=[pl.BlockSpec((tm, D), lambda i: (i, 0)),
                  pl.BlockSpec((D, V), lambda i: (0, 0))],
        out_specs=pl.BlockSpec((tm, V), lambda i: (i, 0)),
        compiler_params=pltpu.CompilerParams(dimension_semantics=("parallel",)),
    )(x2d, w)


# ----------------------------------------------------------------------------- model glue

def positional_lookup(pos_table, lens, L):
    idx = jnp.arange(L)[None, :]
    pos_idx = jnp.where(idx < lens[:, None], idx + 1, 0)   # 1..len, then PAD idx 0
    return pos_table[pos_idx]


def key_pad_flags(seq):
    # 1.0 where the key token is PAD (== 0); shape [B, 1, L] (tiny, O(B*L))
    return (seq == 0).astype(jnp.float32)[:, None, :]


def encoder_forward(p, src_seq, src_len, num_heads):
    B, L = src_seq.shape
    out = (p["emb"][src_seq] + positional_lookup(p["pos_table"], src_len, L)
           ).astype(jnp.bfloat16)
    pad_src = key_pad_flags(src_seq)
    attns = []
    for lp in p["layers"]:
        out, a = pallas_encoder_layer(lp, out, pad_src, num_heads)
        attns.append(a)
    return out, tuple(attns)


def decoder_forward(p, tgt_seq, tgt_len, enc_out, pad_src, num_heads):
    B, L = tgt_seq.shape
    out = (p["emb"][tgt_seq] + positional_lookup(p["pos_table"], tgt_len, L)
           ).astype(jnp.bfloat16)
    pad_tgt = key_pad_flags(tgt_seq)
    self_attns, ctx_attns = [], []
    for lp in p["layers"]:
        out, sa, ca = pallas_decoder_layer(lp, out, enc_out, pad_tgt, pad_src, num_heads)
        self_attns.append(sa)
        ctx_attns.append(ca)
    return out, tuple(self_attns), tuple(ctx_attns)


def transformer_forward(params, src_seq, src_len, tgt_seq, tgt_len, *, num_heads):
    pad_src = key_pad_flags(src_seq)                  # shared by cross-attention
    enc_out, enc_self_att = encoder_forward(params["encoder"], src_seq, src_len, num_heads)
    dec_out, dec_self_att, con_att = decoder_forward(
        params["decoder"], tgt_seq, tgt_len, enc_out, pad_src, num_heads)
    B, Lt, D = dec_out.shape
    probs = pallas_proj_softmax(dec_out.reshape(-1, D), params["proj_w"]).reshape(B, Lt, -1)
    return probs, enc_self_att, dec_self_att, con_att


# ----------------------------------------------------------------------------- params

def init_params(key, src_vocab, src_max_len, tgt_vocab, tgt_max_len,
                num_layers, model_dim, ffn_dim):
    D, F = model_dim, ffn_dim
    keys = iter(jax.random.split(key, 4096))

    def w(a, b):
        # weights pre-cast to bf16 once (no per-forward casts / extra HBM copies)
        return (jax.random.normal(next(keys), (a, b), jnp.float32) * 0.05
                ).astype(jnp.bfloat16)

    zeros = lambda n: jnp.zeros((n, D), jnp.float32)
    ones = lambda n: jnp.ones((n, D), jnp.float32)

    def enc_layer_params():
        # packed [bo, ln1_g, ln1_b, ffn_b2, ln2_g, ln2_b]
        vec = jnp.concatenate([zeros(1), ones(1), zeros(1),
                               zeros(1), ones(1), zeros(1)], axis=0)
        return dict(wqkv=w(D, 3 * D), bqkv=jnp.zeros((1, 3 * D), jnp.float32),
                    wo=w(D, D),
                    w1=w(D, F), b1=jnp.zeros((1, F), jnp.float32), w2=w(F, D),
                    vec=vec)

    def dec_layer_params():
        # packed [bo_self, ln1_g, ln1_b, bq_cross, bo_cross, ln2_g, ln2_b,
        #         ffn_b2, ln3_g, ln3_b]
        vec = jnp.concatenate([zeros(1), ones(1), zeros(1),
                               zeros(1), zeros(1), ones(1), zeros(1),
                               zeros(1), ones(1), zeros(1)], axis=0)
        return dict(wqkv=w(D, 3 * D), bqkv=jnp.zeros((1, 3 * D), jnp.float32),
                    wos=w(D, D),
                    wqc=w(D, D), wkvc=w(D, 2 * D),
                    bkvc=jnp.zeros((1, 2 * D), jnp.float32), woc=w(D, D),
                    w1=w(D, F), b1=jnp.zeros((1, F), jnp.float32), w2=w(F, D),
                    vec=vec)

    def emb_table(vocab):
        t = jax.random.normal(next(keys), (vocab + 1, D), jnp.float32) * 0.05
        return t.at[0].set(0.0)                       # padding_idx=0

    def pe_table(max_len):
        pos = jnp.arange(max_len, dtype=jnp.float32)[:, None]
        j = jnp.arange(D)[None, :]
        angle = pos / jnp.power(10000.0, 2.0 * (j // 2).astype(jnp.float32) / D)
        pe = jnp.where(j % 2 == 0, jnp.sin(angle), jnp.cos(angle))
        return jnp.concatenate([jnp.zeros((1, D), jnp.float32), pe], axis=0)

    encoder = dict(emb=emb_table(src_vocab), pos_table=pe_table(src_max_len),
                   layers=[enc_layer_params() for _ in range(num_layers)])
    decoder = dict(emb=emb_table(tgt_vocab), pos_table=pe_table(tgt_max_len),
                   layers=[dec_layer_params() for _ in range(num_layers)])
    proj_w = w(D, tgt_vocab)                          # nn.Linear(D, tgt_vocab, bias=False)
    return dict(encoder=encoder, decoder=decoder, proj_w=proj_w)


# ----------------------------------------------------------------------------- main

if __name__ == "__main__":
    # small synthetic configuration
    src_vocab, tgt_vocab = 11, 13
    src_max_len = tgt_max_len = 8
    num_layers, model_dim, num_heads, ffn_dim = 2, 32, 4, 64
    B, Ls, Lt = 2, 8, 8

    root = jax.random.PRNGKey(0)
    k_params, k_src, k_tgt = jax.random.split(root, 3)
    params = init_params(k_params, src_vocab, src_max_len, tgt_vocab, tgt_max_len,
                         num_layers, model_dim, ffn_dim)

    src_len = jnp.array([8, 5], dtype=jnp.int32)       # max == Ls (required by ref module)
    tgt_len = jnp.array([8, 6], dtype=jnp.int32)

    src_tok = jax.random.randint(k_src, (B, Ls), 1, src_vocab + 1, dtype=jnp.int32)
    tgt_tok = jax.random.randint(k_tgt, (B, Lt), 1, tgt_vocab + 1, dtype=jnp.int32)
    # zero out padded positions (token id 0 == PAD)
    src_seq = jnp.where(jnp.arange(Ls)[None, :] < src_len[:, None], src_tok, 0)
    tgt_seq = jnp.where(jnp.arange(Lt)[None, :] < tgt_len[:, None], tgt_tok, 0)

    fwd = jax.jit(functools.partial(transformer_forward, num_heads=num_heads))
    out, enc_att, dec_att, con_att = fwd(params, src_seq, src_len, tgt_seq, tgt_len)
    jax.block_until_ready((out, enc_att, dec_att, con_att))

    assert out.shape == (B, Lt, tgt_vocab)
    assert len(enc_att) == num_layers and enc_att[0].shape == (B * num_heads, Ls, Ls)
    assert len(dec_att) == num_layers and dec_att[0].shape == (B * num_heads, Lt, Lt)
    assert len(con_att) == num_layers and con_att[0].shape == (B * num_heads, Lt, Ls)
    assert bool(jnp.all(jnp.isfinite(out)))
    assert bool(jnp.allclose(jnp.sum(out, axis=-1), 1.0, atol=1e-4))

    print("KERNEL_OK")
</pallas_src>

<mosaic_0001>
module attributes {stable_mosaic.version = 11 : i64} {
  func.func @_enc_layer_kernel(%arg0: i32, %arg1: memref<1x8x32xbf16, #tpu.memory_space<vmem>>, %arg2: memref<1x1x8xf32, #tpu.memory_space<vmem>>, %arg3: memref<32x96xbf16, #tpu.memory_space<vmem>>, %arg4: memref<1x96xf32, #tpu.memory_space<vmem>>, %arg5: memref<32x32xbf16, #tpu.memory_space<vmem>>, %arg6: memref<32x64xbf16, #tpu.memory_space<vmem>>, %arg7: memref<1x64xf32, #tpu.memory_space<vmem>>, %arg8: memref<64x32xbf16, #tpu.memory_space<vmem>>, %arg9: memref<6x32xf32, #tpu.memory_space<vmem>>, %arg10: memref<1x8x32xbf16, #tpu.memory_space<vmem>>, %arg11: memref<1x4x8x8xbf16, #tpu.memory_space<vmem>>, %arg12: memref<8x32xf32, #tpu.memory_space<vmem>>) attributes {dimension_semantics = [#tpu.dimension_semantics<parallel>], iteration_bounds = array<i64: 2>, scalar_prefetch = 0 : i64, scratch_operands = 1 : i64, tpu.core_type = #tpu.core_type<tc>, window_params = [{transform_indices = @transform_0, window_bounds = array<i64: 1, 8, 32>}, {transform_indices = @transform_1, window_bounds = array<i64: 1, 1, 8>}, {pipeline_mode = #tpu.pipeline_mode<synchronous>, transform_indices = @transform_2, window_bounds = array<i64: 32, 96>}, {pipeline_mode = #tpu.pipeline_mode<synchronous>, transform_indices = @transform_3, window_bounds = array<i64: 1, 96>}, {pipeline_mode = #tpu.pipeline_mode<synchronous>, transform_indices = @transform_4, window_bounds = array<i64: 32, 32>}, {pipeline_mode = #tpu.pipeline_mode<synchronous>, transform_indices = @transform_5, window_bounds = array<i64: 32, 64>}, {pipeline_mode = #tpu.pipeline_mode<synchronous>, transform_indices = @transform_6, window_bounds = array<i64: 1, 64>}, {pipeline_mode = #tpu.pipeline_mode<synchronous>, transform_indices = @transform_7, window_bounds = array<i64: 64, 32>}, {pipeline_mode = #tpu.pipeline_mode<synchronous>, transform_indices = @transform_8, window_bounds = array<i64: 6, 32>}, {transform_indices = @transform_9, window_bounds = array<i64: 1, 8, 32>}, {transform_indices = @transform_10, window_bounds = array<i64: 1, 4, 8, 8>}]} {
    %c0 = arith.constant 0 : index
    %c0_0 = arith.constant 0 : index
    %c0_1 = arith.constant 0 : index
    %0 = vector.load %arg1[%c0, %c0_0, %c0_1] : memref<1x8x32xbf16, #tpu.memory_space<vmem>>, vector<1x8x32xbf16>
    %1 = vector.shape_cast %0 : vector<1x8x32xbf16> to vector<8x32xbf16>
    %2 = arith.extf %1 : vector<8x32xbf16> to vector<8x32xf32>
    %c0_2 = arith.constant 0 : index
    %c0_3 = arith.constant 0 : index
    %c0_4 = arith.constant 0 : index
    %3 = vector.load %arg2[%c0_2, %c0_3, %c0_4] : memref<1x1x8xf32, #tpu.memory_space<vmem>>, vector<1x1x8xf32>
    %4 = vector.shape_cast %3 : vector<1x1x8xf32> to vector<1x8xf32>
    %cst = arith.constant 5.000000e-01 : f32
    %5 = vector.broadcast %cst : f32 to vector<1x8xf32>
    %6 = arith.cmpf ogt, %4, %5 : vector<1x8xf32>
    %c0_5 = arith.constant 0 : index
    %c0_6 = arith.constant 0 : index
    %7 = vector.load %arg9[%c0_5, %c0_6] : memref<6x32xf32, #tpu.memory_space<vmem>>, vector<6x32xf32>
    %c0_7 = arith.constant 0 : index
    %c0_8 = arith.constant 0 : index
    %8 = vector.load %arg3[%c0_7, %c0_8] : memref<32x96xbf16, #tpu.memory_space<vmem>>, vector<32x96xbf16>
    %cst_9 = arith.constant dense<0.000000e+00> : vector<8x96xf32>
    %9 = tpu.matmul %1, %8, %cst_9 {dimension_numbers = #tpu.dot_dimension_numbers<[1], [0], [0], [1], [0, 0, 1, 1], [], []>} : vector<8x32xbf16>, vector<32x96xbf16>, vector<8x96xf32> -> vector<8x96xf32>
    %c0_10 = arith.constant 0 : index
    %c0_11 = arith.constant 0 : index
    %10 = vector.load %arg4[%c0_10, %c0_11] : memref<1x96xf32, #tpu.memory_space<vmem>>, vector<1x96xf32>
    %11 = vector.broadcast %10 : vector<1x96xf32> to vector<8x96xf32>
    %12 = arith.addf %9, %11 : vector<8x96xf32>
    %13 = vector.extract_strided_slice %12 {offsets = [0, 0], sizes = [8, 32], strides = [1, 1]} : vector<8x96xf32> to vector<8x32xf32>
    %14 = vector.extract_strided_slice %12 {offsets = [0, 32], sizes = [8, 32], strides = [1, 1]} : vector<8x96xf32> to vector<8x32xf32>
    %15 = vector.extract_strided_slice %12 {offsets = [0, 64], sizes = [8, 32], strides = [1, 1]} : vector<8x96xf32> to vector<8x32xf32>
    %16 = vector.extract_strided_slice %13 {offsets = [0, 0], sizes = [8, 8], strides = [1, 1]} : vector<8x32xf32> to vector<8x8xf32>
    %17 = arith.truncf %16 : vector<8x8xf32> to vector<8x8xbf16>
    %18 = vector.extract_strided_slice %14 {offsets = [0, 0], sizes = [8, 8], strides = [1, 1]} : vector<8x32xf32> to vector<8x8xf32>
    %19 = arith.truncf %18 : vector<8x8xf32> to vector<8x8xbf16>
    %cst_12 = arith.constant dense<0.000000e+00> : vector<8x8xf32>
    %20 = tpu.matmul %17, %19, %cst_12 {dimension_numbers = #tpu.dot_dimension_numbers<[1], [1], [0], [0], [0, 0, 1, 0], [], []>} : vector<8x8xbf16>, vector<8x8xbf16>, vector<8x8xf32> -> vector<8x8xf32>
    %21 = vector.extract_strided_slice %13 {offsets = [0, 8], sizes = [8, 8], strides = [1, 1]} : vector<8x32xf32> to vector<8x8xf32>
    %22 = arith.truncf %21 : vector<8x8xf32> to vector<8x8xbf16>
    %23 = vector.extract_strided_slice %14 {offsets = [0, 8], sizes = [8, 8], strides = [1, 1]} : vector<8x32xf32> to vector<8x8xf32>
    %24 = arith.truncf %23 : vector<8x8xf32> to vector<8x8xbf16>
    %cst_13 = arith.constant dense<0.000000e+00> : vector<8x8xf32>
    %25 = tpu.matmul %22, %24, %cst_13 {dimension_numbers = #tpu.dot_dimension_numbers<[1], [1], [0], [0], [0, 0, 1, 0], [], []>} : vector<8x8xbf16>, vector<8x8xbf16>, vector<8x8xf32> -> vector<8x8xf32>
    %26 = vector.extract_strided_slice %13 {offsets = [0, 16], sizes = [8, 8], strides = [1, 1]} : vector<8x32xf32> to vector<8x8xf32>
    %27 = arith.truncf %26 : vector<8x8xf32> to vector<8x8xbf16>
    %28 = vector.extract_strided_slice %14 {offsets = [0, 16], sizes = [8, 8], strides = [1, 1]} : vector<8x32xf32> to vector<8x8xf32>
    %29 = arith.truncf %28 : vector<8x8xf32> to vector<8x8xbf16>
    %cst_14 = arith.constant dense<0.000000e+00> : vector<8x8xf32>
    %30 = tpu.matmul %27, %29, %cst_14 {dimension_numbers = #tpu.dot_dimension_numbers<[1], [1], [0], [0], [0, 0, 1, 0], [], []>} : vector<8x8xbf16>, vector<8x8xbf16>, vector<8x8xf32> -> vector<8x8xf32>
    %31 = vector.extract_strided_slice %13 {offsets = [0, 24], sizes = [8, 8], strides = [1, 1]} : vector<8x32xf32> to vector<8x8xf32>
    %32 = arith.truncf %31 : vector<8x8xf32> to vector<8x8xbf16>
    %33 = vector.extract_strided_slice %14 {offsets = [0, 24], sizes = [8, 8], strides = [1, 1]} : vector<8x32xf32> to vector<8x8xf32>
    %34 = arith.truncf %33 : vector<8x8xf32> to vector<8x8xbf16>
    %cst_15 = arith.constant dense<0.000000e+00> : vector<8x8xf32>
    %35 = tpu.matmul %32, %34, %cst_15 {dimension_numbers = #tpu.dot_dimension_numbers<[1], [1], [0], [0], [0, 0, 1, 0], [], []>} : vector<8x8xbf16>, vector<8x8xbf16>, vector<8x8xf32> -> vector<8x8xf32>
    %36 = vector.shape_cast %20 : vector<8x8xf32> to vector<1x8x8xf32>
    %37 = vector.shape_cast %25 : vector<8x8xf32> to vector<1x8x8xf32>
    %38 = vector.shape_cast %30 : vector<8x8xf32> to vector<1x8x8xf32>
    %39 = vector.shape_cast %35 : vector<8x8xf32> to vector<1x8x8xf32>
    %40 = tpu.concatenate %36, %37, %38, %39 in 0 : vector<1x8x8xf32>, vector<1x8x8xf32>, vector<1x8x8xf32>, vector<1x8x8xf32> -> vector<4x8x8xf32>
    %cst_16 = arith.constant 0.353553385 : f32
    %41 = vector.broadcast %cst_16 : f32 to vector<4x8x8xf32>
    %42 = arith.mulf %40, %41 : vector<4x8x8xf32>
    %cst_17 = arith.constant -1.000000e+30 : f32
    %43 = vector.shape_cast %6 : vector<1x8xi1> to vector<1x1x8xi1>
    %44 = vector.broadcast %43 : vector<1x1x8xi1> to vector<4x8x8xi1>
    %45 = vector.broadcast %cst_17 : f32 to vector<4x8x8xf32>
    %46 = arith.select %44, %45, %42 : vector<4x8x8xi1>, vector<4x8x8xf32>
    %cst_18 = arith.constant dense<0xFF800000> : vector<4x8xf32>
    %47 = vector.multi_reduction <maximumf>, %46, %cst_18 [2] : vector<4x8x8xf32> to vector<4x8xf32>
    %48 = vector.shape_cast %47 : vector<4x8xf32> to vector<4x8x1xf32>
    %49 = vector.broadcast %48 : vector<4x8x1xf32> to vector<4x8x8xf32>
    %50 = arith.subf %46, %49 : vector<4x8x8xf32>
    %51 = math.exp %50 : vector<4x8x8xf32>
    %cst_19 = arith.constant dense<0.000000e+00> : vector<4x8xf32>
    %52 = vector.multi_reduction <add>, %51, %cst_19 [2] : vector<4x8x8xf32> to vector<4x8xf32>
    %53 = vector.shape_cast %52 : vector<4x8xf32> to vector<4x8x1xf32>
    %54 = vector.broadcast %53 : vector<4x8x1xf32> to vector<4x8x8xf32>
    %55 = arith.divf %51, %54 : vector<4x8x8xf32>
    %56 = arith.truncf %55 : vector<4x8x8xf32> to vector<4x8x8xbf16>
    %c0_20 = arith.constant 0 : index
    %c0_21 = arith.constant 0 : index
    %c0_22 = arith.constant 0 : index
    %c0_23 = arith.constant 0 : index
    %57 = vector.load %arg11[%c0_20, %c0_21, %c0_22, %c0_23] : memref<1x4x8x8xbf16, #tpu.memory_space<vmem>>, vector<1x4x8x8xbf16>
    %58 = vector.shape_cast %57 : vector<1x4x8x8xbf16> to vector<4x8x8xbf16>
    %59 = vector.shape_cast %56 : vector<4x8x8xbf16> to vector<1x4x8x8xbf16>
    tpu.vector_store %arg11[%c0_20, %c0_21, %c0_22, %c0_23], %59 {strides = array<i32>} : memref<1x4x8x8xbf16, #tpu.memory_space<vmem>>, vector<1x4x8x8xbf16>,
    %60 = vector.extract_strided_slice %55 {offsets = [0, 0, 0], sizes = [1, 8, 8], strides = [1, 1, 1]} : vector<4x8x8xf32> to vector<1x8x8xf32>
    %61 = vector.shape_cast %60 : vector<1x8x8xf32> to vector<8x8xf32>
    %62 = arith.truncf %61 : vector<8x8xf32> to vector<8x8xbf16>
    %63 = vector.extract_strided_slice %15 {offsets = [0, 0], sizes = [8, 8], strides = [1, 1]} : vector<8x32xf32> to vector<8x8xf32>
    %64 = arith.truncf %63 : vector<8x8xf32> to vector<8x8xbf16>
    %cst_24 = arith.constant dense<0.000000e+00> : vector<8x8xf32>
    %65 = tpu.matmul %62, %64, %cst_24 {dimension_numbers = #tpu.dot_dimension_numbers<[1], [0], [0], [1], [0, 0, 1, 1], [], []>} : vector<8x8xbf16>, vector<8x8xbf16>, vector<8x8xf32> -> vector<8x8xf32>
    %c0_25 = arith.constant 0 : index
    %c0_26 = arith.constant 0 : index
    %66 = vector.load %arg12[%c0_25, %c0_26] : memref<8x32xf32, #tpu.memory_space<vmem>>, vector<8x8xf32>
    tpu.vector_store %arg12[%c0_25, %c0_26], %65 {strides = array<i32>} : memref<8x32xf32, #tpu.memory_space<vmem>>, vector<8x8xf32>,
    %67 = vector.extract_strided_slice %55 {offsets = [1, 0, 0], sizes = [1, 8, 8], strides = [1, 1, 1]} : vector<4x8x8xf32> to vector<1x8x8xf32>
    %68 = vector.shape_cast %67 : vector<1x8x8xf32> to vector<8x8xf32>
    %69 = arith.truncf %68 : vector<8x8xf32> to vector<8x8xbf16>
    %70 = vector.extract_strided_slice %15 {offsets = [0, 8], sizes = [8, 8], strides = [1, 1]} : vector<8x32xf32> to vector<8x8xf32>
    %71 = arith.truncf %70 : vector<8x8xf32> to vector<8x8xbf16>
    %cst_27 = arith.constant dense<0.000000e+00> : vector<8x8xf32>
    %72 = tpu.matmul %69, %71, %cst_27 {dimension_numbers = #tpu.dot_dimension_numbers<[1], [0], [0], [1], [0, 0, 1, 1], [], []>} : vector<8x8xbf16>, vector<8x8xbf16>, vector<8x8xf32> -> vector<8x8xf32>
    %c0_28 = arith.constant 0 : index
    %c8 = arith.constant 8 : index
    %73 = vector.load %arg12[%c0_28, %c8] : memref<8x32xf32, #tpu.memory_space<vmem>>, vector<8x8xf32>
    tpu.vector_store %arg12[%c0_28, %c8], %72 {strides = array<i32>} : memref<8x32xf32, #tpu.memory_space<vmem>>, vector<8x8xf32>,
    %74 = vector.extract_strided_slice %55 {offsets = [2, 0, 0], sizes = [1, 8, 8], strides = [1, 1, 1]} : vector<4x8x8xf32> to vector<1x8x8xf32>
    %75 = vector.shape_cast %74 : vector<1x8x8xf32> to vector<8x8xf32>
    %76 = arith.truncf %75 : vector<8x8xf32> to vector<8x8xbf16>
    %77 = vector.extract_strided_slice %15 {offsets = [0, 16], sizes = [8, 8], strides = [1, 1]} : vector<8x32xf32> to vector<8x8xf32>
    %78 = arith.truncf %77 : vector<8x8xf32> to vector<8x8xbf16>
    %cst_29 = arith.constant dense<0.000000e+00> : vector<8x8xf32>
    %79 = tpu.matmul %76, %78, %cst_29 {dimension_numbers = #tpu.dot_dimension_numbers<[1], [0], [0], [1], [0, 0, 1, 1], [], []>} : vector<8x8xbf16>, vector<8x8xbf16>, vector<8x8xf32> -> vector<8x8xf32>
    %c0_30 = arith.constant 0 : index
    %c16 = arith.constant 16 : index
    %80 = vector.load %arg12[%c0_30, %c16] : memref<8x32xf32, #tpu.memory_space<vmem>>, vector<8x8xf32>
    tpu.vector_store %arg12[%c0_30, %c16], %79 {strides = array<i32>} : memref<8x32xf32, #tpu.memory_space<vmem>>, vector<8x8xf32>,
    %81 = vector.extract_strided_slice %55 {offsets = [3, 0, 0], sizes = [1, 8, 8], strides = [1, 1, 1]} : vector<4x8x8xf32> to vector<1x8x8xf32>
    %82 = vector.shape_cast %81 : vector<1x8x8xf32> to vector<8x8xf32>
    %83 = arith.truncf %82 : vector<8x8xf32> to vector<8x8xbf16>
    %84 = vector.extract_strided_slice %15 {offsets = [0, 24], sizes = [8, 8], strides = [1, 1]} : vector<8x32xf32> to vector<8x8xf32>
    %85 = arith.truncf %84 : vector<8x8xf32> to vector<8x8xbf16>
    %cst_31 = arith.constant dense<0.000000e+00> : vector<8x8xf32>
    %86 = tpu.matmul %83, %85, %cst_31 {dimension_numbers = #tpu.dot_dimension_numbers<[1], [0], [0], [1], [0, 0, 1, 1], [], []>} : vector<8x8xbf16>, vector<8x8xbf16>, vector<8x8xf32> -> vector<8x8xf32>
    %c0_32 = arith.constant 0 : index
    %c24 = arith.constant 24 : index
    %87 = vector.load %arg12[%c0_32, %c24] : memref<8x32xf32, #tpu.memory_space<vmem>>, vector<8x8xf32>
    tpu.vector_store %arg12[%c0_32, %c24], %86 {strides = array<i32>} : memref<8x32xf32, #tpu.memory_space<vmem>>, vector<8x8xf32>,
    %c0_33 = arith.constant 0 : index
    %c0_34 = arith.constant 0 : index
    %88 = vector.load %arg12[%c0_33, %c0_34] : memref<8x32xf32, #tpu.memory_space<vmem>>, vector<8x32xf32>
    %89 = arith.truncf %88 : vector<8x32xf32> to vector<8x32xbf16>
    %c0_35 = arith.constant 0 : index
    %c0_36 = arith.constant 0 : index
    %90 = vector.load %arg5[%c0_35, %c0_36] : memref<32x32xbf16, #tpu.memory_space<vmem>>, vector<32x32xbf16>
    %cst_37 = arith.constant dense<0.000000e+00> : vector<8x32xf32>
    %91 = tpu.matmul %89, %90, %cst_37 {dimension_numbers = #tpu.dot_dimension_numbers<[1], [0], [0], [1], [0, 0, 1, 1], [], []>} : vector<8x32xbf16>, vector<32x32xbf16>, vector<8x32xf32> -> vector<8x32xf32>
    %92 = vector.extract_strided_slice %7 {offsets = [0, 0], sizes = [1, 32], strides = [1, 1]} : vector<6x32xf32> to vector<1x32xf32>
    %93 = vector.broadcast %92 : vector<1x32xf32> to vector<8x32xf32>
    %94 = arith.addf %91, %93 : vector<8x32xf32>
    %95 = arith.addf %94, %2 : vector<8x32xf32>
    %96 = vector.extract_strided_slice %7 {offsets = [1, 0], sizes = [1, 32], strides = [1, 1]} : vector<6x32xf32> to vector<1x32xf32>
    %97 = vector.extract_strided_slice %7 {offsets = [2, 0], sizes = [1, 32], strides = [1, 1]} : vector<6x32xf32> to vector<1x32xf32>
    %cst_38 = arith.constant dense<0.000000e+00> : vector<8xf32>
    %98 = vector.multi_reduction <add>, %95, %cst_38 [1] : vector<8x32xf32> to vector<8xf32>
    %99 = vector.shape_cast %98 : vector<8xf32> to vector<8x1xf32>
    %cst_39 = arith.constant 3.200000e+01 : f32
    %100 = vector.broadcast %cst_39 : f32 to vector<8x1xf32>
    %101 = arith.divf %99, %100 : vector<8x1xf32>
    %102 = vector.broadcast %101 : vector<8x1xf32> to vector<8x32xf32>
    %103 = arith.subf %95, %102 : vector<8x32xf32>
    %104 = arith.mulf %103, %103 : vector<8x32xf32>
    %cst_40 = arith.constant dense<0.000000e+00> : vector<8xf32>
    %105 = vector.multi_reduction <add>, %104, %cst_40 [1] : vector<8x32xf32> to vector<8xf32>
    %106 = vector.shape_cast %105 : vector<8xf32> to vector<8x1xf32>
    %cst_41 = arith.constant 3.200000e+01 : f32
    %107 = vector.broadcast %cst_41 : f32 to vector<8x1xf32>
    %108 = arith.divf %106, %107 : vector<8x1xf32>
    %109 = vector.broadcast %101 : vector<8x1xf32> to vector<8x32xf32>
    %110 = arith.subf %95, %109 : vector<8x32xf32>
    %cst_42 = arith.constant 9.99999974E-6 : f32
    %111 = vector.broadcast %cst_42 : f32 to vector<8x1xf32>
    %112 = arith.addf %108, %111 : vector<8x1xf32>
    %113 = math.rsqrt %112 : vector<8x1xf32>
    %114 = vector.broadcast %113 : vector<8x1xf32> to vector<8x32xf32>
    %115 = arith.mulf %110, %114 : vector<8x32xf32>
    %116 = vector.broadcast %96 : vector<1x32xf32> to vector<8x32xf32>
    %117 = arith.mulf %115, %116 : vector<8x32xf32>
    %118 = vector.broadcast %97 : vector<1x32xf32> to vector<8x32xf32>
    %119 = arith.addf %117, %118 : vector<8x32xf32>
    %120 = arith.truncf %119 : vector<8x32xf32> to vector<8x32xbf16>
    %c0_43 = arith.constant 0 : index
    %c0_44 = arith.constant 0 : index
    %121 = vector.load %arg6[%c0_43, %c0_44] : memref<32x64xbf16, #tpu.memory_space<vmem>>, vector<32x64xbf16>
    %cst_45 = arith.constant dense<0.000000e+00> : vector<8x64xf32>
    %122 = tpu.matmul %120, %121, %cst_45 {dimension_numbers = #tpu.dot_dimension_numbers<[1], [0], [0], [1], [0, 0, 1, 1], [], []>} : vector<8x32xbf16>, vector<32x64xbf16>, vector<8x64xf32> -> vector<8x64xf32>
    %c0_46 = arith.constant 0 : index
    %c0_47 = arith.constant 0 : index
    %123 = vector.load %arg7[%c0_46, %c0_47] : memref<1x64xf32, #tpu.memory_space<vmem>>, vector<1x64xf32>
    %124 = vector.broadcast %123 : vector<1x64xf32> to vector<8x64xf32>
    %125 = arith.addf %122, %124 : vector<8x64xf32>
    %cst_48 = arith.constant 0.000000e+00 : f32
    %126 = vector.broadcast %cst_48 : f32 to vector<8x64xf32>
    %127 = arith.maximumf %125, %126 : vector<8x64xf32>
    %128 = arith.truncf %127 : vector<8x64xf32> to vector<8x64xbf16>
    %c0_49 = arith.constant 0 : index
    %c0_50 = arith.constant 0 : index
    %129 = vector.load %arg8[%c0_49, %c0_50] : memref<64x32xbf16, #tpu.memory_space<vmem>>, vector<64x32xbf16>
    %cst_51 = arith.constant dense<0.000000e+00> : vector<8x32xf32>
    %130 = tpu.matmul %128, %129, %cst_51 {dimension_numbers = #tpu.dot_dimension_numbers<[1], [0], [0], [1], [0, 0, 1, 1], [], []>} : vector<8x64xbf16>, vector<64x32xbf16>, vector<8x32xf32> -> vector<8x32xf32>
    %131 = vector.extract_strided_slice %7 {offsets = [3, 0], sizes = [1, 32], strides = [1, 1]} : vector<6x32xf32> to vector<1x32xf32>
    %132 = vector.broadcast %131 : vector<1x32xf32> to vector<8x32xf32>
    %133 = arith.addf %130, %132 : vector<8x32xf32>
    %134 = arith.addf %133, %119 : vector<8x32xf32>
    %135 = vector.extract_strided_slice %7 {offsets = [4, 0], sizes = [1, 32], strides = [1, 1]} : vector<6x32xf32> to vector<1x32xf32>
    %136 = vector.extract_strided_slice %7 {offsets = [5, 0], sizes = [1, 32], strides = [1, 1]} : vector<6x32xf32> to vector<1x32xf32>
    %cst_52 = arith.constant dense<0.000000e+00> : vector<8xf32>
    %137 = vector.multi_reduction <add>, %134, %cst_52 [1] : vector<8x32xf32> to vector<8xf32>
    %138 = vector.shape_cast %137 : vector<8xf32> to vector<8x1xf32>
    %cst_53 = arith.constant 3.200000e+01 : f32
    %139 = vector.broadcast %cst_53 : f32 to vector<8x1xf32>
    %140 = arith.divf %138, %139 : vector<8x1xf32>
    %141 = vector.broadcast %140 : vector<8x1xf32> to vector<8x32xf32>
    %142 = arith.subf %134, %141 : vector<8x32xf32>
    %143 = arith.mulf %142, %142 : vector<8x32xf32>
    %cst_54 = arith.constant dense<0.000000e+00> : vector<8xf32>
    %144 = vector.multi_reduction <add>, %143, %cst_54 [1] : vector<8x32xf32> to vector<8xf32>
    %145 = vector.shape_cast %144 : vector<8xf32> to vector<8x1xf32>
    %cst_55 = arith.constant 3.200000e+01 : f32
    %146 = vector.broadcast %cst_55 : f32 to vector<8x1xf32>
    %147 = arith.divf %145, %146 : vector<8x1xf32>
    %148 = vector.broadcast %140 : vector<8x1xf32> to vector<8x32xf32>
    %149 = arith.subf %134, %148 : vector<8x32xf32>
    %cst_56 = arith.constant 9.99999974E-6 : f32
    %150 = vector.broadcast %cst_56 : f32 to vector<8x1xf32>
    %151 = arith.addf %147, %150 : vector<8x1xf32>
    %152 = math.rsqrt %151 : vector<8x1xf32>
    %153 = vector.broadcast %152 : vector<8x1xf32> to vector<8x32xf32>
    %154 = arith.mulf %149, %153 : vector<8x32xf32>
    %155 = vector.broadcast %135 : vector<1x32xf32> to vector<8x32xf32>
    %156 = arith.mulf %154, %155 : vector<8x32xf32>
    %157 = vector.broadcast %136 : vector<1x32xf32> to vector<8x32xf32>
    %158 = arith.addf %156, %157 : vector<8x32xf32>
    %159 = arith.truncf %158 : vector<8x32xf32> to vector<8x32xbf16>
    %c0_57 = arith.constant 0 : index
    %c0_58 = arith.constant 0 : index
    %c0_59 = arith.constant 0 : index
    %160 = vector.load %arg10[%c0_57, %c0_58, %c0_59] : memref<1x8x32xbf16, #tpu.memory_space<vmem>>, vector<1x8x32xbf16>
    %161 = vector.shape_cast %160 : vector<1x8x32xbf16> to vector<8x32xbf16>
    %162 = vector.shape_cast %159 : vector<8x32xbf16> to vector<1x8x32xbf16>
    tpu.vector_store %arg10[%c0_57, %c0_58, %c0_59], %162 {strides = array<i32>} : memref<1x8x32xbf16, #tpu.memory_space<vmem>>, vector<1x8x32xbf16>,
    return
  }
  func.func @transform_0(%arg0: i32) -> (i32, i32, i32) {
    %c0_i32 = arith.constant 0 : i32
    %c0_i32_0 = arith.constant 0 : i32
    %c0_i32_1 = arith.constant 0 : i32
    return %arg0, %c0_i32, %c0_i32_0 : i32, i32, i32
  }
  func.func @transform_1(%arg0: i32) -> (i32, i32, i32) {
    %c0_i32 = arith.constant 0 : i32
    %c0_i32_0 = arith.constant 0 : i32
    %c0_i32_1 = arith.constant 0 : i32
    return %arg0, %c0_i32, %c0_i32_0 : i32, i32, i32
  }
  func.func @transform_2(%arg0: i32) -> (i32, i32) {
    %c0_i32 = arith.constant 0 : i32
    %c0_i32_0 = arith.constant 0 : i32
    %c0_i32_1 = arith.constant 0 : i32
    return %c0_i32, %c0_i32_0 : i32, i32
  }
  func.func @transform_3(%arg0: i32) -> (i32, i32) {
    %c0_i32 = arith.constant 0 : i32
    %c0_i32_0 = arith.constant 0 : i32
    %c0_i32_1 = arith.constant 0 : i32
    return %c0_i32, %c0_i32_0 : i32, i32
  }
  func.func @transform_4(%arg0: i32) -> (i32, i32) {
    %c0_i32 = arith.constant 0 : i32
    %c0_i32_0 = arith.constant 0 : i32
    %c0_i32_1 = arith.constant 0 : i32
    return %c0_i32, %c0_i32_0 : i32, i32
  }
  func.func @transform_5(%arg0: i32) -> (i32, i32) {
    %c0_i32 = arith.constant 0 : i32
    %c0_i32_0 = arith.constant 0 : i32
    %c0_i32_1 = arith.constant 0 : i32
    return %c0_i32, %c0_i32_0 : i32, i32
  }
  func.func @transform_6(%arg0: i32) -> (i32, i32) {
    %c0_i32 = arith.constant 0 : i32
    %c0_i32_0 = arith.constant 0 : i32
    %c0_i32_1 = arith.constant 0 : i32
    return %c0_i32, %c0_i32_0 : i32, i32
  }
  func.func @transform_7(%arg0: i32) -> (i32, i32) {
    %c0_i32 = arith.constant 0 : i32
    %c0_i32_0 = arith.constant 0 : i32
    %c0_i32_1 = arith.constant 0 : i32
    return %c0_i32, %c0_i32_0 : i32, i32
  }
  func.func @transform_8(%arg0: i32) -> (i32, i32) {
    %c0_i32 = arith.constant 0 : i32
    %c0_i32_0 = arith.constant 0 : i32
    %c0_i32_1 = arith.constant 0 : i32
    return %c0_i32, %c0_i32_0 : i32, i32
  }
  func.func @transform_9(%arg0: i32) -> (i32, i32, i32) {
    %c0_i32 = arith.constant 0 : i32
    %c0_i32_0 = arith.constant 0 : i32
    %c0_i32_1 = arith.constant 0 : i32
    return %arg0, %c0_i32, %c0_i32_0 : i32, i32, i32
  }
  func.func @transform_10(%arg0: i32) -> (i32, i32, i32, i32) {
    %c0_i32 = arith.constant 0 : i32
    %c0_i32_0 = arith.constant 0 : i32
    %c0_i32_1 = arith.constant 0 : i32
    %c0_i32_2 = arith.constant 0 : i32
    return %arg0, %c0_i32, %c0_i32_0, %c0_i32_1 : i32, i32, i32, i32
  }
}

module attributes {stable_mosaic.version = 11 : i64} {
  func.func @_proj_softmax_kernel(%arg0: i32, %arg1: memref<8x32xbf16, #tpu.memory_space<vmem>>, %arg2: memref<32x13xbf16, #tpu.memory_space<vmem>>, %arg3: memref<8x13xf32, #tpu.memory_space<vmem>>) attributes {dimension_semantics = [#tpu.dimension_semantics<parallel>], iteration_bounds = array<i64: 2>, scalar_prefetch = 0 : i64, scratch_operands = 0 : i64, tpu.core_type = #tpu.core_type<tc>, window_params = [{transform_indices = @transform_0, window_bounds = array<i64: 8, 32>}, {pipeline_mode = #tpu.pipeline_mode<synchronous>, transform_indices = @transform_1, window_bounds = array<i64: 32, 13>}, {transform_indices = @transform_2, window_bounds = array<i64: 8, 13>}]} {
    %c0 = arith.constant 0 : index
    %c0_0 = arith.constant 0 : index
    %0 = vector.load %arg1[%c0, %c0_0] : memref<8x32xbf16, #tpu.memory_space<vmem>>, vector<8x32xbf16>
    %c0_1 = arith.constant 0 : index
    %c0_2 = arith.constant 0 : index
    %1 = vector.load %arg2[%c0_1, %c0_2] : memref<32x13xbf16, #tpu.memory_space<vmem>>, vector<32x13xbf16>
    %cst = arith.constant dense<0.000000e+00> : vector<8x13xf32>
    %2 = tpu.matmul %0, %1, %cst {dimension_numbers = #tpu.dot_dimension_numbers<[1], [0], [0], [1], [0, 0, 1, 1], [], []>} : vector<8x32xbf16>, vector<32x13xbf16>, vector<8x13xf32> -> vector<8x13xf32>
    %cst_3 = arith.constant dense<0xFF800000> : vector<8xf32>
    %3 = vector.multi_reduction <maximumf>, %2, %cst_3 [1] : vector<8x13xf32> to vector<8xf32>
    %4 = vector.shape_cast %3 : vector<8xf32> to vector<8x1xf32>
    %5 = vector.broadcast %4 : vector<8x1xf32> to vector<8x13xf32>
    %6 = arith.subf %2, %5 : vector<8x13xf32>
    %7 = math.exp %6 : vector<8x13xf32>
    %cst_4 = arith.constant dense<0.000000e+00> : vector<8xf32>
    %8 = vector.multi_reduction <add>, %7, %cst_4 [1] : vector<8x13xf32> to vector<8xf32>
    %9 = vector.shape_cast %8 : vector<8xf32> to vector<8x1xf32>
    %10 = vector.broadcast %9 : vector<8x1xf32> to vector<8x13xf32>
    %11 = arith.divf %7, %10 : vector<8x13xf32>
    %c0_5 = arith.constant 0 : index
    %c0_6 = arith.constant 0 : index
    %12 = vector.load %arg3[%c0_5, %c0_6] : memref<8x13xf32, #tpu.memory_space<vmem>>, vector<8x13xf32>
    tpu.vector_store %arg3[%c0_5, %c0_6], %11 {strides = array<i32>} : memref<8x13xf32, #tpu.memory_space<vmem>>, vector<8x13xf32>,
    return
  }
  func.func @transform_0(%arg0: i32) -> (i32, i32) {
    %c0_i32 = arith.constant 0 : i32
    %c0_i32_0 = arith.constant 0 : i32
    return %arg0, %c0_i32 : i32, i32
  }
  func.func @transform_1(%arg0: i32) -> (i32, i32) {
    %c0_i32 = arith.constant 0 : i32
    %c0_i32_0 = arith.constant 0 : i32
    %c0_i32_1 = arith.constant 0 : i32
    return %c0_i32, %c0_i32_0 : i32, i32
  }
  func.func @transform_2(%arg0: i32) -> (i32, i32) {
    %c0_i32 = arith.constant 0 : i32
    %c0_i32_0 = arith.constant 0 : i32
    return %arg0, %c0_i32 : i32, i32
  }
}

module attributes {stable_mosaic.version = 11 : i64} {
  func.func @_dec_layer_kernel(%arg0: i32, %arg1: memref<1x8x32xbf16, #tpu.memory_space<vmem>>, %arg2: memref<1x8x32xbf16, #tpu.memory_space<vmem>>, %arg3: memref<1x1x8xf32, #tpu.memory_space<vmem>>, %arg4: memref<1x1x8xf32, #tpu.memory_space<vmem>>, %arg5: memref<32x96xbf16, #tpu.memory_space<vmem>>, %arg6: memref<1x96xf32, #tpu.memory_space<vmem>>, %arg7: memref<32x32xbf16, #tpu.memory_space<vmem>>, %arg8: memref<32x32xbf16, #tpu.memory_space<vmem>>, %arg9: memref<32x64xbf16, #tpu.memory_space<vmem>>, %arg10: memref<1x64xf32, #tpu.memory_space<vmem>>, %arg11: memref<32x32xbf16, #tpu.memory_space<vmem>>, %arg12: memref<32x64xbf16, #tpu.memory_space<vmem>>, %arg13: memref<1x64xf32, #tpu.memory_space<vmem>>, %arg14: memref<64x32xbf16, #tpu.memory_space<vmem>>, %arg15: memref<10x32xf32, #tpu.memory_space<vmem>>, %arg16: memref<1x8x32xbf16, #tpu.memory_space<vmem>>, %arg17: memref<1x4x8x8xbf16, #tpu.memory_space<vmem>>, %arg18: memref<1x4x8x8xbf16, #tpu.memory_space<vmem>>, %arg19: memref<8x32xf32, #tpu.memory_space<vmem>>) attributes {dimension_semantics = [#tpu.dimension_semantics<parallel>], iteration_bounds = array<i64: 2>, scalar_prefetch = 0 : i64, scratch_operands = 1 : i64, tpu.core_type = #tpu.core_type<tc>, window_params = [{transform_indices = @transform_0, window_bounds = array<i64: 1, 8, 32>}, {transform_indices = @transform_1, window_bounds = array<i64: 1, 8, 32>}, {transform_indices = @transform_2, window_bounds = array<i64: 1, 1, 8>}, {transform_indices = @transform_3, window_bounds = array<i64: 1, 1, 8>}, {pipeline_mode = #tpu.pipeline_mode<synchronous>, transform_indices = @transform_4, window_bounds = array<i64: 32, 96>}, {pipeline_mode = #tpu.pipeline_mode<synchronous>, transform_indices = @transform_5, window_bounds = array<i64: 1, 96>}, {pipeline_mode = #tpu.pipeline_mode<synchronous>, transform_indices = @transform_6, window_bounds = array<i64: 32, 32>}, {pipeline_mode = #tpu.pipeline_mode<synchronous>, transform_indices = @transform_7, window_bounds = array<i64: 32, 32>}, {pipeline_mode = #tpu.pipeline_mode<synchronous>, transform_indices = @transform_8, window_bounds = array<i64: 32, 64>}, {pipeline_mode = #tpu.pipeline_mode<synchronous>, transform_indices = @transform_9, window_bounds = array<i64: 1, 64>}, {pipeline_mode = #tpu.pipeline_mode<synchronous>, transform_indices = @transform_10, window_bounds = array<i64: 32, 32>}, {pipeline_mode = #tpu.pipeline_mode<synchronous>, transform_indices = @transform_11, window_bounds = array<i64: 32, 64>}, {pipeline_mode = #tpu.pipeline_mode<synchronous>, transform_indices = @transform_12, window_bounds = array<i64: 1, 64>}, {pipeline_mode = #tpu.pipeline_mode<synchronous>, transform_indices = @transform_13, window_bounds = array<i64: 64, 32>}, {pipeline_mode = #tpu.pipeline_mode<synchronous>, transform_indices = @transform_14, window_bounds = array<i64: 10, 32>}, {transform_indices = @transform_15, window_bounds = array<i64: 1, 8, 32>}, {transform_indices = @transform_16, window_bounds = array<i64: 1, 4, 8, 8>}, {transform_indices = @transform_17, window_bounds = array<i64: 1, 4, 8, 8>}]} {
    %c0 = arith.constant 0 : index
    %c0_0 = arith.constant 0 : index
    %c0_1 = arith.constant 0 : index
    %0 = vector.load %arg1[%c0, %c0_0, %c0_1] : memref<1x8x32xbf16, #tpu.memory_space<vmem>>, vector<1x8x32xbf16>
    %1 = vector.shape_cast %0 : vector<1x8x32xbf16> to vector<8x32xbf16>
    %2 = arith.extf %1 : vector<8x32xbf16> to vector<8x32xf32>
    %c0_2 = arith.constant 0 : index
    %c0_3 = arith.constant 0 : index
    %c0_4 = arith.constant 0 : index
    %3 = vector.load %arg2[%c0_2, %c0_3, %c0_4] : memref<1x8x32xbf16, #tpu.memory_space<vmem>>, vector<1x8x32xbf16>
    %4 = vector.shape_cast %3 : vector<1x8x32xbf16> to vector<8x32xbf16>
    %c0_5 = arith.constant 0 : index
    %c0_6 = arith.constant 0 : index
    %5 = vector.load %arg15[%c0_5, %c0_6] : memref<10x32xf32, #tpu.memory_space<vmem>>, vector<10x32xf32>
    %6 = tpu.iota {dimensions = array<i32: 0>} : vector<8x8xi32>
    %7 = tpu.iota {dimensions = array<i32: 1>} : vector<8x8xi32>
    %8 = arith.cmpi sgt, %7, %6 : vector<8x8xi32>
    %9 = vector.shape_cast %8 : vector<8x8xi1> to vector<1x8x8xi1>
    %c0_7 = arith.constant 0 : index
    %c0_8 = arith.constant 0 : index
    %c0_9 = arith.constant 0 : index
    %10 = vector.load %arg3[%c0_7, %c0_8, %c0_9] : memref<1x1x8xf32, #tpu.memory_space<vmem>>, vector<1x1x8xf32>
    %11 = vector.shape_cast %10 : vector<1x1x8xf32> to vector<1x8xf32>
    %cst = arith.constant 5.000000e-01 : f32
    %12 = vector.broadcast %cst : f32 to vector<1x8xf32>
    %13 = arith.cmpf ogt, %11, %12 : vector<1x8xf32>
    %14 = vector.shape_cast %13 : vector<1x8xi1> to vector<1x1x8xi1>
    %15 = vector.broadcast %14 : vector<1x1x8xi1> to vector<1x8x8xi1>
    %16 = arith.ori %9, %15 : vector<1x8x8xi1>
    %c0_10 = arith.constant 0 : index
    %c0_11 = arith.constant 0 : index
    %17 = vector.load %arg5[%c0_10, %c0_11] : memref<32x96xbf16, #tpu.memory_space<vmem>>, vector<32x96xbf16>
    %cst_12 = arith.constant dense<0.000000e+00> : vector<8x96xf32>
    %18 = tpu.matmul %1, %17, %cst_12 {dimension_numbers = #tpu.dot_dimension_numbers<[1], [0], [0], [1], [0, 0, 1, 1], [], []>} : vector<8x32xbf16>, vector<32x96xbf16>, vector<8x96xf32> -> vector<8x96xf32>
    %c0_13 = arith.constant 0 : index
    %c0_14 = arith.constant 0 : index
    %19 = vector.load %arg6[%c0_13, %c0_14] : memref<1x96xf32, #tpu.memory_space<vmem>>, vector<1x96xf32>
    %20 = vector.broadcast %19 : vector<1x96xf32> to vector<8x96xf32>
    %21 = arith.addf %18, %20 : vector<8x96xf32>
    %22 = vector.extract_strided_slice %21 {offsets = [0, 0], sizes = [8, 32], strides = [1, 1]} : vector<8x96xf32> to vector<8x32xf32>
    %23 = vector.extract_strided_slice %21 {offsets = [0, 32], sizes = [8, 32], strides = [1, 1]} : vector<8x96xf32> to vector<8x32xf32>
    %24 = vector.extract_strided_slice %21 {offsets = [0, 64], sizes = [8, 32], strides = [1, 1]} : vector<8x96xf32> to vector<8x32xf32>
    %25 = vector.extract_strided_slice %22 {offsets = [0, 0], sizes = [8, 8], strides = [1, 1]} : vector<8x32xf32> to vector<8x8xf32>
    %26 = arith.truncf %25 : vector<8x8xf32> to vector<8x8xbf16>
    %27 = vector.extract_strided_slice %23 {offsets = [0, 0], sizes = [8, 8], strides = [1, 1]} : vector<8x32xf32> to vector<8x8xf32>
    %28 = arith.truncf %27 : vector<8x8xf32> to vector<8x8xbf16>
    %cst_15 = arith.constant dense<0.000000e+00> : vector<8x8xf32>
    %29 = tpu.matmul %26, %28, %cst_15 {dimension_numbers = #tpu.dot_dimension_numbers<[1], [1], [0], [0], [0, 0, 1, 0], [], []>} : vector<8x8xbf16>, vector<8x8xbf16>, vector<8x8xf32> -> vector<8x8xf32>
    %30 = vector.extract_strided_slice %22 {offsets = [0, 8], sizes = [8, 8], strides = [1, 1]} : vector<8x32xf32> to vector<8x8xf32>
    %31 = arith.truncf %30 : vector<8x8xf32> to vector<8x8xbf16>
    %32 = vector.extract_strided_slice %23 {offsets = [0, 8], sizes = [8, 8], strides = [1, 1]} : vector<8x32xf32> to vector<8x8xf32>
    %33 = arith.truncf %32 : vector<8x8xf32> to vector<8x8xbf16>
    %cst_16 = arith.constant dense<0.000000e+00> : vector<8x8xf32>
    %34 = tpu.matmul %31, %33, %cst_16 {dimension_numbers = #tpu.dot_dimension_numbers<[1], [1], [0], [0], [0, 0, 1, 0], [], []>} : vector<8x8xbf16>, vector<8x8xbf16>, vector<8x8xf32> -> vector<8x8xf32>
    %35 = vector.extract_strided_slice %22 {offsets = [0, 16], sizes = [8, 8], strides = [1, 1]} : vector<8x32xf32> to vector<8x8xf32>
    %36 = arith.truncf %35 : vector<8x8xf32> to vector<8x8xbf16>
    %37 = vector.extract_strided_slice %23 {offsets = [0, 16], sizes = [8, 8], strides = [1, 1]} : vector<8x32xf32> to vector<8x8xf32>
    %38 = arith.truncf %37 : vector<8x8xf32> to vector<8x8xbf16>
    %cst_17 = arith.constant dense<0.000000e+00> : vector<8x8xf32>
    %39 = tpu.matmul %36, %38, %cst_17 {dimension_numbers = #tpu.dot_dimension_numbers<[1], [1], [0], [0], [0, 0, 1, 0], [], []>} : vector<8x8xbf16>, vector<8x8xbf16>, vector<8x8xf32> -> vector<8x8xf32>
    %40 = vector.extract_strided_slice %22 {offsets = [0, 24], sizes = [8, 8], strides = [1, 1]} : vector<8x32xf32> to vector<8x8xf32>
    %41 = arith.truncf %40 : vector<8x8xf32> to vector<8x8xbf16>
    %42 = vector.extract_strided_slice %23 {offsets = [0, 24], sizes = [8, 8], strides = [1, 1]} : vector<8x32xf32> to vector<8x8xf32>
    %43 = arith.truncf %42 : vector<8x8xf32> to vector<8x8xbf16>
    %cst_18 = arith.constant dense<0.000000e+00> : vector<8x8xf32>
    %44 = tpu.matmul %41, %43, %cst_18 {dimension_numbers = #tpu.dot_dimension_numbers<[1], [1], [0], [0], [0, 0, 1, 0], [], []>} : vector<8x8xbf16>, vector<8x8xbf16>, vector<8x8xf32> -> vector<8x8xf32>
    %45 = vector.shape_cast %29 : vector<8x8xf32> to vector<1x8x8xf32>
    %46 = vector.shape_cast %34 : vector<8x8xf32> to vector<1x8x8xf32>
    %47 = vector.shape_cast %39 : vector<8x8xf32> to vector<1x8x8xf32>
    %48 = vector.shape_cast %44 : vector<8x8xf32> to vector<1x8x8xf32>
    %49 = tpu.concatenate %45, %46, %47, %48 in 0 : vector<1x8x8xf32>, vector<1x8x8xf32>, vector<1x8x8xf32>, vector<1x8x8xf32> -> vector<4x8x8xf32>
    %cst_19 = arith.constant 0.353553385 : f32
    %50 = vector.broadcast %cst_19 : f32 to vector<4x8x8xf32>
    %51 = arith.mulf %49, %50 : vector<4x8x8xf32>
    %cst_20 = arith.constant -1.000000e+30 : f32
    %52 = vector.shape_cast %16 : vector<1x8x8xi1> to vector<1x8x8xi1>
    %53 = vector.broadcast %52 : vector<1x8x8xi1> to vector<4x8x8xi1>
    %54 = vector.broadcast %cst_20 : f32 to vector<4x8x8xf32>
    %55 = arith.select %53, %54, %51 : vector<4x8x8xi1>, vector<4x8x8xf32>
    %cst_21 = arith.constant dense<0xFF800000> : vector<4x8xf32>
    %56 = vector.multi_reduction <maximumf>, %55, %cst_21 [2] : vector<4x8x8xf32> to vector<4x8xf32>
    %57 = vector.shape_cast %56 : vector<4x8xf32> to vector<4x8x1xf32>
    %58 = vector.broadcast %57 : vector<4x8x1xf32> to vector<4x8x8xf32>
    %59 = arith.subf %55, %58 : vector<4x8x8xf32>
    %60 = math.exp %59 : vector<4x8x8xf32>
    %cst_22 = arith.constant dense<0.000000e+00> : vector<4x8xf32>
    %61 = vector.multi_reduction <add>, %60, %cst_22 [2] : vector<4x8x8xf32> to vector<4x8xf32>
    %62 = vector.shape_cast %61 : vector<4x8xf32> to vector<4x8x1xf32>
    %63 = vector.broadcast %62 : vector<4x8x1xf32> to vector<4x8x8xf32>
    %64 = arith.divf %60, %63 : vector<4x8x8xf32>
    %65 = arith.truncf %64 : vector<4x8x8xf32> to vector<4x8x8xbf16>
    %c0_23 = arith.constant 0 : index
    %c0_24 = arith.constant 0 : index
    %c0_25 = arith.constant 0 : index
    %c0_26 = arith.constant 0 : index
    %66 = vector.load %arg17[%c0_23, %c0_24, %c0_25, %c0_26] : memref<1x4x8x8xbf16, #tpu.memory_space<vmem>>, vector<1x4x8x8xbf16>
    %67 = vector.shape_cast %66 : vector<1x4x8x8xbf16> to vector<4x8x8xbf16>
    %68 = vector.shape_cast %65 : vector<4x8x8xbf16> to vector<1x4x8x8xbf16>
    tpu.vector_store %arg17[%c0_23, %c0_24, %c0_25, %c0_26], %68 {strides = array<i32>} : memref<1x4x8x8xbf16, #tpu.memory_space<vmem>>, vector<1x4x8x8xbf16>,
    %69 = vector.extract_strided_slice %64 {offsets = [0, 0, 0], sizes = [1, 8, 8], strides = [1, 1, 1]} : vector<4x8x8xf32> to vector<1x8x8xf32>
    %70 = vector.shape_cast %69 : vector<1x8x8xf32> to vector<8x8xf32>
    %71 = arith.truncf %70 : vector<8x8xf32> to vector<8x8xbf16>
    %72 = vector.extract_strided_slice %24 {offsets = [0, 0], sizes = [8, 8], strides = [1, 1]} : vector<8x32xf32> to vector<8x8xf32>
    %73 = arith.truncf %72 : vector<8x8xf32> to vector<8x8xbf16>
    %cst_27 = arith.constant dense<0.000000e+00> : vector<8x8xf32>
    %74 = tpu.matmul %71, %73, %cst_27 {dimension_numbers = #tpu.dot_dimension_numbers<[1], [0], [0], [1], [0, 0, 1, 1], [], []>} : vector<8x8xbf16>, vector<8x8xbf16>, vector<8x8xf32> -> vector<8x8xf32>
    %c0_28 = arith.constant 0 : index
    %c0_29 = arith.constant 0 : index
    %75 = vector.load %arg19[%c0_28, %c0_29] : memref<8x32xf32, #tpu.memory_space<vmem>>, vector<8x8xf32>
    tpu.vector_store %arg19[%c0_28, %c0_29], %74 {strides = array<i32>} : memref<8x32xf32, #tpu.memory_space<vmem>>, vector<8x8xf32>,
    %76 = vector.extract_strided_slice %64 {offsets = [1, 0, 0], sizes = [1, 8, 8], strides = [1, 1, 1]} : vector<4x8x8xf32> to vector<1x8x8xf32>
    %77 = vector.shape_cast %76 : vector<1x8x8xf32> to vector<8x8xf32>
    %78 = arith.truncf %77 : vector<8x8xf32> to vector<8x8xbf16>
    %79 = vector.extract_strided_slice %24 {offsets = [0, 8], sizes = [8, 8], strides = [1, 1]} : vector<8x32xf32> to vector<8x8xf32>
    %80 = arith.truncf %79 : vector<8x8xf32> to vector<8x8xbf16>
    %cst_30 = arith.constant dense<0.000000e+00> : vector<8x8xf32>
    %81 = tpu.matmul %78, %80, %cst_30 {dimension_numbers = #tpu.dot_dimension_numbers<[1], [0], [0], [1], [0, 0, 1, 1], [], []>} : vector<8x8xbf16>, vector<8x8xbf16>, vector<8x8xf32> -> vector<8x8xf32>
    %c0_31 = arith.constant 0 : index
    %c8 = arith.constant 8 : index
    %82 = vector.load %arg19[%c0_31, %c8] : memref<8x32xf32, #tpu.memory_space<vmem>>, vector<8x8xf32>
    tpu.vector_store %arg19[%c0_31, %c8], %81 {strides = array<i32>} : memref<8x32xf32, #tpu.memory_space<vmem>>, vector<8x8xf32>,
    %83 = vector.extract_strided_slice %64 {offsets = [2, 0, 0], sizes = [1, 8, 8], strides = [1, 1, 1]} : vector<4x8x8xf32> to vector<1x8x8xf32>
    %84 = vector.shape_cast %83 : vector<1x8x8xf32> to vector<8x8xf32>
    %85 = arith.truncf %84 : vector<8x8xf32> to vector<8x8xbf16>
    %86 = vector.extract_strided_slice %24 {offsets = [0, 16], sizes = [8, 8], strides = [1, 1]} : vector<8x32xf32> to vector<8x8xf32>
    %87 = arith.truncf %86 : vector<8x8xf32> to vector<8x8xbf16>
    %cst_32 = arith.constant dense<0.000000e+00> : vector<8x8xf32>
    %88 = tpu.matmul %85, %87, %cst_32 {dimension_numbers = #tpu.dot_dimension_numbers<[1], [0], [0], [1], [0, 0, 1, 1], [], []>} : vector<8x8xbf16>, vector<8x8xbf16>, vector<8x8xf32> -> vector<8x8xf32>
    %c0_33 = arith.constant 0 : index
    %c16 = arith.constant 16 : index
    %89 = vector.load %arg19[%c0_33, %c16] : memref<8x32xf32, #tpu.memory_space<vmem>>, vector<8x8xf32>
    tpu.vector_store %arg19[%c0_33, %c16], %88 {strides = array<i32>} : memref<8x32xf32, #tpu.memory_space<vmem>>, vector<8x8xf32>,
    %90 = vector.extract_strided_slice %64 {offsets = [3, 0, 0], sizes = [1, 8, 8], strides = [1, 1, 1]} : vector<4x8x8xf32> to vector<1x8x8xf32>
    %91 = vector.shape_cast %90 : vector<1x8x8xf32> to vector<8x8xf32>
    %92 = arith.truncf %91 : vector<8x8xf32> to vector<8x8xbf16>
    %93 = vector.extract_strided_slice %24 {offsets = [0, 24], sizes = [8, 8], strides = [1, 1]} : vector<8x32xf32> to vector<8x8xf32>
    %94 = arith.truncf %93 : vector<8x8xf32> to vector<8x8xbf16>
    %cst_34 = arith.constant dense<0.000000e+00> : vector<8x8xf32>
    %95 = tpu.matmul %92, %94, %cst_34 {dimension_numbers = #tpu.dot_dimension_numbers<[1], [0], [0], [1], [0, 0, 1, 1], [], []>} : vector<8x8xbf16>, vector<8x8xbf16>, vector<8x8xf32> -> vector<8x8xf32>
    %c0_35 = arith.constant 0 : index
    %c24 = arith.constant 24 : index
    %96 = vector.load %arg19[%c0_35, %c24] : memref<8x32xf32, #tpu.memory_space<vmem>>, vector<8x8xf32>
    tpu.vector_store %arg19[%c0_35, %c24], %95 {strides = array<i32>} : memref<8x32xf32, #tpu.memory_space<vmem>>, vector<8x8xf32>,
    %c0_36 = arith.constant 0 : index
    %c0_37 = arith.constant 0 : index
    %97 = vector.load %arg19[%c0_36, %c0_37] : memref<8x32xf32, #tpu.memory_space<vmem>>, vector<8x32xf32>
    %98 = arith.truncf %97 : vector<8x32xf32> to vector<8x32xbf16>
    %c0_38 = arith.constant 0 : index
    %c0_39 = arith.constant 0 : index
    %99 = vector.load %arg7[%c0_38, %c0_39] : memref<32x32xbf16, #tpu.memory_space<vmem>>, vector<32x32xbf16>
    %cst_40 = arith.constant dense<0.000000e+00> : vector<8x32xf32>
    %100 = tpu.matmul %98, %99, %cst_40 {dimension_numbers = #tpu.dot_dimension_numbers<[1], [0], [0], [1], [0, 0, 1, 1], [], []>} : vector<8x32xbf16>, vector<32x32xbf16>, vector<8x32xf32> -> vector<8x32xf32>
    %101 = vector.extract_strided_slice %5 {offsets = [0, 0], sizes = [1, 32], strides = [1, 1]} : vector<10x32xf32> to vector<1x32xf32>
    %102 = vector.broadcast %101 : vector<1x32xf32> to vector<8x32xf32>
    %103 = arith.addf %100, %102 : vector<8x32xf32>
    %104 = arith.addf %103, %2 : vector<8x32xf32>
    %105 = vector.extract_strided_slice %5 {offsets = [1, 0], sizes = [1, 32], strides = [1, 1]} : vector<10x32xf32> to vector<1x32xf32>
    %106 = vector.extract_strided_slice %5 {offsets = [2, 0], sizes = [1, 32], strides = [1, 1]} : vector<10x32xf32> to vector<1x32xf32>
    %cst_41 = arith.constant dense<0.000000e+00> : vector<8xf32>
    %107 = vector.multi_reduction <add>, %104, %cst_41 [1] : vector<8x32xf32> to vector<8xf32>
    %108 = vector.shape_cast %107 : vector<8xf32> to vector<8x1xf32>
    %cst_42 = arith.constant 3.200000e+01 : f32
    %109 = vector.broadcast %cst_42 : f32 to vector<8x1xf32>
    %110 = arith.divf %108, %109 : vector<8x1xf32>
    %111 = vector.broadcast %110 : vector<8x1xf32> to vector<8x32xf32>
    %112 = arith.subf %104, %111 : vector<8x32xf32>
    %113 = arith.mulf %112, %112 : vector<8x32xf32>
    %cst_43 = arith.constant dense<0.000000e+00> : vector<8xf32>
    %114 = vector.multi_reduction <add>, %113, %cst_43 [1] : vector<8x32xf32> to vector<8xf32>
    %115 = vector.shape_cast %114 : vector<8xf32> to vector<8x1xf32>
    %cst_44 = arith.constant 3.200000e+01 : f32
    %116 = vector.broadcast %cst_44 : f32 to vector<8x1xf32>
    %117 = arith.divf %115, %116 : vector<8x1xf32>
    %118 = vector.broadcast %110 : vector<8x1xf32> to vector<8x32xf32>
    %119 = arith.subf %104, %118 : vector<8x32xf32>
    %cst_45 = arith.constant 9.99999974E-6 : f32
    %120 = vector.broadcast %cst_45 : f32 to vector<8x1xf32>
    %121 = arith.addf %117, %120 : vector<8x1xf32>
    %122 = math.rsqrt %121 : vector<8x1xf32>
    %123 = vector.broadcast %122 : vector<8x1xf32> to vector<8x32xf32>
    %124 = arith.mulf %119, %123 : vector<8x32xf32>
    %125 = vector.broadcast %105 : vector<1x32xf32> to vector<8x32xf32>
    %126 = arith.mulf %124, %125 : vector<8x32xf32>
    %127 = vector.broadcast %106 : vector<1x32xf32> to vector<8x32xf32>
    %128 = arith.addf %126, %127 : vector<8x32xf32>
    %c0_46 = arith.constant 0 : index
    %c0_47 = arith.constant 0 : index
    %c0_48 = arith.constant 0 : index
    %129 = vector.load %arg4[%c0_46, %c0_47, %c0_48] : memref<1x1x8xf32, #tpu.memory_space<vmem>>, vector<1x1x8xf32>
    %130 = vector.shape_cast %129 : vector<1x1x8xf32> to vector<1x8xf32>
    %cst_49 = arith.constant 5.000000e-01 : f32
    %131 = vector.broadcast %cst_49 : f32 to vector<1x8xf32>
    %132 = arith.cmpf ogt, %130, %131 : vector<1x8xf32>
    %133 = arith.truncf %128 : vector<8x32xf32> to vector<8x32xbf16>
    %c0_50 = arith.constant 0 : index
    %c0_51 = arith.constant 0 : index
    %134 = vector.load %arg8[%c0_50, %c0_51] : memref<32x32xbf16, #tpu.memory_space<vmem>>, vector<32x32xbf16>
    %cst_52 = arith.constant dense<0.000000e+00> : vector<8x32xf32>
    %135 = tpu.matmul %133, %134, %cst_52 {dimension_numbers = #tpu.dot_dimension_numbers<[1], [0], [0], [1], [0, 0, 1, 1], [], []>} : vector<8x32xbf16>, vector<32x32xbf16>, vector<8x32xf32> -> vector<8x32xf32>
    %136 = vector.extract_strided_slice %5 {offsets = [3, 0], sizes = [1, 32], strides = [1, 1]} : vector<10x32xf32> to vector<1x32xf32>
    %137 = vector.broadcast %136 : vector<1x32xf32> to vector<8x32xf32>
    %138 = arith.addf %135, %137 : vector<8x32xf32>
    %c0_53 = arith.constant 0 : index
    %c0_54 = arith.constant 0 : index
    %139 = vector.load %arg9[%c0_53, %c0_54] : memref<32x64xbf16, #tpu.memory_space<vmem>>, vector<32x64xbf16>
    %cst_55 = arith.constant dense<0.000000e+00> : vector<8x64xf32>
    %140 = tpu.matmul %4, %139, %cst_55 {dimension_numbers = #tpu.dot_dimension_numbers<[1], [0], [0], [1], [0, 0, 1, 1], [], []>} : vector<8x32xbf16>, vector<32x64xbf16>, vector<8x64xf32> -> vector<8x64xf32>
    %c0_56 = arith.constant 0 : index
    %c0_57 = arith.constant 0 : index
    %141 = vector.load %arg10[%c0_56, %c0_57] : memref<1x64xf32, #tpu.memory_space<vmem>>, vector<1x64xf32>
    %142 = vector.broadcast %141 : vector<1x64xf32> to vector<8x64xf32>
    %143 = arith.addf %140, %142 : vector<8x64xf32>
    %144 = vector.extract_strided_slice %143 {offsets = [0, 0], sizes = [8, 32], strides = [1, 1]} : vector<8x64xf32> to vector<8x32xf32>
    %145 = vector.extract_strided_slice %143 {offsets = [0, 32], sizes = [8, 32], strides = [1, 1]} : vector<8x64xf32> to vector<8x32xf32>
    %146 = vector.extract_strided_slice %138 {offsets = [0, 0], sizes = [8, 8], strides = [1, 1]} : vector<8x32xf32> to vector<8x8xf32>
    %147 = arith.truncf %146 : vector<8x8xf32> to vector<8x8xbf16>
    %148 = vector.extract_strided_slice %144 {offsets = [0, 0], sizes = [8, 8], strides = [1, 1]} : vector<8x32xf32> to vector<8x8xf32>
    %149 = arith.truncf %148 : vector<8x8xf32> to vector<8x8xbf16>
    %cst_58 = arith.constant dense<0.000000e+00> : vector<8x8xf32>
    %150 = tpu.matmul %147, %149, %cst_58 {dimension_numbers = #tpu.dot_dimension_numbers<[1], [1], [0], [0], [0, 0, 1, 0], [], []>} : vector<8x8xbf16>, vector<8x8xbf16>, vector<8x8xf32> -> vector<8x8xf32>
    %151 = vector.extract_strided_slice %138 {offsets = [0, 8], sizes = [8, 8], strides = [1, 1]} : vector<8x32xf32> to vector<8x8xf32>
    %152 = arith.truncf %151 : vector<8x8xf32> to vector<8x8xbf16>
    %153 = vector.extract_strided_slice %144 {offsets = [0, 8], sizes = [8, 8], strides = [1, 1]} : vector<8x32xf32> to vector<8x8xf32>
    %154 = arith.truncf %153 : vector<8x8xf32> to vector<8x8xbf16>
    %cst_59 = arith.constant dense<0.000000e+00> : vector<8x8xf32>
    %155 = tpu.matmul %152, %154, %cst_59 {dimension_numbers = #tpu.dot_dimension_numbers<[1], [1], [0], [0], [0, 0, 1, 0], [], []>} : vector<8x8xbf16>, vector<8x8xbf16>, vector<8x8xf32> -> vector<8x8xf32>
    %156 = vector.extract_strided_slice %138 {offsets = [0, 16], sizes = [8, 8], strides = [1, 1]} : vector<8x32xf32> to vector<8x8xf32>
    %157 = arith.truncf %156 : vector<8x8xf32> to vector<8x8xbf16>
    %158 = vector.extract_strided_slice %144 {offsets = [0, 16], sizes = [8, 8], strides = [1, 1]} : vector<8x32xf32> to vector<8x8xf32>
    %159 = arith.truncf %158 : vector<8x8xf32> to vector<8x8xbf16>
    %cst_60 = arith.constant dense<0.000000e+00> : vector<8x8xf32>
    %160 = tpu.matmul %157, %159, %cst_60 {dimension_numbers = #tpu.dot_dimension_numbers<[1], [1], [0], [0], [0, 0, 1, 0], [], []>} : vector<8x8xbf16>, vector<8x8xbf16>, vector<8x8xf32> -> vector<8x8xf32>
    %161 = vector.extract_strided_slice %138 {offsets = [0, 24], sizes = [8, 8], strides = [1, 1]} : vector<8x32xf32> to vector<8x8xf32>
    %162 = arith.truncf %161 : vector<8x8xf32> to vector<8x8xbf16>
    %163 = vector.extract_strided_slice %144 {offsets = [0, 24], sizes = [8, 8], strides = [1, 1]} : vector<8x32xf32> to vector<8x8xf32>
    %164 = arith.truncf %163 : vector<8x8xf32> to vector<8x8xbf16>
    %cst_61 = arith.constant dense<0.000000e+00> : vector<8x8xf32>
    %165 = tpu.matmul %162, %164, %cst_61 {dimension_numbers = #tpu.dot_dimension_numbers<[1], [1], [0], [0], [0, 0, 1, 0], [], []>} : vector<8x8xbf16>, vector<8x8xbf16>, vector<8x8xf32> -> vector<8x8xf32>
    %166 = vector.shape_cast %150 : vector<8x8xf32> to vector<1x8x8xf32>
    %167 = vector.shape_cast %155 : vector<8x8xf32> to vector<1x8x8xf32>
    %168 = vector.shape_cast %160 : vector<8x8xf32> to vector<1x8x8xf32>
    %169 = vector.shape_cast %165 : vector<8x8xf32> to vector<1x8x8xf32>
    %170 = tpu.concatenate %166, %167, %168, %169 in 0 : vector<1x8x8xf32>, vector<1x8x8xf32>, vector<1x8x8xf32>, vector<1x8x8xf32> -> vector<4x8x8xf32>
    %cst_62 = arith.constant 0.353553385 : f32
    %171 = vector.broadcast %cst_62 : f32 to vector<4x8x8xf32>
    %172 = arith.mulf %170, %171 : vector<4x8x8xf32>
    %cst_63 = arith.constant -1.000000e+30 : f32
    %173 = vector.shape_cast %132 : vector<1x8xi1> to vector<1x1x8xi1>
    %174 = vector.broadcast %173 : vector<1x1x8xi1> to vector<4x8x8xi1>
    %175 = vector.broadcast %cst_63 : f32 to vector<4x8x8xf32>
    %176 = arith.select %174, %175, %172 : vector<4x8x8xi1>, vector<4x8x8xf32>
    %cst_64 = arith.constant dense<0xFF800000> : vector<4x8xf32>
    %177 = vector.multi_reduction <maximumf>, %176, %cst_64 [2] : vector<4x8x8xf32> to vector<4x8xf32>
    %178 = vector.shape_cast %177 : vector<4x8xf32> to vector<4x8x1xf32>
    %179 = vector.broadcast %178 : vector<4x8x1xf32> to vector<4x8x8xf32>
    %180 = arith.subf %176, %179 : vector<4x8x8xf32>
    %181 = math.exp %180 : vector<4x8x8xf32>
    %cst_65 = arith.constant dense<0.000000e+00> : vector<4x8xf32>
    %182 = vector.multi_reduction <add>, %181, %cst_65 [2] : vector<4x8x8xf32> to vector<4x8xf32>
    %183 = vector.shape_cast %182 : vector<4x8xf32> to vector<4x8x1xf32>
    %184 = vector.broadcast %183 : vector<4x8x1xf32> to vector<4x8x8xf32>
    %185 = arith.divf %181, %184 : vector<4x8x8xf32>
    %186 = arith.truncf %185 : vector<4x8x8xf32> to vector<4x8x8xbf16>
    %c0_66 = arith.constant 0 : index
    %c0_67 = arith.constant 0 : index
    %c0_68 = arith.constant 0 : index
    %c0_69 = arith.constant 0 : index
    %187 = vector.load %arg18[%c0_66, %c0_67, %c0_68, %c0_69] : memref<1x4x8x8xbf16, #tpu.memory_space<vmem>>, vector<1x4x8x8xbf16>
    %188 = vector.shape_cast %187 : vector<1x4x8x8xbf16> to vector<4x8x8xbf16>
    %189 = vector.shape_cast %186 : vector<4x8x8xbf16> to vector<1x4x8x8xbf16>
    tpu.vector_store %arg18[%c0_66, %c0_67, %c0_68, %c0_69], %189 {strides = array<i32>} : memref<1x4x8x8xbf16, #tpu.memory_space<vmem>>, vector<1x4x8x8xbf16>,
    %190 = vector.extract_strided_slice %185 {offsets = [0, 0, 0], sizes = [1, 8, 8], strides = [1, 1, 1]} : vector<4x8x8xf32> to vector<1x8x8xf32>
    %191 = vector.shape_cast %190 : vector<1x8x8xf32> to vector<8x8xf32>
    %192 = arith.truncf %191 : vector<8x8xf32> to vector<8x8xbf16>
    %193 = vector.extract_strided_slice %145 {offsets = [0, 0], sizes = [8, 8], strides = [1, 1]} : vector<8x32xf32> to vector<8x8xf32>
    %194 = arith.truncf %193 : vector<8x8xf32> to vector<8x8xbf16>
    %cst_70 = arith.constant dense<0.000000e+00> : vector<8x8xf32>
    %195 = tpu.matmul %192, %194, %cst_70 {dimension_numbers = #tpu.dot_dimension_numbers<[1], [0], [0], [1], [0, 0, 1, 1], [], []>} : vector<8x8xbf16>, vector<8x8xbf16>, vector<8x8xf32> -> vector<8x8xf32>
    %c0_71 = arith.constant 0 : index
    %c0_72 = arith.constant 0 : index
    %196 = vector.load %arg19[%c0_71, %c0_72] : memref<8x32xf32, #tpu.memory_space<vmem>>, vector<8x8xf32>
    tpu.vector_store %arg19[%c0_71, %c0_72], %195 {strides = array<i32>} : memref<8x32xf32, #tpu.memory_space<vmem>>, vector<8x8xf32>,
    %197 = vector.extract_strided_slice %185 {offsets = [1, 0, 0], sizes = [1, 8, 8], strides = [1, 1, 1]} : vector<4x8x8xf32> to vector<1x8x8xf32>
    %198 = vector.shape_cast %197 : vector<1x8x8xf32> to vector<8x8xf32>
    %199 = arith.truncf %198 : vector<8x8xf32> to vector<8x8xbf16>
    %200 = vector.extract_strided_slice %145 {offsets = [0, 8], sizes = [8, 8], strides = [1, 1]} : vector<8x32xf32> to vector<8x8xf32>
    %201 = arith.truncf %200 : vector<8x8xf32> to vector<8x8xbf16>
    %cst_73 = arith.constant dense<0.000000e+00> : vector<8x8xf32>
    %202 = tpu.matmul %199, %201, %cst_73 {dimension_numbers = #tpu.dot_dimension_numbers<[1], [0], [0], [1], [0, 0, 1, 1], [], []>} : vector<8x8xbf16>, vector<8x8xbf16>, vector<8x8xf32> -> vector<8x8xf32>
    %c0_74 = arith.constant 0 : index
    %c8_75 = arith.constant 8 : index
    %203 = vector.load %arg19[%c0_74, %c8_75] : memref<8x32xf32, #tpu.memory_space<vmem>>, vector<8x8xf32>
    tpu.vector_store %arg19[%c0_74, %c8_75], %202 {strides = array<i32>} : memref<8x32xf32, #tpu.memory_space<vmem>>, vector<8x8xf32>,
    %204 = vector.extract_strided_slice %185 {offsets = [2, 0, 0], sizes = [1, 8, 8], strides = [1, 1, 1]} : vector<4x8x8xf32> to vector<1x8x8xf32>
    %205 = vector.shape_cast %204 : vector<1x8x8xf32> to vector<8x8xf32>
    %206 = arith.truncf %205 : vector<8x8xf32> to vector<8x8xbf16>
    %207 = vector.extract_strided_slice %145 {offsets = [0, 16], sizes = [8, 8], strides = [1, 1]} : vector<8x32xf32> to vector<8x8xf32>
    %208 = arith.truncf %207 : vector<8x8xf32> to vector<8x8xbf16>
    %cst_76 = arith.constant dense<0.000000e+00> : vector<8x8xf32>
    %209 = tpu.matmul %206, %208, %cst_76 {dimension_numbers = #tpu.dot_dimension_numbers<[1], [0], [0], [1], [0, 0, 1, 1], [], []>} : vector<8x8xbf16>, vector<8x8xbf16>, vector<8x8xf32> -> vector<8x8xf32>
    %c0_77 = arith.constant 0 : index
    %c16_78 = arith.constant 16 : index
    %210 = vector.load %arg19[%c0_77, %c16_78] : memref<8x32xf32, #tpu.memory_space<vmem>>, vector<8x8xf32>
    tpu.vector_store %arg19[%c0_77, %c16_78], %209 {strides = array<i32>} : memref<8x32xf32, #tpu.memory_space<vmem>>, vector<8x8xf32>,
    %211 = vector.extract_strided_slice %185 {offsets = [3, 0, 0], sizes = [1, 8, 8], strides = [1, 1, 1]} : vector<4x8x8xf32> to vector<1x8x8xf32>
    %212 = vector.shape_cast %211 : vector<1x8x8xf32> to vector<8x8xf32>
    %213 = arith.truncf %212 : vector<8x8xf32> to vector<8x8xbf16>
    %214 = vector.extract_strided_slice %145 {offsets = [0, 24], sizes = [8, 8], strides = [1, 1]} : vector<8x32xf32> to vector<8x8xf32>
    %215 = arith.truncf %214 : vector<8x8xf32> to vector<8x8xbf16>
    %cst_79 = arith.constant dense<0.000000e+00> : vector<8x8xf32>
    %216 = tpu.matmul %213, %215, %cst_79 {dimension_numbers = #tpu.dot_dimension_numbers<[1], [0], [0], [1], [0, 0, 1, 1], [], []>} : vector<8x8xbf16>, vector<8x8xbf16>, vector<8x8xf32> -> vector<8x8xf32>
    %c0_80 = arith.constant 0 : index
    %c24_81 = arith.constant 24 : index
    %217 = vector.load %arg19[%c0_80, %c24_81] : memref<8x32xf32, #tpu.memory_space<vmem>>, vector<8x8xf32>
    tpu.vector_store %arg19[%c0_80, %c24_81], %216 {strides = array<i32>} : memref<8x32xf32, #tpu.memory_space<vmem>>, vector<8x8xf32>,
    %c0_82 = arith.constant 0 : index
    %c0_83 = arith.constant 0 : index
    %218 = vector.load %arg19[%c0_82, %c0_83] : memref<8x32xf32, #tpu.memory_space<vmem>>, vector<8x32xf32>
    %219 = arith.truncf %218 : vector<8x32xf32> to vector<8x32xbf16>
    %c0_84 = arith.constant 0 : index
    %c0_85 = arith.constant 0 : index
    %220 = vector.load %arg11[%c0_84, %c0_85] : memref<32x32xbf16, #tpu.memory_space<vmem>>, vector<32x32xbf16>
    %cst_86 = arith.constant dense<0.000000e+00> : vector<8x32xf32>
    %221 = tpu.matmul %219, %220, %cst_86 {dimension_numbers = #tpu.dot_dimension_numbers<[1], [0], [0], [1], [0, 0, 1, 1], [], []>} : vector<8x32xbf16>, vector<32x32xbf16>, vector<8x32xf32> -> vector<8x32xf32>
    %222 = vector.extract_strided_slice %5 {offsets = [4, 0], sizes = [1, 32], strides = [1, 1]} : vector<10x32xf32> to vector<1x32xf32>
    %223 = vector.broadcast %222 : vector<1x32xf32> to vector<8x32xf32>
    %224 = arith.addf %221, %223 : vector<8x32xf32>
    %225 = arith.addf %224, %128 : vector<8x32xf32>
    %226 = vector.extract_strided_slice %5 {offsets = [5, 0], sizes = [1, 32], strides = [1, 1]} : vector<10x32xf32> to vector<1x32xf32>
    %227 = vector.extract_strided_slice %5 {offsets = [6, 0], sizes = [1, 32], strides = [1, 1]} : vector<10x32xf32> to vector<1x32xf32>
    %cst_87 = arith.constant dense<0.000000e+00> : vector<8xf32>
    %228 = vector.multi_reduction <add>, %225, %cst_87 [1] : vector<8x32xf32> to vector<8xf32>
    %229 = vector.shape_cast %228 : vector<8xf32> to vector<8x1xf32>
    %cst_88 = arith.constant 3.200000e+01 : f32
    %230 = vector.broadcast %cst_88 : f32 to vector<8x1xf32>
    %231 = arith.divf %229, %230 : vector<8x1xf32>
    %232 = vector.broadcast %231 : vector<8x1xf32> to vector<8x32xf32>
    %233 = arith.subf %225, %232 : vector<8x32xf32>
    %234 = arith.mulf %233, %233 : vector<8x32xf32>
    %cst_89 = arith.constant dense<0.000000e+00> : vector<8xf32>
    %235 = vector.multi_reduction <add>, %234, %cst_89 [1] : vector<8x32xf32> to vector<8xf32>
    %236 = vector.shape_cast %235 : vector<8xf32> to vector<8x1xf32>
    %cst_90 = arith.constant 3.200000e+01 : f32
    %237 = vector.broadcast %cst_90 : f32 to vector<8x1xf32>
    %238 = arith.divf %236, %237 : vector<8x1xf32>
    %239 = vector.broadcast %231 : vector<8x1xf32> to vector<8x32xf32>
    %240 = arith.subf %225, %239 : vector<8x32xf32>
    %cst_91 = arith.constant 9.99999974E-6 : f32
    %241 = vector.broadcast %cst_91 : f32 to vector<8x1xf32>
    %242 = arith.addf %238, %241 : vector<8x1xf32>
    %243 = math.rsqrt %242 : vector<8x1xf32>
    %244 = vector.broadcast %243 : vector<8x1xf32> to vector<8x32xf32>
    %245 = arith.mulf %240, %244 : vector<8x32xf32>
    %246 = vector.broadcast %226 : vector<1x32xf32> to vector<8x32xf32>
    %247 = arith.mulf %245, %246 : vector<8x32xf32>
    %248 = vector.broadcast %227 : vector<1x32xf32> to vector<8x32xf32>
    %249 = arith.addf %247, %248 : vector<8x32xf32>
    %250 = arith.truncf %249 : vector<8x32xf32> to vector<8x32xbf16>
    %c0_92 = arith.constant 0 : index
    %c0_93 = arith.constant 0 : index
    %251 = vector.load %arg12[%c0_92, %c0_93] : memref<32x64xbf16, #tpu.memory_space<vmem>>, vector<32x64xbf16>
    %cst_94 = arith.constant dense<0.000000e+00> : vector<8x64xf32>
    %252 = tpu.matmul %250, %251, %cst_94 {dimension_numbers = #tpu.dot_dimension_numbers<[1], [0], [0], [1], [0, 0, 1, 1], [], []>} : vector<8x32xbf16>, vector<32x64xbf16>, vector<8x64xf32> -> vector<8x64xf32>
    %c0_95 = arith.constant 0 : index
    %c0_96 = arith.constant 0 : index
    %253 = vector.load %arg13[%c0_95, %c0_96] : memref<1x64xf32, #tpu.memory_space<vmem>>, vector<1x64xf32>
    %254 = vector.broadcast %253 : vector<1x64xf32> to vector<8x64xf32>
    %255 = arith.addf %252, %254 : vector<8x64xf32>
    %cst_97 = arith.constant 0.000000e+00 : f32
    %256 = vector.broadcast %cst_97 : f32 to vector<8x64xf32>
    %257 = arith.maximumf %255, %256 : vector<8x64xf32>
    %258 = arith.truncf %257 : vector<8x64xf32> to vector<8x64xbf16>
    %c0_98 = arith.constant 0 : index
    %c0_99 = arith.constant 0 : index
    %259 = vector.load %arg14[%c0_98, %c0_99] : memref<64x32xbf16, #tpu.memory_space<vmem>>, vector<64x32xbf16>
    %cst_100 = arith.constant dense<0.000000e+00> : vector<8x32xf32>
    %260 = tpu.matmul %258, %259, %cst_100 {dimension_numbers = #tpu.dot_dimension_numbers<[1], [0], [0], [1], [0, 0, 1, 1], [], []>} : vector<8x64xbf16>, vector<64x32xbf16>, vector<8x32xf32> -> vector<8x32xf32>
    %261 = vector.extract_strided_slice %5 {offsets = [7, 0], sizes = [1, 32], strides = [1, 1]} : vector<10x32xf32> to vector<1x32xf32>
    %262 = vector.broadcast %261 : vector<1x32xf32> to vector<8x32xf32>
    %263 = arith.addf %260, %262 : vector<8x32xf32>
    %264 = arith.addf %263, %249 : vector<8x32xf32>
    %265 = vector.extract_strided_slice %5 {offsets = [8, 0], sizes = [1, 32], strides = [1, 1]} : vector<10x32xf32> to vector<1x32xf32>
    %266 = vector.extract_strided_slice %5 {offsets = [9, 0], sizes = [1, 32], strides = [1, 1]} : vector<10x32xf32> to vector<1x32xf32>
    %cst_101 = arith.constant dense<0.000000e+00> : vector<8xf32>
    %267 = vector.multi_reduction <add>, %264, %cst_101 [1] : vector<8x32xf32> to vector<8xf32>
    %268 = vector.shape_cast %267 : vector<8xf32> to vector<8x1xf32>
    %cst_102 = arith.constant 3.200000e+01 : f32
    %269 = vector.broadcast %cst_102 : f32 to vector<8x1xf32>
    %270 = arith.divf %268, %269 : vector<8x1xf32>
    %271 = vector.broadcast %270 : vector<8x1xf32> to vector<8x32xf32>
    %272 = arith.subf %264, %271 : vector<8x32xf32>
    %273 = arith.mulf %272, %272 : vector<8x32xf32>
    %cst_103 = arith.constant dense<0.000000e+00> : vector<8xf32>
    %274 = vector.multi_reduction <add>, %273, %cst_103 [1] : vector<8x32xf32> to vector<8xf32>
    %275 = vector.shape_cast %274 : vector<8xf32> to vector<8x1xf32>
    %cst_104 = arith.constant 3.200000e+01 : f32
    %276 = vector.broadcast %cst_104 : f32 to vector<8x1xf32>
    %277 = arith.divf %275, %276 : vector<8x1xf32>
    %278 = vector.broadcast %270 : vector<8x1xf32> to vector<8x32xf32>
    %279 = arith.subf %264, %278 : vector<8x32xf32>
    %cst_105 = arith.constant 9.99999974E-6 : f32
    %280 = vector.broadcast %cst_105 : f32 to vector<8x1xf32>
    %281 = arith.addf %277, %280 : vector<8x1xf32>
    %282 = math.rsqrt %281 : vector<8x1xf32>
    %283 = vector.broadcast %282 : vector<8x1xf32> to vector<8x32xf32>
    %284 = arith.mulf %279, %283 : vector<8x32xf32>
    %285 = vector.broadcast %265 : vector<1x32xf32> to vector<8x32xf32>
    %286 = arith.mulf %284, %285 : vector<8x32xf32>
    %287 = vector.broadcast %266 : vector<1x32xf32> to vector<8x32xf32>
    %288 = arith.addf %286, %287 : vector<8x32xf32>
    %289 = arith.truncf %288 : vector<8x32xf32> to vector<8x32xbf16>
    %c0_106 = arith.constant 0 : index
    %c0_107 = arith.constant 0 : index
    %c0_108 = arith.constant 0 : index
    %290 = vector.load %arg16[%c0_106, %c0_107, %c0_108] : memref<1x8x32xbf16, #tpu.memory_space<vmem>>, vector<1x8x32xbf16>
    %291 = vector.shape_cast %290 : vector<1x8x32xbf16> to vector<8x32xbf16>
    %292 = vector.shape_cast %289 : vector<8x32xbf16> to vector<1x8x32xbf16>
    tpu.vector_store %arg16[%c0_106, %c0_107, %c0_108], %292 {strides = array<i32>} : memref<1x8x32xbf16, #tpu.memory_space<vmem>>, vector<1x8x32xbf16>,
    return
  }
  func.func @transform_0(%arg0: i32) -> (i32, i32, i32) {
    %c0_i32 = arith.constant 0 : i32
    %c0_i32_0 = arith.constant 0 : i32
    %c0_i32_1 = arith.constant 0 : i32
    return %arg0, %c0_i32, %c0_i32_0 : i32, i32, i32
  }
  func.func @transform_1(%arg0: i32) -> (i32, i32, i32) {
    %c0_i32 = arith.constant 0 : i32
    %c0_i32_0 = arith.constant 0 : i32
    %c0_i32_1 = arith.constant 0 : i32
    return %arg0, %c0_i32, %c0_i32_0 : i32, i32, i32
  }
  func.func @transform_2(%arg0: i32) -> (i32, i32, i32) {
    %c0_i32 = arith.constant 0 : i32
    %c0_i32_0 = arith.constant 0 : i32
    %c0_i32_1 = arith.constant 0 : i32
    return %arg0, %c0_i32, %c0_i32_0 : i32, i32, i32
  }
  func.func @transform_3(%arg0: i32) -> (i32, i32, i32) {
    %c0_i32 = arith.constant 0 : i32
    %c0_i32_0 = arith.constant 0 : i32
    %c0_i32_1 = arith.constant 0 : i32
    return %arg0, %c0_i32, %c0_i32_0 : i32, i32, i32
  }
  func.func @transform_4(%arg0: i32) -> (i32, i32) {
    %c0_i32 = arith.constant 0 : i32
    %c0_i32_0 = arith.constant 0 : i32
    %c0_i32_1 = arith.constant 0 : i32
    return %c0_i32, %c0_i32_0 : i32, i32
  }
  func.func @transform_5(%arg0: i32) -> (i32, i32) {
    %c0_i32 = arith.constant 0 : i32
    %c0_i32_0 = arith.constant 0 : i32
    %c0_i32_1 = arith.constant 0 : i32
    return %c0_i32, %c0_i32_0 : i32, i32
  }
  func.func @transform_6(%arg0: i32) -> (i32, i32) {
    %c0_i32 = arith.constant 0 : i32
    %c0_i32_0 = arith.constant 0 : i32
    %c0_i32_1 = arith.constant 0 : i32
    return %c0_i32, %c0_i32_0 : i32, i32
  }
  func.func @transform_7(%arg0: i32) -> (i32, i32) {
    %c0_i32 = arith.constant 0 : i32
    %c0_i32_0 = arith.constant 0 : i32
    %c0_i32_1 = arith.constant 0 : i32
    return %c0_i32, %c0_i32_0 : i32, i32
  }
  func.func @transform_8(%arg0: i32) -> (i32, i32) {
    %c0_i32 = arith.constant 0 : i32
    %c0_i32_0 = arith.constant 0 : i32
    %c0_i32_1 = arith.constant 0 : i32
    return %c0_i32, %c0_i32_0 : i32, i32
  }
  func.func @transform_9(%arg0: i32) -> (i32, i32) {
    %c0_i32 = arith.constant 0 : i32
    %c0_i32_0 = arith.constant 0 : i32
    %c0_i32_1 = arith.constant 0 : i32
    return %c0_i32, %c0_i32_0 : i32, i32
  }
  func.func @transform_10(%arg0: i32) -> (i32, i32) {
    %c0_i32 = arith.constant 0 : i32
    %c0_i32_0 = arith.constant 0 : i32
    %c0_i32_1 = arith.constant 0 : i32
    return %c0_i32, %c0_i32_0 : i32, i32
  }
  func.func @transform_11(%arg0: i32) -> (i32, i32) {
    %c0_i32 = arith.constant 0 : i32
    %c0_i32_0 = arith.constant 0 : i32
    %c0_i32_1 = arith.constant 0 : i32
    return %c0_i32, %c0_i32_0 : i32, i32
  }
  func.func @transform_12(%arg0: i32) -> (i32, i32) {
    %c0_i32 = arith.constant 0 : i32
    %c0_i32_0 = arith.constant 0 : i32
    %c0_i32_1 = arith.constant 0 : i32
    return %c0_i32, %c0_i32_0 : i32, i32
  }
  func.func @transform_13(%arg0: i32) -> (i32, i32) {
    %c0_i32 = arith.constant 0 : i32
    %c0_i32_0 = arith.constant 0 : i32
    %c0_i32_1 = arith.constant 0 : i32
    return %c0_i32, %c0_i32_0 : i32, i32
  }
  func.func @transform_14(%arg0: i32) -> (i32, i32) {
    %c0_i32 = arith.constant 0 : i32
    %c0_i32_0 = arith.constant 0 : i32
    %c0_i32_1 = arith.constant 0 : i32
    return %c0_i32, %c0_i32_0 : i32, i32
  }
  func.func @transform_15(%arg0: i32) -> (i32, i32, i32) {
    %c0_i32 = arith.constant 0 : i32
    %c0_i32_0 = arith.constant 0 : i32
    %c0_i32_1 = arith.constant 0 : i32
    return %arg0, %c0_i32, %c0_i32_0 : i32, i32, i32
  }
  func.func @transform_16(%arg0: i32) -> (i32, i32, i32, i32) {
    %c0_i32 = arith.constant 0 : i32
    %c0_i32_0 = arith.constant 0 : i32
    %c0_i32_1 = arith.constant 0 : i32
    %c0_i32_2 = arith.constant 0 : i32
    return %arg0, %c0_i32, %c0_i32_0, %c0_i32_1 : i32, i32, i32, i32
  }
  func.func @transform_17(%arg0: i32) -> (i32, i32, i32, i32) {
    %c0_i32 = arith.constant 0 : i32
    %c0_i32_0 = arith.constant 0 : i32
    %c0_i32_1 = arith.constant 0 : i32
    %c0_i32_2 = arith.constant 0 : i32
    return %arg0, %c0_i32, %c0_i32_0, %c0_i32_1 : i32, i32, i32, i32
  }
}

</mosaic_0001>

<llo_original>
// kernel: transformer_forward.9
$region0: #{transformer_forward.9}
  #allocation0 [shape = 'u32[]', space=smem, size = 0x4, offset = 0x4, fixed_abs, tag = 'smem constant byte address 0x4 - core index']
  #allocation1 [shape = 'u32[144,128]{1,0:T(1,128)}', space=vmem, size = 0x12000, scoped, tag = 'internal scratch']
  %s0 = inlined_call_operand.vmem [shape: bf16[16,32], index: 0, kind: input, shape index: {}]
  %s1 = inlined_call_operand.vmem [shape: bf16[32,13], index: 1, kind: input, shape index: {}]
  %s2 = inlined_call_operand.hbm [shape: f32[16,13], index: 2, kind: output, shape index: {}]
  %s3 = sld [smem:[#allocation0]]
  $region41: #{transformer_forward.9} parent=0
    _
  %s5 = ssub.s32 1, %s3
  %s6 = scalar_select 0, %s5, %s3
  $region1: #{transformer_forward.9} parent=0
    #allocation2 [shape = 'u8[8192]{0}', space=vmem, size = 0x2000, scoped, tag = 'output window, operand 0']
    #allocation3 [shape = 's32[2]{0}', space=sflag, size = 0x8, scoped, tag = 'scoped memory for transformer_forward.9']
    %7 = vsyncpa [#allocation3], 0
    %s8 = scalar_lea.sflag [#allocation3], 1
    %9 = vsyncpa %s8, 0
    loop: start=0, step=1, limit=4
    $region2: #{transformer_forward.9} parent=1 // loop_pre_header
      _
    $region3: #{transformer_forward.9} parent=1 // loop_header
      %s11 = sphi 0, %s15
      %p12 = scmp.ge.s32.totalorder %s11, 4
      %s21 = sphi 0, %s23
      %s24 = sphi 0, %s21
      %s25 = sphi 0, %s24
      %s41 = sphi 0, %s25
      %s45 = sphi 0, %s45
      %s47 = sphi 0, %s45
      %s48 = sphi 0, %s47
      %s62 = sphi 0, %s48
      %s68 = sphi 0, %s70
      %s71 = sphi 0, %s68
      %s72 = sphi 0, %s71
      %s88 = sphi 0, %s72
    $region4: #{transformer_forward.9} parent=1 // loop_header_branch
      %14 = sbr.rel (%p12) target = $region8
    $region5: #{transformer_forward.9} parent=1 // loop_body
      %s16 = ssub.s32 %s11, 1
      %s17 = ssub.s32 %s11, 2
      %s18 = sadd.s32 %s11, 1
      %s19 = ssub.s32 %s11, %s18
      %p20 = scmp.eq.s32.totalorder %s19, 0
      %s22 = sadd.s32 %s21, 1
      %s23 = scalar_select %p20, %s21, %s22
      %p26 = pneg %p20
      %p27 = scmp.eq.s32.totalorder %s11, 1
      %p28 = por %p26, %p27
      %p29 = scmp.ne.s32.totalorder %s21, %s24
      %p30 = scmp.eq.s32.totalorder %s11, 0
      %p31 = por %p29, %p30
      %p32 = scmp.ne.s32.totalorder %s21, %s24
      %p33 = scmp.eq.s32.totalorder %s16, 1
      %p34 = por %p32, %p33
      %p35 = scmp.ne.s32.totalorder %s24, %s25
      %p36 = scmp.eq.s32.totalorder %s16, 0
      %p37 = por %p35, %p36
      %p38 = scmp.ne.s32.totalorder %s24, %s25
      %p39 = scmp.eq.s32.totalorder %s17, 1
      %p40 = por %p38, %p39
      %p42 = scmp.ne.s32.totalorder %s25, %s41
      %p43 = scmp.eq.s32.totalorder %s17, 0
      %p44 = por %p42, %p43
      %s46 = sadd.s32 %s45, 1
      %p49 = scmp.eq.s32.totalorder %s11, 1
      %p50 = scmp.ne.s32.totalorder %s45, %s47
      %p51 = scmp.eq.s32.totalorder %s11, 0
      %p52 = por %p50, %p51
      %p53 = scmp.ne.s32.totalorder %s45, %s47
      %p54 = scmp.eq.s32.totalorder %s16, 1
      %p55 = por %p53, %p54
      %p56 = scmp.ne.s32.totalorder %s47, %s48
      %p57 = scmp.eq.s32.totalorder %s16, 0
      %p58 = por %p56, %p57
      %p59 = scmp.ne.s32.totalorder %s47, %s48
      %p60 = scmp.eq.s32.totalorder %s17, 1
      %p61 = por %p59, %p60
      %p63 = scmp.ne.s32.totalorder %s48, %s62
      %p64 = scmp.eq.s32.totalorder %s17, 0
      %p65 = por %p63, %p64
      %s66 = ssub.s32 %s11, %s18
      %p67 = scmp.eq.s32.totalorder %s66, 0
      %s69 = sadd.s32 %s68, 1
      %s70 = scalar_select %p67, %s68, %s69
      %p73 = pneg %p67
      %p74 = scmp.eq.s32.totalorder %s11, 1
      %p75 = por %p73, %p74
      %p76 = scmp.ne.s32.totalorder %s68, %s71
      %p77 = scmp.eq.s32.totalorder %s11, 0
      %p78 = por %p76, %p77
      %p79 = scmp.ne.s32.totalorder %s68, %s71
      %p80 = scmp.eq.s32.totalorder %s16, 1
      %p81 = por %p79, %p80
      %p82 = scmp.ne.s32.totalorder %s71, %s72
      %p83 = scmp.eq.s32.totalorder %s16, 0
      %p84 = por %p82, %p83
      %p85 = scmp.ne.s32.totalorder %s71, %s72
      %p86 = scmp.eq.s32.totalorder %s17, 1
      %p87 = por %p85, %p86
      %p89 = scmp.ne.s32.totalorder %s72, %s88
      %p90 = scmp.eq.s32.totalorder %s17, 0
      %p91 = por %p89, %p90
      %p92 = scmp.le.s32.totalorder 1, %s11
      %p93 = scmp.lt.s32.totalorder %s11, 3
      %p94 = pnand %p92, %p93
      %p95 = pneg %p94
      // Predicated region
      $region9: #{transformer_forward.9} parent=5 // pred_check
        _
      $region10: #{transformer_forward.9} parent=5 // pred_check_branch
        %97 = sbr.rel (%p94) target = $region12
      $region11: #{transformer_forward.9} parent=5 // pred_region
        %s98 = ssub.s32 %s11, 1
        // Predicated region
        $region13: #{transformer_forward.9} parent=11 // pred_check
          %p99 = pneg %p58
        $region14: #{transformer_forward.9} parent=11 // pred_check_branch
          %101 = sbr.rel (%p99) target = $region16
        $region15: #{transformer_forward.9} parent=11 // pred_region
          _
        $region16: #{transformer_forward.9} parent=11 // pred_fallthru
          _
      $region12: #{transformer_forward.9} parent=5 // pred_fallthru
        _
      %p102 = scmp.lt.s32.totalorder %s11, 2
      // Predicated region
      $region17: #{transformer_forward.9} parent=5 // pred_check
        %p103 = pneg %p102
      $region18: #{transformer_forward.9} parent=5 // pred_check_branch
        %105 = sbr.rel (%p103) target = $region20
      $region19: #{transformer_forward.9} parent=5 // pred_region
        // Predicated region
        $region21: #{transformer_forward.9} parent=19 // pred_check
          %p106 = pneg %p31
        $region22: #{transformer_forward.9} parent=19 // pred_check_branch
          %108 = sbr.rel (%p106) target = $region24
        $region23: #{transformer_forward.9} parent=19 // pred_region
          %p109 = scmp.lt.s32.totalorder %s11, 1
          %s110 = scalar_select %p109, %s11, 1
          %s111 = smul.addr %s110, 4
          %s112 = scalar_lea.vmem %s0, %s111
        $region24: #{transformer_forward.9} parent=19 // pred_fallthru
          _
      $region20: #{transformer_forward.9} parent=5 // pred_fallthru
        _
      %p113 = scmp.le.s32.totalorder 1, %s11
      %p114 = scmp.lt.s32.totalorder %s11, 3
      %p115 = pnand %p113, %p114
      %p116 = pneg %p115
      // Predicated region
      $region25: #{transformer_forward.9} parent=5 // pred_check
        _
      $region26: #{transformer_forward.9} parent=5 // pred_check_branch
        %118 = sbr.rel (%p115) target = $region28
      $region27: #{transformer_forward.9} parent=5 // pred_region
        %s119 = ssub.s32 %s11, 1
        %p120 = scmp.lt.s32.totalorder %s16, 1
        %s121 = scalar_select %p120, %s16, 1
        %s122 = smul.addr %s121, 4
        %s123 = scalar_lea.vmem %s0, %s122
        %p124 = pneg %p37
        %p125 = pneg %p34
        %p126 = pneg %p58
        %p127 = pneg %p55
        %p128 = pneg %p84
        %p129 = pneg %p81
        %s130 = sand.u32 %s71, 1
        %s131 = scalar_lea.sflag [#allocation3], %s130
        %s132 = sand.u32 %s71, 1
        %s133 = smul.addr %s132, 8
        %s134 = scalar_lea.vmem [#allocation2], %s133
        %p135 = scmp.lt.s32.totalorder %s16, 1
        %s136 = scalar_select %p135, %s16, 1
        %s137 = smul.addr %s136, 4
        %s138 = scalar_lea.vmem %s0, %s137
        %v140 = vld [vmem:[%s138] sm:$0xf]
        %v141 = vld [vmem:[%s1] sm:$0xf]
        %v142 = vld [vmem:[%s1 + $0x4] sm:$0xf]
        %v143 = vld [vmem:[%s1 + $0x8] sm:$0xf]
        %v144 = vld [vmem:[%s1 + $0xc] sm:$0xf]
        %v149 = vunpack.c.l.b16 %v141
        %v150 = vunpack.c.l.b16 %v142
        %v151 = vunpack.c.l.b16 %v143
        %v152 = vunpack.c.l.b16 %v144
        %v153 = vpack.c.b16 %v150, %v149
        %v154 = vpack.c.b16 %v152, %v151
        %vm157 = vcmask 261120
        %v159 = vsel %vm157, %v140, 0
        %161 = vmatprep.subr.bf16.mxu0 0
        %162 = vmatpush1.bf16.msra.mxu0 0
        %163 = vmatprep.subr.bf16.mxu0 0
        %164 = vmatpush1.bf16.msra.mxu0 0
        %165 = vmatprep.subr.bf16.mxu0 0
        %166 = vmatpush1.bf16.msra.mxu0 0
        %167 = vmatprep.subr.bf16.mxu0 0
        %168 = vmatpush1.bf16.msra.mxu0 0
        %169 = vmatprep.subr.bf16.mxu0 0
        %170 = vmatpush1.bf16.msra.mxu0 0
        %171 = vmatprep.subr.bf16.mxu0 0
        %172 = vmatpush1.bf16.msra.mxu0 0
        %173 = vmatprep.subr.bf16.mxu0 0
        %174 = vmatpush1.bf16.msra.mxu0 %v154
        %175 = vmatprep.subr.bf16.mxu0 0
        %176 = vmatpush1.bf16.msra.mxu0 %v153
        %177 = vmatprep.subr.bf16.mxu0 0
        %178 = vmatpush2.bf16.msra.mxu0 0
        %179 = vmatprep.subr.bf16.mxu0 0
        %180 = vmatpush2.bf16.msra.mxu0 0
        %181 = vmatprep.subr.bf16.mxu0 0
        %182 = vmatpush2.bf16.msra.mxu0 0
        %183 = vmatprep.subr.bf16.mxu0 0
        %184 = vmatpush2.bf16.msra.mxu0 0
        %185 = vmatprep.subr.bf16.mxu0 0
        %186 = vmatpush2.bf16.msra.mxu0 0
        %187 = vmatprep.subr.bf16.mxu0 0
        %188 = vmatpush2.bf16.msra.mxu0 0
        %189 = vmatprep.subr.bf16.mxu0 0
        %190 = vmatpush2.bf16.msra.mxu0 0
        %191 = vmatprep.subr.bf16.mxu0 0
        %192 = vmatpush2.bf16.msra.mxu0 0
        %193 = vmatprep.mubr.bf16.mxu0 0
        %194 = vmatmul.mubr.bf16.gmra.mxu0 %v159
        %v195 = vpop.f32.mrf.mxu0
        %v196 = vadd.f32 0.0, %v195
        %v197 = vpop.f32.mrf.mxu0
        %v198 = vpop.f32.mrf.mxu0
        %v199 = vpop.f32.mrf.mxu0
        %200 = vdwg.mxu0
        %vm201 = vcmask 105472
        %v202 = vsel %vm201, %v196, -inf
        %203 = vmax.xlane.f32.xlu0 %v202
        %v204 = vpop.xlane.xlu0 %203
        %v205 = vsub.f32 %v196, %v204
        %v206 = vmul.f32 %v205, 1.442695
        %v207 = vpow.pop %v206
        %v208 = vsel %vm201, %v207, 0.0
        %209 = vadd.xlane.f32.xlu0 %v208
        %v210 = vpop.xlane.xlu0 %209
        %v211 = vrcp.pop %v210
        %v212 = vmul.f32 %v207, %v211
        %213 = vst.msk [vmem:[%s134] sm:$0xff] %vm201, %v212
        %s214 = sand.u32 %s71, 1
        %s215 = scalar_lea.sflag [#allocation3], %s214
        %s216 = sand.u32 %s71, 1
        %s217 = smul.addr %s216, 8
        %s218 = scalar_lea.vmem [#allocation2], %s217
        // Predicated region
        $region29: #{transformer_forward.9} parent=27 // pred_check
          %p219 = pneg %p81
        $region30: #{transformer_forward.9} parent=27 // pred_check_branch
          %221 = sbr.rel (%p219) target = $region32
        $region31: #{transformer_forward.9} parent=27 // pred_region
          %s223 = ssub.s32 128, 128
          %224 = vsyncadd %s215, %s223
          %s225 = smul.addr %s16, 128
          %s226 = scalar_lea.hbm %s2, %s225
          %s228 = sshll.u32 %s218, 4
          %s229 = int_to_ptr.vmem [resolvable:$true] %s228
          %231 = dma.vmem_to_hbm [thread:$0]  %s229, 128, %s226, %s215
        $region32: #{transformer_forward.9} parent=27 // pred_fallthru
          _
      $region28: #{transformer_forward.9} parent=5 // pred_fallthru
        _
      %p232 = scmp.le.s32.totalorder 2, %s11
      // Predicated region
      $region33: #{transformer_forward.9} parent=5 // pred_check
        %p233 = pneg %p232
      $region34: #{transformer_forward.9} parent=5 // pred_check_branch
        %235 = sbr.rel (%p233) target = $region36
      $region35: #{transformer_forward.9} parent=5 // pred_region
        %s236 = ssub.s32 %s11, 2
        // Predicated region
        $region37: #{transformer_forward.9} parent=35 // pred_check
          %p237 = pneg %p87
        $region38: #{transformer_forward.9} parent=35 // pred_check_branch
          %239 = sbr.rel (%p237) target = $region40
        $region39: #{transformer_forward.9} parent=35 // pred_region
          %s240 = sand.u32 %s72, 1
          %s241 = scalar_lea.sflag [#allocation3], %s240
          %s242 = sand.u32 %s72, 1
          %s243 = smul.addr %s242, 8
          %s244 = scalar_lea.vmem [#allocation2], %s243
          %245 = dma.done %s241, 128
        $region40: #{transformer_forward.9} parent=35 // pred_fallthru
          _
      $region36: #{transformer_forward.9} parent=5 // pred_fallthru
        _
    $region6: #{transformer_forward.9} parent=1 // loop_footer
      %s15 = sadd.s32 1, %s11
    $region7: #{transformer_forward.9} parent=1 // loop_footer_branch
      %10 = sbr.rel target = $region3
    $region8: #{transformer_forward.9} parent=1 // loop_exit
      _
    %246 = vsyncpa [#allocation3], 1
    %s247 = scalar_lea.sflag [#allocation3], 1
    %248 = vsyncpa %s247, 1

// kernel: transformer_forward.5
$region0: #{transformer_forward.5}
  #allocation0 [shape = 'u32[]', space=smem, size = 0x4, offset = 0x4, fixed_abs, tag = 'smem constant byte address 0x4 - core index']
  #allocation1 [shape = 'u32[144,128]{1,0:T(1,128)}', space=vmem, size = 0x12000, scoped, tag = 'internal scratch']
  #allocation2 [shape = 'f32[8,32]{1,0:T(8,128)}', space=vmem, size = 0x1000, scoped, tag = 'scratch operand']
  %s0 = inlined_call_operand.vmem [shape: bf16[2,8,32], index: 0, kind: input, shape index: {}]
  %s1 = inlined_call_operand.vmem [shape: f32[2,1,8], index: 1, kind: input, shape index: {}]
  %s2 = inlined_call_operand.vmem [shape: bf16[32,96], index: 2, kind: input, shape index: {}]
  %s3 = inlined_call_operand.vmem [shape: f32[1,96], index: 3, kind: input, shape index: {}]
  %s4 = inlined_call_operand.vmem [shape: bf16[32,32], index: 4, kind: input, shape index: {}]
  %s5 = inlined_call_operand.vmem [shape: bf16[32,64], index: 5, kind: input, shape index: {}]
  %s6 = inlined_call_operand.vmem [shape: f32[1,64], index: 6, kind: input, shape index: {}]
  %s7 = inlined_call_operand.vmem [shape: bf16[64,32], index: 7, kind: input, shape index: {}]
  %s8 = inlined_call_operand.vmem [shape: f32[6,32], index: 8, kind: input, shape index: {}]
  %s9 = inlined_call_operand.vmem [shape: bf16[2,8,32], index: 9, kind: output, shape index: {0}]
  %s10 = inlined_call_operand.hbm [shape: bf16[2,4,8,8], index: 10, kind: output, shape index: {1}]
  %11 = xla_tuple %s9, %s10
  %s12 = sld [smem:[#allocation0]]
  $region77: #{transformer_forward.5} parent=0
    _
  %s14 = ssub.s32 1, %s12
  %s15 = scalar_select 0, %s14, %s12
  $region1: #{transformer_forward.5} parent=0
    #allocation3 [shape = 'u8[16384]{0}', space=vmem, size = 0x4000, scoped, tag = 'output window, operand 1']
    #allocation4 [shape = 's32[2]{0}', space=sflag, size = 0x8, scoped, tag = 'scoped memory for transformer_forward.5']
    %16 = vsyncpa [#allocation4], 0
    %s17 = scalar_lea.sflag [#allocation4], 1
    %18 = vsyncpa %s17, 0
    loop: start=0, step=1, limit=4
    $region2: #{transformer_forward.5} parent=1 // loop_pre_header
      _
    $region3: #{transformer_forward.5} parent=1 // loop_header
      %s20 = sphi 0, %s24
      %p21 = scmp.ge.s32.totalorder %s20, 4
      %s30 = sphi 0, %s32
      %s33 = sphi 0, %s30
      %s34 = sphi 0, %s33
      %s50 = sphi 0, %s34
      %s56 = sphi 0, %s58
      %s59 = sphi 0, %s56
      %s60 = sphi 0, %s59
      %s76 = sphi 0, %s60
      %s80 = sphi 0, %s80
      %s82 = sphi 0, %s80
      %s83 = sphi 0, %s82
      %s97 = sphi 0, %s83
      %s101 = sphi 0, %s101
      %s103 = sphi 0, %s101
      %s104 = sphi 0, %s103
      %s118 = sphi 0, %s104
      %s122 = sphi 0, %s122
      %s124 = sphi 0, %s122
      %s125 = sphi 0, %s124
      %s139 = sphi 0, %s125
      %s143 = sphi 0, %s143
      %s145 = sphi 0, %s143
      %s146 = sphi 0, %s145
      %s160 = sphi 0, %s146
      %s164 = sphi 0, %s164
      %s166 = sphi 0, %s164
      %s167 = sphi 0, %s166
      %s181 = sphi 0, %s167
      %s185 = sphi 0, %s185
      %s187 = sphi 0, %s185
      %s188 = sphi 0, %s187
      %s202 = sphi 0, %s188
      %s206 = sphi 0, %s206
      %s208 = sphi 0, %s206
      %s209 = sphi 0, %s208
      %s223 = sphi 0, %s209
      %s229 = sphi 0, %s231
      %s232 = sphi 0, %s229
      %s233 = sphi 0, %s232
      %s249 = sphi 0, %s233
      %s255 = sphi 0, %s257
      %s258 = sphi 0, %s255
      %s259 = sphi 0, %s258
      %s275 = sphi 0, %s259
    $region4: #{transformer_forward.5} parent=1 // loop_header_branch
      %23 = sbr.rel (%p21) target = $region8
    $region5: #{transformer_forward.5} parent=1 // loop_body
      %s25 = ssub.s32 %s20, 1
      %s26 = ssub.s32 %s20, 2
      %s27 = sadd.s32 %s20, 1
      %s28 = ssub.s32 %s20, %s27
      %p29 = scmp.eq.s32.totalorder %s28, 0
      %s31 = sadd.s32 %s30, 1
      %s32 = scalar_select %p29, %s30, %s31
      %p35 = pneg %p29
      %p36 = scmp.eq.s32.totalorder %s20, 1
      %p37 = por %p35, %p36
      %p38 = scmp.ne.s32.totalorder %s30, %s33
      %p39 = scmp.eq.s32.totalorder %s20, 0
      %p40 = por %p38, %p39
      %p41 = scmp.ne.s32.totalorder %s30, %s33
      %p42 = scmp.eq.s32.totalorder %s25, 1
      %p43 = por %p41, %p42
      %p44 = scmp.ne.s32.totalorder %s33, %s34
      %p45 = scmp.eq.s32.totalorder %s25, 0
      %p46 = por %p44, %p45
      %p47 = scmp.ne.s32.totalorder %s33, %s34
      %p48 = scmp.eq.s32.totalorder %s26, 1
      %p49 = por %p47, %p48
      %p51 = scmp.ne.s32.totalorder %s34, %s50
      %p52 = scmp.eq.s32.totalorder %s26, 0
      %p53 = por %p51, %p52
      %s54 = ssub.s32 %s20, %s27
      %p55 = scmp.eq.s32.totalorder %s54, 0
      %s57 = sadd.s32 %s56, 1
      %s58 = scalar_select %p55, %s56, %s57
      %p61 = pneg %p55
      %p62 = scmp.eq.s32.totalorder %s20, 1
      %p63 = por %p61, %p62
      %p64 = scmp.ne.s32.totalorder %s56, %s59
      %p65 = scmp.eq.s32.totalorder %s20, 0
      %p66 = por %p64, %p65
      %p67 = scmp.ne.s32.totalorder %s56, %s59
      %p68 = scmp.eq.s32.totalorder %s25, 1
      %p69 = por %p67, %p68
      %p70 = scmp.ne.s32.totalorder %s59, %s60
      %p71 = scmp.eq.s32.totalorder %s25, 0
      %p72 = por %p70, %p71
      %p73 = scmp.ne.s32.totalorder %s59, %s60
      %p74 = scmp.eq.s32.totalorder %s26, 1
      %p75 = por %p73, %p74
      %p77 = scmp.ne.s32.totalorder %s60, %s76
      %p78 = scmp.eq.s32.totalorder %s26, 0
      %p79 = por %p77, %p78
      %s81 = sadd.s32 %s80, 1
      %p84 = scmp.eq.s32.totalorder %s20, 1
      %p85 = scmp.ne.s32.totalorder %s80, %s82
      %p86 = scmp.eq.s32.totalorder %s20, 0
      %p87 = por %p85, %p86
      %p88 = scmp.ne.s32.totalorder %s80, %s82
      %p89 = scmp.eq.s32.totalorder %s25, 1
      %p90 = por %p88, %p89
      %p91 = scmp.ne.s32.totalorder %s82, %s83
      %p92 = scmp.eq.s32.totalorder %s25, 0
      %p93 = por %p91, %p92
      %p94 = scmp.ne.s32.totalorder %s82, %s83
      %p95 = scmp.eq.s32.totalorder %s26, 1
      %p96 = por %p94, %p95
      %p98 = scmp.ne.s32.totalorder %s83, %s97
      %p99 = scmp.eq.s32.totalorder %s26, 0
      %p100 = por %p98, %p99
      %s102 = sadd.s32 %s101, 1
      %p105 = scmp.eq.s32.totalorder %s20, 1
      %p106 = scmp.ne.s32.totalorder %s101, %s103
      %p107 = scmp.eq.s32.totalorder %s20, 0
      %p108 = por %p106, %p107
      %p109 = scmp.ne.s32.totalorder %s101, %s103
      %p110 = scmp.eq.s32.totalorder %s25, 1
      %p111 = por %p109, %p110
      %p112 = scmp.ne.s32.totalorder %s103, %s104
      %p113 = scmp.eq.s32.totalorder %s25, 0
      %p114 = por %p112, %p113
      %p115 = scmp.ne.s32.totalorder %s103, %s104
      %p116 = scmp.eq.s32.totalorder %s26, 1
      %p117 = por %p115, %p116
      %p119 = scmp.ne.s32.totalorder %s104, %s118
      %p120 = scmp.eq.s32.totalorder %s26, 0
      %p121 = por %p119, %p120
      %s123 = sadd.s32 %s122, 1
      %p126 = scmp.eq.s32.totalorder %s20, 1
      %p127 = scmp.ne.s32.totalorder %s122, %s124
      %p128 = scmp.eq.s32.totalorder %s20, 0
      %p129 = por %p127, %p128
      %p130 = scmp.ne.s32.totalorder %s122, %s124
      %p131 = scmp.eq.s32.totalorder %s25, 1
      %p132 = por %p130, %p131
      %p133 = scmp.ne.s32.totalorder %s124, %s125
      %p134 = scmp.eq.s32.totalorder %s25, 0
      %p135 = por %p133, %p134
      %p136 = scmp.ne.s32.totalorder %s124, %s125
      %p137 = scmp.eq.s32.totalorder %s26, 1
      %p138 = por %p136, %p137
      %p140 = scmp.ne.s32.totalorder %s125, %s139
      %p141 = scmp.eq.s32.totalorder %s26, 0
      %p142 = por %p140, %p141
      %s144 = sadd.s32 %s143, 1
      %p147 = scmp.eq.s32.totalorder %s20, 1
      %p148 = scmp.ne.s32.totalorder %s143, %s145
      %p149 = scmp.eq.s32.totalorder %s20, 0
      %p150 = por %p148, %p149
      %p151 = scmp.ne.s32.totalorder %s143, %s145
      %p152 = scmp.eq.s32.totalorder %s25, 1
      %p153 = por %p151, %p152
      %p154 = scmp.ne.s32.totalorder %s145, %s146
      %p155 = scmp.eq.s32.totalorder %s25, 0
      %p156 = por %p154, %p155
      %p157 = scmp.ne.s32.totalorder %s145, %s146
      %p158 = scmp.eq.s32.totalorder %s26, 1
      %p159 = por %p157, %p158
      %p161 = scmp.ne.s32.totalorder %s146, %s160
      %p162 = scmp.eq.s32.totalorder %s26, 0
      %p163 = por %p161, %p162
      %s165 = sadd.s32 %s164, 1
      %p168 = scmp.eq.s32.totalorder %s20, 1
      %p169 = scmp.ne.s32.totalorder %s164, %s166
      %p170 = scmp.eq.s32.totalorder %s20, 0
      %p171 = por %p169, %p170
      %p172 = scmp.ne.s32.totalorder %s164, %s166
      %p173 = scmp.eq.s32.totalorder %s25, 1
      %p174 = por %p172, %p173
      %p175 = scmp.ne.s32.totalorder %s166, %s167
      %p176 = scmp.eq.s32.totalorder %s25, 0
      %p177 = por %p175, %p176
      %p178 = scmp.ne.s32.totalorder %s166, %s167
      %p179 = scmp.eq.s32.totalorder %s26, 1
      %p180 = por %p178, %p179
      %p182 = scmp.ne.s32.totalorder %s167, %s181
      %p183 = scmp.eq.s32.totalorder %s26, 0
      %p184 = por %p182, %p183
      %s186 = sadd.s32 %s185, 1
      %p189 = scmp.eq.s32.totalorder %s20, 1
      %p190 = scmp.ne.s32.totalorder %s185, %s187
      %p191 = scmp.eq.s32.totalorder %s20, 0
      %p192 = por %p190, %p191
      %p193 = scmp.ne.s32.totalorder %s185, %s187
      %p194 = scmp.eq.s32.totalorder %s25, 1
      %p195 = por %p193, %p194
      %p196 = scmp.ne.s32.totalorder %s187, %s188
      %p197 = scmp.eq.s32.totalorder %s25, 0
      %p198 = por %p196, %p197
      %p199 = scmp.ne.s32.totalorder %s187, %s188
      %p200 = scmp.eq.s32.totalorder %s26, 1
      %p201 = por %p199, %p200
      %p203 = scmp.ne.s32.totalorder %s188, %s202
      %p204 = scmp.eq.s32.totalorder %s26, 0
      %p205 = por %p203, %p204
      %s207 = sadd.s32 %s206, 1
      %p210 = scmp.eq.s32.totalorder %s20, 1
      %p211 = scmp.ne.s32.totalorder %s206, %s208
      %p212 = scmp.eq.s32.totalorder %s20, 0
      %p213 = por %p211, %p212
      %p214 = scmp.ne.s32.totalorder %s206, %s208
      %p215 = scmp.eq.s32.totalorder %s25, 1
      %p216 = por %p214, %p215
      %p217 = scmp.ne.s32.totalorder %s208, %s209
      %p218 = scmp.eq.s32.totalorder %s25, 0
      %p219 = por %p217, %p218
      %p220 = scmp.ne.s32.totalorder %s208, %s209
      %p221 = scmp.eq.s32.totalorder %s26, 1
      %p222 = por %p220, %p221
      %p224 = scmp.ne.s32.totalorder %s209, %s223
      %p225 = scmp.eq.s32.totalorder %s26, 0
      %p226 = por %p224, %p225
      %s227 = ssub.s32 %s20, %s27
      %p228 = scmp.eq.s32.totalorder %s227, 0
      %s230 = sadd.s32 %s229, 1
      %s231 = scalar_select %p228, %s229, %s230
      %p234 = pneg %p228
      %p235 = scmp.eq.s32.totalorder %s20, 1
      %p236 = por %p234, %p235
      %p237 = scmp.ne.s32.totalorder %s229, %s232
      %p238 = scmp.eq.s32.totalorder %s20, 0
      %p239 = por %p237, %p238
      %p240 = scmp.ne.s32.totalorder %s229, %s232
      %p241 = scmp.eq.s32.totalorder %s25, 1
      %p242 = por %p240, %p241
      %p243 = scmp.ne.s32.totalorder %s232, %s233
      %p244 = scmp.eq.s32.totalorder %s25, 0
      %p245 = por %p243, %p244
      %p246 = scmp.ne.s32.totalorder %s232, %s233
      %p247 = scmp.eq.s32.totalorder %s26, 1
      %p248 = por %p246, %p247
      %p250 = scmp.ne.s32.totalorder %s233, %s249
      %p251 = scmp.eq.s32.totalorder %s26, 0
      %p252 = por %p250, %p251
      %s253 = ssub.s32 %s20, %s27
      %p254 = scmp.eq.s32.totalorder %s253, 0
      %s256 = sadd.s32 %s255, 1
      %s257 = scalar_select %p254, %s255, %s256
      %p260 = pneg %p254
      %p261 = scmp.eq.s32.totalorder %s20, 1
      %p262 = por %p260, %p261
      %p263 = scmp.ne.s32.totalorder %s255, %s258
      %p264 = scmp.eq.s32.totalorder %s20, 0
      %p265 = por %p263, %p264
      %p266 = scmp.ne.s32.totalorder %s255, %s258
      %p267 = scmp.eq.s32.totalorder %s25, 1
      %p268 = por %p266, %p267
      %p269 = scmp.ne.s32.totalorder %s258, %s259
      %p270 = scmp.eq.s32.totalorder %s25, 0
      %p271 = por %p269, %p270
      %p272 = scmp.ne.s32.totalorder %s258, %s259
      %p273 = scmp.eq.s32.totalorder %s26, 1
      %p274 = por %p272, %p273
      %p276 = scmp.ne.s32.totalorder %s259, %s275
      %p277 = scmp.eq.s32.totalorder %s26, 0
      %p278 = por %p276, %p277
      %p279 = scmp.le.s32.totalorder 1, %s20
      %p280 = scmp.lt.s32.totalorder %s20, 3
      %p281 = pnand %p279, %p280
      %p282 = pneg %p281
      // Predicated region
      $region9: #{transformer_forward.5} parent=5 // pred_check
        _
      $region10: #{transformer_forward.5} parent=5 // pred_check_branch
        %284 = sbr.rel (%p281) target = $region12
      $region11: #{transformer_forward.5} parent=5 // pred_region
        %s285 = ssub.s32 %s20, 1
        // Predicated region
        $region13: #{transformer_forward.5} parent=11 // pred_check
          %p286 = pneg %p93
        $region14: #{transformer_forward.5} parent=11 // pred_check_branch
          %288 = sbr.rel (%p286) target = $region16
        $region15: #{transformer_forward.5} parent=11 // pred_region
          _
        $region16: #{transformer_forward.5} parent=11 // pred_fallthru
          _
        // Predicated region
        $region17: #{transformer_forward.5} parent=11 // pred_check
          %p289 = pneg %p114
        $region18: #{transformer_forward.5} parent=11 // pred_check_branch
          %291 = sbr.rel (%p289) target = $region20
        $region19: #{transformer_forward.5} parent=11 // pred_region
          _
        $region20: #{transformer_forward.5} parent=11 // pred_fallthru
          _
        // Predicated region
        $region21: #{transformer_forward.5} parent=11 // pred_check
          %p292 = pneg %p135
        $region22: #{transformer_forward.5} parent=11 // pred_check_branch
          %294 = sbr.rel (%p292) target = $region24
        $region23: #{transformer_forward.5} parent=11 // pred_region
          _
        $region24: #{transformer_forward.5} parent=11 // pred_fallthru
          _
        // Predicated region
        $region25: #{transformer_forward.5} parent=11 // pred_check
          %p295 = pneg %p156
        $region26: #{transformer_forward.5} parent=11 // pred_check_branch
          %297 = sbr.rel (%p295) target = $region28
        $region27: #{transformer_forward.5} parent=11 // pred_region
          _
        $region28: #{transformer_forward.5} parent=11 // pred_fallthru
          _
        // Predicated region
        $region29: #{transformer_forward.5} parent=11 // pred_check
          %p298 = pneg %p177
        $region30: #{transformer_forward.5} parent=11 // pred_check_branch
          %300 = sbr.rel (%p298) target = $region32
        $region31: #{transformer_forward.5} parent=11 // pred_region
          _
        $region32: #{transformer_forward.5} parent=11 // pred_fallthru
          _
        // Predicated region
        $region33: #{transformer_forward.5} parent=11 // pred_check
          %p301 = pneg %p198
        $region34: #{transformer_forward.5} parent=11 // pred_check_branch
          %303 = sbr.rel (%p301) target = $region36
        $region35: #{transformer_forward.5} parent=11 // pred_region
          _
        $region36: #{transformer_forward.5} parent=11 // pred_fallthru
          _
        // Predicated region
        $region37: #{transformer_forward.5} parent=11 // pred_check
          %p304 = pneg %p219
        $region38: #{transformer_forward.5} parent=11 // pred_check_branch
          %306 = sbr.rel (%p304) target = $region40
        $region39: #{transformer_forward.5} parent=11 // pred_region
          _
        $region40: #{transformer_forward.5} parent=11 // pred_fallthru
          _
      $region12: #{transformer_forward.5} parent=5 // pred_fallthru
        _
      %p307 = scmp.lt.s32.totalorder %s20, 2
      // Predicated region
      $region41: #{transformer_forward.5} parent=5 // pred_check
        %p308 = pneg %p307
      $region42: #{transformer_forward.5} parent=5 // pred_check_branch
        %310 = sbr.rel (%p308) target = $region44
      $region43: #{transformer_forward.5} parent=5 // pred_region
        // Predicated region
        $region45: #{transformer_forward.5} parent=43 // pred_check
          %p311 = pneg %p40
        $region46: #{transformer_forward.5} parent=43 // pred_check_branch
          %313 = sbr.rel (%p311) target = $region48
        $region47: #{transformer_forward.5} parent=43 // pred_region
          %p314 = scmp.lt.s32.totalorder %s20, 1
          %s315 = scalar_select %p314, %s20, 1
          %s316 = smul.addr %s315, 4
          %s317 = scalar_lea.vmem %s0, %s316
        $region48: #{transformer_forward.5} parent=43 // pred_fallthru
          _
        // Predicated region
        $region49: #{transformer_forward.5} parent=43 // pred_check
          %p318 = pneg %p66
        $region50: #{transformer_forward.5} parent=43 // pred_check_branch
          %320 = sbr.rel (%p318) target = $region52
        $region51: #{transformer_forward.5} parent=43 // pred_region
          %p321 = scmp.lt.s32.totalorder %s20, 1
          %s322 = scalar_select %p321, %s20, 1
          %s323 = scalar_lea.vmem %s1, %s322
        $region52: #{transformer_forward.5} parent=43 // pred_fallthru
          _
      $region44: #{transformer_forward.5} parent=5 // pred_fallthru
        _
      %p324 = scmp.le.s32.totalorder 1, %s20
      %p325 = scmp.lt.s32.totalorder %s20, 3
      %p326 = pnand %p324, %p325
      %p327 = pneg %p326
      // Predicated region
      $region53: #{transformer_forward.5} parent=5 // pred_check
        _
      $region54: #{transformer_forward.5} parent=5 // pred_check_branch
        %329 = sbr.rel (%p326) target = $region56
      $region55: #{transformer_forward.5} parent=5 // pred_region
        %s330 = ssub.s32 %s20, 1
        %p331 = scmp.lt.s32.totalorder %s25, 1
        %s332 = scalar_select %p331, %s25, 1
        %s333 = smul.addr %s332, 4
        %s334 = scalar_lea.vmem %s0, %s333
        %p335 = pneg %p46
        %p336 = pneg %p43
        %p337 = scmp.lt.s32.totalorder %s25, 1
        %s338 = scalar_select %p337, %s25, 1
        %s339 = scalar_lea.vmem %s1, %s338
        %p340 = pneg %p72
        %p341 = pneg %p69
        %p342 = pneg %p93
        %p343 = pneg %p90
        %p344 = pneg %p114
        %p345 = pneg %p111
        %p346 = pneg %p135
        %p347 = pneg %p132
        %p348 = pneg %p156
        %p349 = pneg %p153
        %p350 = pneg %p177
        %p351 = pneg %p174
        %p352 = pneg %p198
        %p353 = pneg %p195
        %p354 = pneg %p219
        %p355 = pneg %p216
        %p356 = pneg %p245
        %p357 = pneg %p242
        %p358 = scmp.lt.s32.totalorder %s25, 1
        %s359 = scalar_select %p358, %s25, 1
        %s360 = smul.addr %s359, 4
        %s361 = scalar_lea.vmem %s9, %s360
        %p362 = pneg %p271
        %p363 = pneg %p268
        %s364 = sand.u32 %s258, 1
        %s365 = scalar_lea.sflag [#allocation4], %s364
        %s366 = sand.u32 %s258, 1
        %s367 = smul.addr %s366, 16
        %s368 = scalar_lea.vmem [#allocation3], %s367
        %p369 = scmp.lt.s32.totalorder %s25, 1
        %s370 = scalar_select %p369, %s25, 1
        %s371 = smul.addr %s370, 4
        %s372 = scalar_lea.vmem %s0, %s371
        %p373 = scmp.lt.s32.totalorder %s25, 1
        %s374 = scalar_select %p373, %s25, 1
        %s375 = scalar_lea.vmem %s1, %s374
        %p376 = scmp.lt.s32.totalorder %s25, 1
        %s377 = scalar_select %p376, %s25, 1
        %s378 = smul.addr %s377, 4
        %s379 = scalar_lea.vmem %s9, %s378
        %v381 = vld [vmem:[%s372] sm:$0xf]
        %v382 = vunpack.c.l.bf16 %v381
        %v383 = vld [vmem:[%s375] sm:$0x1]
        %vm384 = vcmp.gt.f32.partialorder %v383, 0.5
        %v385 = vld [vmem:[%s8] sm:$0x3f]
        %v386 = vld [vmem:[%s2] sm:$0xf]
        %v387 = vld [vmem:[%s2 + $0x4] sm:$0xf]
        %v388 = vld [vmem:[%s2 + $0x8] sm:$0xf]
        %v389 = vld [vmem:[%s2 + $0xc] sm:$0xf]
        %v390 = vld [vmem:[%s3] sm:$0x1]
        %v392 = vlaneseq
        %v393 = vshrl.u32 %v392, 7
        %v394 = vsub.s32 0, %v393
        %v395 = vrot.slane %v390, %v394
        %v401 = vunpack.c.l.b16 %v386
        %v402 = vunpack.c.l.b16 %v387
        %v403 = vunpack.c.l.b16 %v388
        %v404 = vunpack.c.l.b16 %v389
        %v405 = vpack.c.b16 %v402, %v401
        %v406 = vpack.c.b16 %v404, %v403
        %vm409 = vcmask 261120
        %v411 = vsel %vm409, %v381, 0
        %413 = vmatprep.subr.bf16.mxu0 0
        %414 = vmatpush1.bf16.msra.mxu0 0
        %415 = vmatprep.subr.bf16.mxu0 0
        %416 = vmatpush1.bf16.msra.mxu0 0
        %417 = vmatprep.subr.bf16.mxu0 0
        %418 = vmatpush1.bf16.msra.mxu0 0
        %419 = vmatprep.subr.bf16.mxu0 0
        %420 = vmatpush1.bf16.msra.mxu0 0
        %421 = vmatprep.subr.bf16.mxu0 0
        %422 = vmatpush1.bf16.msra.mxu0 0
        %423 = vmatprep.subr.bf16.mxu0 0
        %424 = vmatpush1.bf16.msra.mxu0 0
        %425 = vmatprep.subr.bf16.mxu0 0
        %426 = vmatpush1.bf16.msra.mxu0 %v406
        %427 = vmatprep.subr.bf16.mxu0 0
        %428 = vmatpush1.bf16.msra.mxu0 %v405
        %429 = vmatprep.subr.bf16.mxu0 0
        %430 = vmatpush2.bf16.msra.mxu0 0
        %431 = vmatprep.subr.bf16.mxu0 0
        %432 = vmatpush2.bf16.msra.mxu0 0
        %433 = vmatprep.subr.bf16.mxu0 0
        %434 = vmatpush2.bf16.msra.mxu0 0
        %435 = vmatprep.subr.bf16.mxu0 0
        %436 = vmatpush2.bf16.msra.mxu0 0
        %437 = vmatprep.subr.bf16.mxu0 0
        %438 = vmatpush2.bf16.msra.mxu0 0
        %439 = vmatprep.subr.bf16.mxu0 0
        %440 = vmatpush2.bf16.msra.mxu0 0
        %441 = vmatprep.subr.bf16.mxu0 0
        %442 = vmatpush2.bf16.msra.mxu0 0
        %443 = vmatprep.subr.bf16.mxu0 0
        %444 = vmatpush2.bf16.msra.mxu0 0
        %445 = vmatprep.mubr.bf16.mxu0 0
        %446 = vmatmul.mubr.bf16.gmra.mxu0 %v411
        %v447 = vpop.f32.mrf.mxu0
        %v448 = vadd.f32 %v395, %v447
        %v449 = vpop.f32.mrf.mxu0
        %v450 = vpop.f32.mrf.mxu0
        %v451 = vpop.f32.mrf.mxu0
        %452 = vdwg.mxu0
        %v453 = vpack.c.bf16 %v448, %v448
        %455 = vrot.lane.b32.xlu0 %v453, 96
        %v456 = vpop.permute.xlu0 %455
        %vm457 = vcmask 64512
        %v459 = vsel %vm457, %v453, 0
        %v462 = vsel %vm457, %v456, 0
        %464 = vmatprep.subr.bf16.mxu0 0
        %465 = vmatpush1.bf16.xpose.msra.mxu0 0
        %466 = vmatprep.subr.bf16.mxu0 0
        %467 = vmatpush1.bf16.xpose.msra.mxu0 0
        %468 = vmatprep.subr.bf16.mxu0 0
        %469 = vmatpush1.bf16.xpose.msra.mxu0 0
        %470 = vmatprep.subr.bf16.mxu0 0
        %471 = vmatpush1.bf16.xpose.msra.mxu0 0
        %472 = vmatprep.subr.bf16.mxu0 0
        %473 = vmatpush1.bf16.xpose.msra.mxu0 0
        %474 = vmatprep.subr.bf16.mxu0 0
        %475 = vmatpush1.bf16.xpose.msra.mxu0 0
        %476 = vmatprep.subr.bf16.mxu0 0
        %477 = vmatpush1.bf16.xpose.msra.mxu0 0
        %478 = vmatprep.subr.bf16.mxu0 0
        %479 = vmatpush1.bf16.xpose.msra.mxu0 %v462
        %480 = vmatprep.subr.bf16.mxu0 0
        %481 = vmatpush2.bf16.xpose.msra.mxu0 0
        %482 = vmatprep.subr.bf16.mxu0 0
        %483 = vmatpush2.bf16.xpose.msra.mxu0 0
        %484 = vmatprep.subr.bf16.mxu0 0
        %485 = vmatpush2.bf16.xpose.msra.mxu0 0
        %486 = vmatprep.subr.bf16.mxu0 0
        %487 = vmatpush2.bf16.xpose.msra.mxu0 0
        %488 = vmatprep.subr.bf16.mxu0 0
        %489 = vmatpush2.bf16.xpose.msra.mxu0 0
        %490 = vmatprep.subr.bf16.mxu0 0
        %491 = vmatpush2.bf16.xpose.msra.mxu0 0
        %492 = vmatprep.subr.bf16.mxu0 0
        %493 = vmatpush2.bf16.xpose.msra.mxu0 0
        %494 = vmatprep.subr.bf16.mxu0 0
        %495 = vmatpush2.bf16.xpose.msra.mxu0 0
        %496 = vmatprep.mubr.bf16.mxu0 0
        %497 = vmatmul.mubr.bf16.gmra.mxu0 %v459
        %v498 = vpop.f32.mrf.mxu0
        %v499 = vadd.f32 0.0, %v498
        %v500 = vpop.f32.mrf.mxu0
        %v501 = vpop.f32.mrf.mxu0
        %v502 = vpop.f32.mrf.mxu0
        %503 = vdwg.mxu0
        %504 = vrot.lane.b32.xlu0 %v453, 120
        %v505 = vpop.permute.xlu0 %504
        %506 = vrot.lane.b32.xlu0 %v453, 88
        %v507 = vpop.permute.xlu0 %506
        %v509 = vsel %vm457, %v505, 0
        %v512 = vsel %vm457, %v507, 0
        %514 = vmatprep.subr.bf16.mxu0 0
        %515 = vmatpush1.bf16.xpose.msra.mxu0 0
        %516 = vmatprep.subr.bf16.mxu0 0
        %517 = vmatpush1.bf16.xpose.msra.mxu0 0
        %518 = vmatprep.subr.bf16.mxu0 0
        %519 = vmatpush1.bf16.xpose.msra.mxu0 0
        %520 = vmatprep.subr.bf16.mxu0 0
        %521 = vmatpush1.bf16.xpose.msra.mxu0 0
        %522 = vmatprep.subr.bf16.mxu0 0
        %523 = vmatpush1.bf16.xpose.msra.mxu0 0
        %524 = vmatprep.subr.bf16.mxu0 0
        %525 = vmatpush1.bf16.xpose.msra.mxu0 0
        %526 = vmatprep.subr.bf16.mxu0 0
        %527 = vmatpush1.bf16.xpose.msra.mxu0 0
        %528 = vmatprep.subr.bf16.mxu0 0
        %529 = vmatpush1.bf16.xpose.msra.mxu0 %v512
        %530 = vmatprep.subr.bf16.mxu0 0
        %531 = vmatpush2.bf16.xpose.msra.mxu0 0
        %532 = vmatprep.subr.bf16.mxu0 0
        %533 = vmatpush2.bf16.xpose.msra.mxu0 0
        %534 = vmatprep.subr.bf16.mxu0 0
        %535 = vmatpush2.bf16.xpose.msra.mxu0 0
        %536 = vmatprep.subr.bf16.mxu0 0
        %537 = vmatpush2.bf16.xpose.msra.mxu0 0
        %538 = vmatprep.subr.bf16.mxu0 0
        %539 = vmatpush2.bf16.xpose.msra.mxu0 0
        %540 = vmatprep.subr.bf16.mxu0 0
        %541 = vmatpush2.bf16.xpose.msra.mxu0 0
        %542 = vmatprep.subr.bf16.mxu0 0
        %543 = vmatpush2.bf16.xpose.msra.mxu0 0
        %544 = vmatprep.subr.bf16.mxu0 0
        %545 = vmatpush2.bf16.xpose.msra.mxu0 0
        %546 = vmatprep.mubr.bf16.mxu0 0
        %547 = vmatmul.mubr.bf16.gmra.mxu0 %v509
        %v548 = vpop.f32.mrf.mxu0
        %v549 = vadd.f32 0.0, %v548
        %v550 = vpop.f32.mrf.mxu0
        %v551 = vpop.f32.mrf.mxu0
        %v552 = vpop.f32.mrf.mxu0
        %553 = vdwg.mxu0
        %554 = vrot.lane.b32.xlu0 %v453, 112
        %v555 = vpop.permute.xlu0 %554
        %556 = vrot.lane.b32.xlu0 %v453, 80
        %v557 = vpop.permute.xlu0 %556
        %v559 = vsel %vm457, %v555, 0
        %v562 = vsel %vm457, %v557, 0
        %564 = vmatprep.subr.bf16.mxu0 0
        %565 = vmatpush1.bf16.xpose.msra.mxu0 0
        %566 = vmatprep.subr.bf16.mxu0 0
        %567 = vmatpush1.bf16.xpose.msra.mxu0 0
        %568 = vmatprep.subr.bf16.mxu0 0
        %569 = vmatpush1.bf16.xpose.msra.mxu0 0
        %570 = vmatprep.subr.bf16.mxu0 0
        %571 = vmatpush1.bf16.xpose.msra.mxu0 0
        %572 = vmatprep.subr.bf16.mxu0 0
        %573 = vmatpush1.bf16.xpose.msra.mxu0 0
        %574 = vmatprep.subr.bf16.mxu0 0
        %575 = vmatpush1.bf16.xpose.msra.mxu0 0
        %576 = vmatprep.subr.bf16.mxu0 0
        %577 = vmatpush1.bf16.xpose.msra.mxu0 0
        %578 = vmatprep.subr.bf16.mxu0 0
        %579 = vmatpush1.bf16.xpose.msra.mxu0 %v562
        %580 = vmatprep.subr.bf16.mxu0 0
        %581 = vmatpush2.bf16.xpose.msra.mxu0 0
        %582 = vmatprep.subr.bf16.mxu0 0
        %583 = vmatpush2.bf16.xpose.msra.mxu0 0
        %584 = vmatprep.subr.bf16.mxu0 0
        %585 = vmatpush2.bf16.xpose.msra.mxu0 0
        %586 = vmatprep.subr.bf16.mxu0 0
        %587 = vmatpush2.bf16.xpose.msra.mxu0 0
        %588 = vmatprep.subr.bf16.mxu0 0
        %589 = vmatpush2.bf16.xpose.msra.mxu0 0
        %590 = vmatprep.subr.bf16.mxu0 0
        %591 = vmatpush2.bf16.xpose.msra.mxu0 0
        %592 = vmatprep.subr.bf16.mxu0 0
        %593 = vmatpush2.bf16.xpose.msra.mxu0 0
        %594 = vmatprep.subr.bf16.mxu0 0
        %595 = vmatpush2.bf16.xpose.msra.mxu0 0
        %596 = vmatprep.mubr.bf16.mxu0 0
        %597 = vmatmul.mubr.bf16.gmra.mxu0 %v559
        %v598 = vpop.f32.mrf.mxu0
        %v599 = vadd.f32 0.0, %v598
        %v600 = vpop.f32.mrf.mxu0
        %v601 = vpop.f32.mrf.mxu0
        %v602 = vpop.f32.mrf.mxu0
        %603 = vdwg.mxu0
        %604 = vrot.lane.b32.xlu0 %v453, 104
        %v605 = vpop.permute.xlu0 %604
        %606 = vrot.lane.b32.xlu0 %v453, 72
        %v607 = vpop.permute.xlu0 %606
        %v609 = vsel %vm457, %v605, 0
        %v612 = vsel %vm457, %v607, 0
        %614 = vmatprep.subr.bf16.mxu0 0
        %615 = vmatpush1.bf16.xpose.msra.mxu0 0
        %616 = vmatprep.subr.bf16.mxu0 0
        %617 = vmatpush1.bf16.xpose.msra.mxu0 0
        %618 = vmatprep.subr.bf16.mxu0 0
        %619 = vmatpush1.bf16.xpose.msra.mxu0 0
        %620 = vmatprep.subr.bf16.mxu0 0
        %621 = vmatpush1.bf16.xpose.msra.mxu0 0
        %622 = vmatprep.subr.bf16.mxu0 0
        %623 = vmatpush1.bf16.xpose.msra.mxu0 0
        %624 = vmatprep.subr.bf16.mxu0 0
        %625 = vmatpush1.bf16.xpose.msra.mxu0 0
        %626 = vmatprep.subr.bf16.mxu0 0
        %627 = vmatpush1.bf16.xpose.msra.mxu0 0
        %628 = vmatprep.subr.bf16.mxu0 0
        %629 = vmatpush1.bf16.xpose.msra.mxu0 %v612
        %630 = vmatprep.subr.bf16.mxu0 0
        %631 = vmatpush2.bf16.xpose.msra.mxu0 0
        %632 = vmatprep.subr.bf16.mxu0 0
        %633 = vmatpush2.bf16.xpose.msra.mxu0 0
        %634 = vmatprep.subr.bf16.mxu0 0
        %635 = vmatpush2.bf16.xpose.msra.mxu0 0
        %636 = vmatprep.subr.bf16.mxu0 0
        %637 = vmatpush2.bf16.xpose.msra.mxu0 0
        %638 = vmatprep.subr.bf16.mxu0 0
        %639 = vmatpush2.bf16.xpose.msra.mxu0 0
        %640 = vmatprep.subr.bf16.mxu0 0
        %641 = vmatpush2.bf16.xpose.msra.mxu0 0
        %642 = vmatprep.subr.bf16.mxu0 0
        %643 = vmatpush2.bf16.xpose.msra.mxu0 0
        %644 = vmatprep.subr.bf16.mxu0 0
        %645 = vmatpush2.bf16.xpose.msra.mxu0 0
        %646 = vmatprep.mubr.bf16.mxu0 0
        %647 = vmatmul.mubr.bf16.gmra.mxu0 %v609
        %v648 = vpop.f32.mrf.mxu0
        %v649 = vadd.f32 0.0, %v648
        %v650 = vpop.f32.mrf.mxu0
        %v651 = vpop.f32.mrf.mxu0
        %v652 = vpop.f32.mrf.mxu0
        %653 = vdwg.mxu0
        %v654 = vmul.f32 %v499, 0.35355338
        %v655 = vmul.f32 %v549, 0.35355338
        %v656 = vmul.f32 %v599, 0.35355338
        %v657 = vmul.f32 %v649, 0.35355338
        %v658 = vsel %vm384, 1, 0
        %v659 = vlaneseq
        %v660 = vshrl.u32 %v659, 7
        %v661 = vsub.s32 0, %v660
        %v662 = vrot.slane %v658, %v661
        %vm663 = vcmp.eq.s32.totalorder %v662, 1
        %v664 = vsel %vm663, -1e+30, %v654
        %v665 = vsel %vm663, -1e+30, %v655
        %v666 = vsel %vm663, -1e+30, %v656
        %v667 = vsel %vm663, -1e+30, %v657
        %v668 = vsel %vm457, %v664, -inf
        %669 = vmax.xlane.f32.xlu0 %v668
        %v670 = vpop.xlane.xlu0 %669
        %v671 = vsel %vm457, %v665, -inf
        %672 = vmax.xlane.f32.xlu0 %v671
        %v673 = vpop.xlane.xlu0 %672
        %v674 = vsel %vm457, %v666, -inf
        %675 = vmax.xlane.f32.xlu0 %v674
        %v676 = vpop.xlane.xlu0 %675
        %v677 = vsel %vm457, %v667, -inf
        %678 = vmax.xlane.f32.xlu0 %v677
        %v679 = vpop.xlane.xlu0 %678
        %v680 = vsub.f32 %v664, %v670
        %v681 = vsub.f32 %v665, %v673
        %v682 = vsub.f32 %v666, %v676
        %v683 = vsub.f32 %v667, %v679
        %v684 = vmul.f32 %v680, 1.442695
        %v685 = vpow.pop %v684
        %v686 = vmul.f32 %v681, 1.442695
        %v687 = vpow.pop %v686
        %v688 = vmul.f32 %v682, 1.442695
        %v689 = vpow.pop %v688
        %v690 = vmul.f32 %v683, 1.442695
        %v691 = vpow.pop %v690
        %v692 = vsel %vm457, %v685, 0.0
        %693 = vadd.xlane.f32.xlu0 %v692
        %v694 = vpop.xlane.xlu0 %693
        %v695 = vsel %vm457, %v687, 0.0
        %696 = vadd.xlane.f32.xlu0 %v695
        %v697 = vpop.xlane.xlu0 %696
        %v698 = vsel %vm457, %v689, 0.0
        %699 = vadd.xlane.f32.xlu0 %v698
        %v700 = vpop.xlane.xlu0 %699
        %v701 = vsel %vm457, %v691, 0.0
        %702 = vadd.xlane.f32.xlu0 %v701
        %v703 = vpop.xlane.xlu0 %702
        %v704 = vrcp.pop %v694
        %v705 = vmul.f32 %v685, %v704
        %v706 = vrcp.pop %v697
        %v707 = vmul.f32 %v687, %v706
        %v708 = vrcp.pop %v700
        %v709 = vmul.f32 %v689, %v708
        %v710 = vrcp.pop %v703
        %v711 = vmul.f32 %v691, %v710
        %v712 = vpack.c.bf16 %v705, %v705
        %v713 = vpack.c.bf16 %v707, %v707
        %v714 = vpack.c.bf16 %v709, %v709
        %v715 = vpack.c.bf16 %v711, %v711
        %vm716 = vcmask 60416
        %717 = vst.msk [vmem:[%s368] sm:$0xf] %vm716, %v712
        %718 = vst.msk [vmem:[%s368 + $0x4] sm:$0xf] %vm716, %v713
        %719 = vst.msk [vmem:[%s368 + $0x8] sm:$0xf] %vm716, %v714
        %720 = vst.msk [vmem:[%s368 + $0xc] sm:$0xf] %vm716, %v715
        %721 = vrot.lane.b32.xlu0 %v453, 64
        %v722 = vpop.permute.xlu0 %721
        %v724 = vsel %vm457, %v712, 0
        %vm726 = vcmask 1043456
        %v728 = vsel %vm726, %v722, 0
        %730 = vmatprep.subr.bf16.mxu0 0
        %731 = vmatpush1.bf16.msra.mxu0 0
        %732 = vmatprep.subr.bf16.mxu0 0
        %733 = vmatpush1.bf16.msra.mxu0 0
        %734 = vmatprep.subr.bf16.mxu0 0
        %735 = vmatpush1.bf16.msra.mxu0 0
        %736 = vmatprep.subr.bf16.mxu0 0
        %737 = vmatpush1.bf16.msra.mxu0 0
        %738 = vmatprep.subr.bf16.mxu0 0
        %739 = vmatpush1.bf16.msra.mxu0 0
        %740 = vmatprep.subr.bf16.mxu0 0
        %741 = vmatpush1.bf16.msra.mxu0 0
        %742 = vmatprep.subr.bf16.mxu0 0
        %743 = vmatpush1.bf16.msra.mxu0 0
        %744 = vmatprep.subr.bf16.mxu0 0
        %745 = vmatpush1.bf16.msra.mxu0 %v728
        %746 = vmatprep.subr.bf16.mxu0 0
        %747 = vmatpush2.bf16.msra.mxu0 0
        %748 = vmatprep.subr.bf16.mxu0 0
        %749 = vmatpush2.bf16.msra.mxu0 0
        %750 = vmatprep.subr.bf16.mxu0 0
        %751 = vmatpush2.bf16.msra.mxu0 0
        %752 = vmatprep.subr.bf16.mxu0 0
        %753 = vmatpush2.bf16.msra.mxu0 0
        %754 = vmatprep.subr.bf16.mxu0 0
        %755 = vmatpush2.bf16.msra.mxu0 0
        %756 = vmatprep.subr.bf16.mxu0 0
        %757 = vmatpush2.bf16.msra.mxu0 0
        %758 = vmatprep.subr.bf16.mxu0 0
        %759 = vmatpush2.bf16.msra.mxu0 0
        %760 = vmatprep.subr.bf16.mxu0 0
        %761 = vmatpush2.bf16.msra.mxu0 0
        %762 = vmatprep.mubr.bf16.mxu0 0
        %763 = vmatmul.mubr.bf16.gmra.mxu0 %v724
        %v764 = vpop.f32.mrf.mxu0
        %v765 = vadd.f32 0.0, %v764
        %v766 = vpop.f32.mrf.mxu0
        %v767 = vpop.f32.mrf.mxu0
        %v768 = vpop.f32.mrf.mxu0
        %769 = vdwg.mxu0
        %770 = vst.msk [vmem:[#allocation2] sm:$0xff] %vm457, %v765
        %771 = vrot.lane.b32.xlu0 %v453, 56
        %v772 = vpop.permute.xlu0 %771
        %v774 = vsel %vm457, %v713, 0
        %v777 = vsel %vm726, %v772, 0
        %779 = vmatprep.subr.bf16.mxu0 0
        %780 = vmatpush1.bf16.msra.mxu0 0
        %781 = vmatprep.subr.bf16.mxu0 0
        %782 = vmatpush1.bf16.msra.mxu0 0
        %783 = vmatprep.subr.bf16.mxu0 0
        %784 = vmatpush1.bf16.msra.mxu0 0
        %785 = vmatprep.subr.bf16.mxu0 0
        %786 = vmatpush1.bf16.msra.mxu0 0
        %787 = vmatprep.subr.bf16.mxu0 0
        %788 = vmatpush1.bf16.msra.mxu0 0
        %789 = vmatprep.subr.bf16.mxu0 0
        %790 = vmatpush1.bf16.msra.mxu0 0
        %791 = vmatprep.subr.bf16.mxu0 0
        %792 = vmatpush1.bf16.msra.mxu0 0
        %793 = vmatprep.subr.bf16.mxu0 0
        %794 = vmatpush1.bf16.msra.mxu0 %v777
        %795 = vmatprep.subr.bf16.mxu0 0
        %796 = vmatpush2.bf16.msra.mxu0 0
        %797 = vmatprep.subr.bf16.mxu0 0
        %798 = vmatpush2.bf16.msra.mxu0 0
        %799 = vmatprep.subr.bf16.mxu0 0
        %800 = vmatpush2.bf16.msra.mxu0 0
        %801 = vmatprep.subr.bf16.mxu0 0
        %802 = vmatpush2.bf16.msra.mxu0 0
        %803 = vmatprep.subr.bf16.mxu0 0
        %804 = vmatpush2.bf16.msra.mxu0 0
        %805 = vmatprep.subr.bf16.mxu0 0
        %806 = vmatpush2.bf16.msra.mxu0 0
        %807 = vmatprep.subr.bf16.mxu0 0
        %808 = vmatpush2.bf16.msra.mxu0 0
        %809 = vmatprep.subr.bf16.mxu0 0
        %810 = vmatpush2.bf16.msra.mxu0 0
        %811 = vmatprep.mubr.bf16.mxu0 0
        %812 = vmatmul.mubr.bf16.gmra.mxu0 %v774
        %v813 = vpop.f32.mrf.mxu0
        %v814 = vadd.f32 0.0, %v813
        %v815 = vpop.f32.mrf.mxu0
        %v816 = vpop.f32.mrf.mxu0
        %v817 = vpop.f32.mrf.mxu0
        %818 = vdwg.mxu0
        %820 = vrot.lane.b32.xlu0 %v814, 8
        %v821 = vpop.permute.xlu0 %820
        %vm823 = vcmask 130112
        %824 = vst.msk [vmem:[#allocation2] sm:$0xff] %vm823, %v821
        %825 = vrot.lane.b32.xlu0 %v453, 48
        %v826 = vpop.permute.xlu0 %825
        %v828 = vsel %vm457, %v714, 0
        %v831 = vsel %vm726, %v826, 0
        %833 = vmatprep.subr.bf16.mxu0 0
        %834 = vmatpush1.bf16.msra.mxu0 0
        %835 = vmatprep.subr.bf16.mxu0 0
        %836 = vmatpush1.bf16.msra.mxu0 0
        %837 = vmatprep.subr.bf16.mxu0 0
        %838 = vmatpush1.bf16.msra.mxu0 0
        %839 = vmatprep.subr.bf16.mxu0 0
        %840 = vmatpush1.bf16.msra.mxu0 0
        %841 = vmatprep.subr.bf16.mxu0 0
        %842 = vmatpush1.bf16.msra.mxu0 0
        %843 = vmatprep.subr.bf16.mxu0 0
        %844 = vmatpush1.bf16.msra.mxu0 0
        %845 = vmatprep.subr.bf16.mxu0 0
        %846 = vmatpush1.bf16.msra.mxu0 0
        %847 = vmatprep.subr.bf16.mxu0 0
        %848 = vmatpush1.bf16.msra.mxu0 %v831
        %849 = vmatprep.subr.bf16.mxu0 0
        %850 = vmatpush2.bf16.msra.mxu0 0
        %851 = vmatprep.subr.bf16.mxu0 0
        %852 = vmatpush2.bf16.msra.mxu0 0
        %853 = vmatprep.subr.bf16.mxu0 0
        %854 = vmatpush2.bf16.msra.mxu0 0
        %855 = vmatprep.subr.bf16.mxu0 0
        %856 = vmatpush2.bf16.msra.mxu0 0
        %857 = vmatprep.subr.bf16.mxu0 0
        %858 = vmatpush2.bf16.msra.mxu0 0
        %859 = vmatprep.subr.bf16.mxu0 0
        %860 = vmatpush2.bf16.msra.mxu0 0
        %861 = vmatprep.subr.bf16.mxu0 0
        %862 = vmatpush2.bf16.msra.mxu0 0
        %863 = vmatprep.subr.bf16.mxu0 0
        %864 = vmatpush2.bf16.msra.mxu0 0
        %865 = vmatprep.mubr.bf16.mxu0 0
        %866 = vmatmul.mubr.bf16.gmra.mxu0 %v828
        %v867 = vpop.f32.mrf.mxu0
        %v868 = vadd.f32 0.0, %v867
        %v869 = vpop.f32.mrf.mxu0
        %v870 = vpop.f32.mrf.mxu0
        %v871 = vpop.f32.mrf.mxu0
        %872 = vdwg.mxu0
        %874 = vrot.lane.b32.xlu0 %v868, 16
        %v875 = vpop.permute.xlu0 %874
        %vm877 = vcmask 195712
        %878 = vst.msk [vmem:[#allocation2] sm:$0xff] %vm877, %v875
        %879 = vrot.lane.b32.xlu0 %v453, 40
        %v880 = vpop.permute.xlu0 %879
        %v882 = vsel %vm457, %v715, 0
        %v885 = vsel %vm726, %v880, 0
        %887 = vmatprep.subr.bf16.mxu0 0
        %888 = vmatpush1.bf16.msra.mxu0 0
        %889 = vmatprep.subr.bf16.mxu0 0
        %890 = vmatpush1.bf16.msra.mxu0 0
        %891 = vmatprep.subr.bf16.mxu0 0
        %892 = vmatpush1.bf16.msra.mxu0 0
        %893 = vmatprep.subr.bf16.mxu0 0
        %894 = vmatpush1.bf16.msra.mxu0 0
        %895 = vmatprep.subr.bf16.mxu0 0
        %896 = vmatpush1.bf16.msra.mxu0 0
        %897 = vmatprep.subr.bf16.mxu0 0
        %898 = vmatpush1.bf16.msra.mxu0 0
        %899 = vmatprep.subr.bf16.mxu0 0
        %900 = vmatpush1.bf16.msra.mxu0 0
        %901 = vmatprep.subr.bf16.mxu0 0
        %902 = vmatpush1.bf16.msra.mxu0 %v885
        %903 = vmatprep.subr.bf16.mxu0 0
        %904 = vmatpush2.bf16.msra.mxu0 0
        %905 = vmatprep.subr.bf16.mxu0 0
        %906 = vmatpush2.bf16.msra.mxu0 0
        %907 = vmatprep.subr.bf16.mxu0 0
        %908 = vmatpush2.bf16.msra.mxu0 0
        %909 = vmatprep.subr.bf16.mxu0 0
        %910 = vmatpush2.bf16.msra.mxu0 0
        %911 = vmatprep.subr.bf16.mxu0 0
        %912 = vmatpush2.bf16.msra.mxu0 0
        %913 = vmatprep.subr.bf16.mxu0 0
        %914 = vmatpush2.bf16.msra.mxu0 0
        %915 = vmatprep.subr.bf16.mxu0 0
        %916 = vmatpush2.bf16.msra.mxu0 0
        %917 = vmatprep.subr.bf16.mxu0 0
        %918 = vmatpush2.bf16.msra.mxu0 0
        %919 = vmatprep.mubr.bf16.mxu0 0
        %920 = vmatmul.mubr.bf16.gmra.mxu0 %v882
        %v921 = vpop.f32.mrf.mxu0
        %v922 = vadd.f32 0.0, %v921
        %v923 = vpop.f32.mrf.mxu0
        %v924 = vpop.f32.mrf.mxu0
        %v925 = vpop.f32.mrf.mxu0
        %926 = vdwg.mxu0
        %928 = vrot.lane.b32.xlu0 %v922, 24
        %v929 = vpop.permute.xlu0 %928
        %vm931 = vcmask 261312
        %932 = vst.msk [vmem:[#allocation2] sm:$0xff] %vm931, %v929
        %v933 = vld [vmem:[#allocation2] sm:$0xff]
        %v934 = vpack.c.bf16 %v933, %v933
        %v935 = vld [vmem:[%s4] sm:$0xf]
        %v936 = vld [vmem:[%s4 + $0x4] sm:$0xf]
        %v937 = vld [vmem:[%s4 + $0x8] sm:$0xf]
        %v938 = vld [vmem:[%s4 + $0xc] sm:$0xf]
        %v939 = vlaneseq
        %v940 = vshrl.u32 %v939, 7
        %v941 = vsub.s32 0, %v940
        %v942 = vrot.slane %v385, %v941
        %v947 = vunpack.c.l.b16 %v935
        %v948 = vunpack.c.l.b16 %v936
        %v949 = vunpack.c.l.b16 %v937
        %v950 = vunpack.c.l.b16 %v938
        %v951 = vpack.c.b16 %v948, %v947
        %v952 = vpack.c.b16 %v950, %v949
        %v956 = vsel %vm409, %v934, 0
        %958 = vmatprep.subr.bf16.mxu0 0
        %959 = vmatpush1.bf16.msra.mxu0 0
        %960 = vmatprep.subr.bf16.mxu0 0
        %961 = vmatpush1.bf16.msra.mxu0 0
        %962 = vmatprep.subr.bf16.mxu0 0
        %963 = vmatpush1.bf16.msra.mxu0 0
        %964 = vmatprep.subr.bf16.mxu0 0
        %965 = vmatpush1.bf16.msra.mxu0 0
        %966 = vmatprep.subr.bf16.mxu0 0
        %967 = vmatpush1.bf16.msra.mxu0 0
        %968 = vmatprep.subr.bf16.mxu0 0
        %969 = vmatpush1.bf16.msra.mxu0 0
        %970 = vmatprep.subr.bf16.mxu0 0
        %971 = vmatpush1.bf16.msra.mxu0 %v952
        %972 = vmatprep.subr.bf16.mxu0 0
        %973 = vmatpush1.bf16.msra.mxu0 %v951
        %974 = vmatprep.subr.bf16.mxu0 0
        %975 = vmatpush2.bf16.msra.mxu0 0
        %976 = vmatprep.subr.bf16.mxu0 0
        %977 = vmatpush2.bf16.msra.mxu0 0
        %978 = vmatprep.subr.bf16.mxu0 0
        %979 = vmatpush2.bf16.msra.mxu0 0
        %980 = vmatprep.subr.bf16.mxu0 0
        %981 = vmatpush2.bf16.msra.mxu0 0
        %982 = vmatprep.subr.bf16.mxu0 0
        %983 = vmatpush2.bf16.msra.mxu0 0
        %984 = vmatprep.subr.bf16.mxu0 0
        %985 = vmatpush2.bf16.msra.mxu0 0
        %986 = vmatprep.subr.bf16.mxu0 0
        %987 = vmatpush2.bf16.msra.mxu0 0
        %988 = vmatprep.subr.bf16.mxu0 0
        %989 = vmatpush2.bf16.msra.mxu0 0
        %990 = vmatprep.mubr.bf16.mxu0 0
        %991 = vmatmul.mubr.bf16.gmra.mxu0 %v956
        %v992 = vpop.f32.mrf.mxu0
        %v993 = vadd.f32 %v942, %v992
        %v994 = vpop.f32.mrf.mxu0
        %v995 = vpop.f32.mrf.mxu0
        %v996 = vpop.f32.mrf.mxu0
        %997 = vdwg.mxu0
        %v998 = vadd.f32 %v993, %v382
        %v999 = vsel %vm409, %v998, 0.0
        %1000 = vadd.xlane.f32.xlu0 %v999
        %v1001 = vpop.xlane.xlu0 %1000
        %v1002 = vrcp.pop 32.0
        %v1003 = vmul.f32 %v1001, %v1002
        %v1004 = vsub.f32 %v998, %v1003
        %v1005 = vmul.f32 %v1004, %v1004
        %v1006 = vsel %vm409, %v1005, 0.0
        %1007 = vadd.xlane.f32.xlu0 %v1006
        %v1008 = vpop.xlane.xlu0 %1007
        %v1009 = vmul.f32 %v1008, %v1002
        %v1010 = vadd.f32 %v1009, 1e-05
        %v1011 = vrsqrt.pop %v1010
        %v1012 = vmul.f32 %v1004, %v1011
        %v1013 = vlaneseq
        %v1014 = vshrl.u32 %v1013, 7
        %v1015 = vsub.s32 1, %v1014
        %v1016 = vrot.slane %v385, %v1015
        %v1017 = vmul.f32 %v1012, %v1016
        %v1018 = vlaneseq
        %v1019 = vshrl.u32 %v1018, 7
        %v1020 = vsub.s32 2, %v1019
        %v1021 = vrot.slane %v385, %v1020
        %v1022 = vadd.f32 %v1017, %v1021
        %v1023 = vpack.c.bf16 %v1022, %v1022
        %v1024 = vld [vmem:[%s5] sm:$0xf]
        %v1025 = vld [vmem:[%s5 + $0x4] sm:$0xf]
        %v1026 = vld [vmem:[%s5 + $0x8] sm:$0xf]
        %v1027 = vld [vmem:[%s5 + $0xc] sm:$0xf]
        %v1028 = vld [vmem:[%s6] sm:$0x1]
        %v1030 = vlaneseq
        %v1031 = vshrl.u32 %v1030, 7
        %v1032 = vsub.s32 0, %v1031
        %v1033 = vrot.slane %v1028, %v1032
        %v1039 = vunpack.c.l.b16 %v1024
        %v1040 = vunpack.c.l.b16 %v1025
        %v1041 = vunpack.c.l.b16 %v1026
        %v1042 = vunpack.c.l.b16 %v1027
        %v1043 = vpack.c.b16 %v1040, %v1039
        %v1044 = vpack.c.b16 %v1042, %v1041
        %v1048 = vsel %vm409, %v1023, 0
        %1050 = vmatprep.subr.bf16.mxu0 0
        %1051 = vmatpush1.bf16.msra.mxu0 0
        %1052 = vmatprep.subr.bf16.mxu0 0
        %1053 = vmatpush1.bf16.msra.mxu0 0
        %1054 = vmatprep.subr.bf16.mxu0 0
        %1055 = vmatpush1.bf16.msra.mxu0 0
        %1056 = vmatprep.subr.bf16.mxu0 0
        %1057 = vmatpush1.bf16.msra.mxu0 0
        %1058 = vmatprep.subr.bf16.mxu0 0
        %1059 = vmatpush1.bf16.msra.mxu0 0
        %1060 = vmatprep.subr.bf16.mxu0 0
        %1061 = vmatpush1.bf16.msra.mxu0 0
        %1062 = vmatprep.subr.bf16.mxu0 0
        %1063 = vmatpush1.bf16.msra.mxu0 %v1044
        %1064 = vmatprep.subr.bf16.mxu0 0
        %1065 = vmatpush1.bf16.msra.mxu0 %v1043
        %1066 = vmatprep.subr.bf16.mxu0 0
        %1067 = vmatpush2.bf16.msra.mxu0 0
        %1068 = vmatprep.subr.bf16.mxu0 0
        %1069 = vmatpush2.bf16.msra.mxu0 0
        %1070 = vmatprep.subr.bf16.mxu0 0
        %1071 = vmatpush2.bf16.msra.mxu0 0
        %1072 = vmatprep.subr.bf16.mxu0 0
        %1073 = vmatpush2.bf16.msra.mxu0 0
        %1074 = vmatprep.subr.bf16.mxu0 0
        %1075 = vmatpush2.bf16.msra.mxu0 0
        %1076 = vmatprep.subr.bf16.mxu0 0
        %1077 = vmatpush2.bf16.msra.mxu0 0
        %1078 = vmatprep.subr.bf16.mxu0 0
        %1079 = vmatpush2.bf16.msra.mxu0 0
        %1080 = vmatprep.subr.bf16.mxu0 0
        %1081 = vmatpush2.bf16.msra.mxu0 0
        %1082 = vmatprep.mubr.bf16.mxu0 0
        %1083 = vmatmul.mubr.bf16.gmra.mxu0 %v1048
        %v1084 = vpop.f32.mrf.mxu0
        %v1085 = vadd.f32 %v1033, %v1084
        %v1086 = vpop.f32.mrf.mxu0
        %v1087 = vpop.f32.mrf.mxu0
        %v1088 = vpop.f32.mrf.mxu0
        %1089 = vdwg.mxu0
        %v1090 = vmax.f32 %v1085, 0.0
        %v1091 = vpack.c.bf16 %v1090, %v1090
        %v1092 = vld [vmem:[%s7] sm:$0xf]
        %v1093 = vld [vmem:[%s7 + $0x4] sm:$0xf]
        %v1094 = vld [vmem:[%s7 + $0x8] sm:$0xf]
        %v1095 = vld [vmem:[%s7 + $0xc] sm:$0xf]
        %v1096 = vld [vmem:[%s7 + $0x10] sm:$0xf]
        %v1097 = vld [vmem:[%s7 + $0x14] sm:$0xf]
        %v1098 = vld [vmem:[%s7 + $0x18] sm:$0xf]
        %v1099 = vld [vmem:[%s7 + $0x1c] sm:$0xf]
        %v1100 = vlaneseq
        %v1101 = vshrl.u32 %v1100, 7
        %v1102 = vsub.s32 3, %v1101
        %v1103 = vrot.slane %v385, %v1102
        %v1112 = vunpack.c.l.b16 %v1092
        %v1113 = vunpack.c.l.b16 %v1093
        %v1114 = vunpack.c.l.b16 %v1094
        %v1115 = vunpack.c.l.b16 %v1095
        %v1116 = vunpack.c.l.b16 %v1096
        %v1117 = vunpack.c.l.b16 %v1097
        %v1118 = vunpack.c.l.b16 %v1098
        %v1119 = vunpack.c.l.b16 %v1099
        %v1120 = vpack.c.b16 %v1113, %v1112
        %v1121 = vpack.c.b16 %v1115, %v1114
        %v1122 = vpack.c.b16 %v1117, %v1116
        %v1123 = vpack.c.b16 %v1119, %v1118
        %vm1128 = vcmask 523264
        %v1130 = vsel %vm1128, %v1091, 0
        %1132 = vmatprep.subr.bf16.mxu0 0
        %1133 = vmatpush1.bf16.msra.mxu0 0
        %1134 = vmatprep.subr.bf16.mxu0 0
        %1135 = vmatpush1.bf16.msra.mxu0 0
        %1136 = vmatprep.subr.bf16.mxu0 0
        %1137 = vmatpush1.bf16.msra.mxu0 0
        %1138 = vmatprep.subr.bf16.mxu0 0
        %1139 = vmatpush1.bf16.msra.mxu0 0
        %1140 = vmatprep.subr.bf16.mxu0 0
        %1141 = vmatpush1.bf16.msra.mxu0 %v1123
        %1142 = vmatprep.subr.bf16.mxu0 0
        %1143 = vmatpush1.bf16.msra.mxu0 %v1122
        %1144 = vmatprep.subr.bf16.mxu0 0
        %1145 = vmatpush1.bf16.msra.mxu0 %v1121
        %1146 = vmatprep.subr.bf16.mxu0 0
        %1147 = vmatpush1.bf16.msra.mxu0 %v1120
        %1148 = vmatprep.subr.bf16.mxu0 0
        %1149 = vmatpush2.bf16.msra.mxu0 0
        %1150 = vmatprep.subr.bf16.mxu0 0
        %1151 = vmatpush2.bf16.msra.mxu0 0
        %1152 = vmatprep.subr.bf16.mxu0 0
        %1153 = vmatpush2.bf16.msra.mxu0 0
        %1154 = vmatprep.subr.bf16.mxu0 0
        %1155 = vmatpush2.bf16.msra.mxu0 0
        %1156 = vmatprep.subr.bf16.mxu0 0
        %1157 = vmatpush2.bf16.msra.mxu0 0
        %1158 = vmatprep.subr.bf16.mxu0 0
        %1159 = vmatpush2.bf16.msra.mxu0 0
        %1160 = vmatprep.subr.bf16.mxu0 0
        %1161 = vmatpush2.bf16.msra.mxu0 0
        %1162 = vmatprep.subr.bf16.mxu0 0
        %1163 = vmatpush2.bf16.msra.mxu0 0
        %1164 = vmatprep.mubr.bf16.mxu0 0
        %1165 = vmatmul.mubr.bf16.gmra.mxu0 %v1130
        %v1166 = vpop.f32.mrf.mxu0
        %v1167 = vadd.f32 %v1103, %v1166
        %v1168 = vpop.f32.mrf.mxu0
        %v1169 = vpop.f32.mrf.mxu0
        %v1170 = vpop.f32.mrf.mxu0
        %1171 = vdwg.mxu0
        %v1172 = vadd.f32 %v1167, %v1022
        %v1173 = vsel %vm409, %v1172, 0.0
        %1174 = vadd.xlane.f32.xlu0 %v1173
        %v1175 = vpop.xlane.xlu0 %1174
        %v1176 = vmul.f32 %v1175, %v1002
        %v1177 = vsub.f32 %v1172, %v1176
        %v1178 = vmul.f32 %v1177, %v1177
        %v1179 = vsel %vm409, %v1178, 0.0
        %1180 = vadd.xlane.f32.xlu0 %v1179
        %v1181 = vpop.xlane.xlu0 %1180
        %v1182 = vmul.f32 %v1181, %v1002
        %v1183 = vadd.f32 %v1182, 1e-05
        %v1184 = vrsqrt.pop %v1183
        %v1185 = vmul.f32 %v1177, %v1184
        %v1186 = vlaneseq
        %v1187 = vshrl.u32 %v1186, 7
        %v1188 = vsub.s32 4, %v1187
        %v1189 = vrot.slane %v385, %v1188
        %v1190 = vmul.f32 %v1185, %v1189
        %v1191 = vlaneseq
        %v1192 = vshrl.u32 %v1191, 7
        %v1193 = vsub.s32 5, %v1192
        %v1194 = vrot.slane %v385, %v1193
        %v1195 = vadd.f32 %v1190, %v1194
        %v1196 = vpack.c.bf16 %v1195, %v1195
        %vm1197 = vcmask 257024
        %1198 = vst.msk [vmem:[%s379] sm:$0xf] %vm1197, %v1196
        %p1199 = scmp.lt.s32.totalorder %s25, 1
        %s1200 = scalar_select %p1199, %s25, 1
        %s1201 = smul.addr %s1200, 4
        %s1202 = scalar_lea.vmem %s9, %s1201
        %s1203 = sand.u32 %s258, 1
        %s1204 = scalar_lea.sflag [#allocation4], %s1203
        %s1205 = sand.u32 %s258, 1
        %s1206 = smul.addr %s1205, 16
        %s1207 = scalar_lea.vmem [#allocation3], %s1206
        // Predicated region
        $region57: #{transformer_forward.5} parent=55 // pred_check
          %p1208 = pneg %p242
        $region58: #{transformer_forward.5} parent=55 // pred_check_branch
          %1210 = sbr.rel (%p1208) target = $region60
        $region59: #{transformer_forward.5} parent=55 // pred_region
          _
        $region60: #{transformer_forward.5} parent=55 // pred_fallthru
          _
        // Predicated region
        $region61: #{transformer_forward.5} parent=55 // pred_check
          %p1211 = pneg %p268
        $region62: #{transformer_forward.5} parent=55 // pred_check_branch
          %1213 = sbr.rel (%p1211) target = $region64
        $region63: #{transformer_forward.5} parent=55 // pred_region
          %s1215 = ssub.s32 256, 256
          %1216 = vsyncadd %s1204, %s1215
          %s1217 = smul.addr %s25, 4
          %s1218 = smul.addr %s1217, 64
          %s1219 = scalar_lea.hbm %s10, %s1218
          %s1220 = sshll.u32 %s1207, 4
          %s1221 = int_to_ptr.vmem [resolvable:$true] %s1220
          %1226 = dma.vmem_to_hbm [thread:$0]  %s1221, 256, %s1219, %s1204, 64, 64, 4
        $region64: #{transformer_forward.5} parent=55 // pred_fallthru
          _
      $region56: #{transformer_forward.5} parent=5 // pred_fallthru
        _
      %p1227 = scmp.le.s32.totalorder 2, %s20
      // Predicated region
      $region65: #{transformer_forward.5} parent=5 // pred_check
        %p1228 = pneg %p1227
      $region66: #{transformer_forward.5} parent=5 // pred_check_branch
        %1230 = sbr.rel (%p1228) target = $region68
      $region67: #{transformer_forward.5} parent=5 // pred_region
        %s1231 = ssub.s32 %s20, 2
        // Predicated region
        $region69: #{transformer_forward.5} parent=67 // pred_check
          %p1232 = pneg %p248
        $region70: #{transformer_forward.5} parent=67 // pred_check_branch
          %1234 = sbr.rel (%p1232) target = $region72
        $region71: #{transformer_forward.5} parent=67 // pred_region
          %p1235 = scmp.lt.s32.totalorder %s26, 1
          %s1236 = scalar_select %p1235, %s26, 1
          %s1237 = smul.addr %s1236, 4
          %s1238 = scalar_lea.vmem %s9, %s1237
        $region72: #{transformer_forward.5} parent=67 // pred_fallthru
          _
        // Predicated region
        $region73: #{transformer_forward.5} parent=67 // pred_check
          %p1239 = pneg %p274
        $region74: #{transformer_forward.5} parent=67 // pred_check_branch
          %1241 = sbr.rel (%p1239) target = $region76
        $region75: #{transformer_forward.5} parent=67 // pred_region
          %s1242 = sand.u32 %s259, 1
          %s1243 = scalar_lea.sflag [#allocation4], %s1242
          %s1244 = sand.u32 %s259, 1
          %s1245 = smul.addr %s1244, 16
          %s1246 = scalar_lea.vmem [#allocation3], %s1245
          %1247 = dma.done %s1243, 256
        $region76: #{transformer_forward.5} parent=67 // pred_fallthru
          _
      $region68: #{transformer_forward.5} parent=5 // pred_fallthru
        _
    $region6: #{transformer_forward.5} parent=1 // loop_footer
      %s24 = sadd.s32 1, %s20
    $region7: #{transformer_forward.5} parent=1 // loop_footer_branch
      %19 = sbr.rel target = $region3
    $region8: #{transformer_forward.5} parent=1 // loop_exit
      _
    %1248 = vsyncpa [#allocation4], 1
    %s1249 = scalar_lea.sflag [#allocation4], 1
    %1250 = vsyncpa %s1249, 1

// kernel: transformer_forward.7
$region0: #{transformer_forward.7}
  #allocation0 [shape = 'u32[]', space=smem, size = 0x4, offset = 0x4, fixed_abs, tag = 'smem constant byte address 0x4 - core index']
  #allocation1 [shape = 'u32[144,128]{1,0:T(1,128)}', space=vmem, size = 0x12000, scoped, tag = 'internal scratch']
  #allocation2 [shape = 'f32[8,32]{1,0:T(8,128)}', space=vmem, size = 0x1000, scoped, tag = 'scratch operand']
  %s0 = inlined_call_operand.vmem [shape: bf16[2,8,32], index: 0, kind: input, shape index: {}]
  %s1 = inlined_call_operand.vmem [shape: bf16[2,8,32], index: 1, kind: input, shape index: {}]
  %s2 = inlined_call_operand.vmem [shape: f32[2,1,8], index: 2, kind: input, shape index: {}]
  %s3 = inlined_call_operand.vmem [shape: f32[2,1,8], index: 3, kind: input, shape index: {}]
  %s4 = inlined_call_operand.vmem [shape: bf16[32,96], index: 4, kind: input, shape index: {}]
  %s5 = inlined_call_operand.vmem [shape: f32[1,96], index: 5, kind: input, shape index: {}]
  %s6 = inlined_call_operand.vmem [shape: bf16[32,32], index: 6, kind: input, shape index: {}]
  %s7 = inlined_call_operand.vmem [shape: bf16[32,32], index: 7, kind: input, shape index: {}]
  %s8 = inlined_call_operand.vmem [shape: bf16[32,64], index: 8, kind: input, shape index: {}]
  %s9 = inlined_call_operand.vmem [shape: f32[1,64], index: 9, kind: input, shape index: {}]
  %s10 = inlined_call_operand.vmem [shape: bf16[32,32], index: 10, kind: input, shape index: {}]
  %s11 = inlined_call_operand.vmem [shape: bf16[32,64], index: 11, kind: input, shape index: {}]
  %s12 = inlined_call_operand.vmem [shape: f32[1,64], index: 12, kind: input, shape index: {}]
  %s13 = inlined_call_operand.vmem [shape: bf16[64,32], index: 13, kind: input, shape index: {}]
  %s14 = inlined_call_operand.vmem [shape: f32[10,32], index: 14, kind: input, shape index: {}]
  %s15 = inlined_call_operand.vmem [shape: bf16[2,8,32], index: 15, kind: output, shape index: {0}]
  %s16 = inlined_call_operand.hbm [shape: bf16[2,4,8,8], index: 16, kind: output, shape index: {1}]
  %s17 = inlined_call_operand.hbm [shape: bf16[2,4,8,8], index: 17, kind: output, shape index: {2}]
  %18 = xla_tuple %s15, %s16, %s17
  %s19 = sld [smem:[#allocation0]]
  $region109: #{transformer_forward.7} parent=0
    _
  %s21 = ssub.s32 1, %s19
  %s22 = scalar_select 0, %s21, %s19
  $region1: #{transformer_forward.7} parent=0
    #allocation3 [shape = 'u8[16384]{0}', space=vmem, size = 0x4000, scoped, tag = 'output window, operand 1']
    #allocation4 [shape = 's32[2]{0}', space=sflag, size = 0x8, scoped, tag = 'scoped memory for transformer_forward.7']
    #allocation5 [shape = 'u8[16384]{0}', space=vmem, size = 0x4000, scoped, tag = 'output window, operand 2']
    #allocation6 [shape = 's32[2]{0}', space=sflag, size = 0x8, scoped, tag = 'scoped memory for transformer_forward.7']
    %23 = vsyncpa [#allocation4], 0
    %s24 = scalar_lea.sflag [#allocation4], 1
    %25 = vsyncpa %s24, 0
    %26 = vsyncpa [#allocation6], 0
    %s27 = scalar_lea.sflag [#allocation6], 1
    %28 = vsyncpa %s27, 0
    loop: start=0, step=1, limit=4
    $region2: #{transformer_forward.7} parent=1 // loop_pre_header
      _
    $region3: #{transformer_forward.7} parent=1 // loop_header
      %s30 = sphi 0, %s34
      %p31 = scmp.ge.s32.totalorder %s30, 4
      %s40 = sphi 0, %s42
      %s43 = sphi 0, %s40
      %s44 = sphi 0, %s43
      %s60 = sphi 0, %s44
      %s66 = sphi 0, %s68
      %s69 = sphi 0, %s66
      %s70 = sphi 0, %s69
      %s86 = sphi 0, %s70
      %s92 = sphi 0, %s94
      %s95 = sphi 0, %s92
      %s96 = sphi 0, %s95
      %s112 = sphi 0, %s96
      %s118 = sphi 0, %s120
      %s121 = sphi 0, %s118
      %s122 = sphi 0, %s121
      %s138 = sphi 0, %s122
      %s142 = sphi 0, %s142
      %s144 = sphi 0, %s142
      %s145 = sphi 0, %s144
      %s159 = sphi 0, %s145
      %s163 = sphi 0, %s163
      %s165 = sphi 0, %s163
      %s166 = sphi 0, %s165
      %s180 = sphi 0, %s166
      %s184 = sphi 0, %s184
      %s186 = sphi 0, %s184
      %s187 = sphi 0, %s186
      %s201 = sphi 0, %s187
      %s205 = sphi 0, %s205
      %s207 = sphi 0, %s205
      %s208 = sphi 0, %s207
      %s222 = sphi 0, %s208
      %s226 = sphi 0, %s226
      %s228 = sphi 0, %s226
      %s229 = sphi 0, %s228
      %s243 = sphi 0, %s229
      %s247 = sphi 0, %s247
      %s249 = sphi 0, %s247
      %s250 = sphi 0, %s249
      %s264 = sphi 0, %s250
      %s268 = sphi 0, %s268
      %s270 = sphi 0, %s268
      %s271 = sphi 0, %s270
      %s285 = sphi 0, %s271
      %s289 = sphi 0, %s289
      %s291 = sphi 0, %s289
      %s292 = sphi 0, %s291
      %s306 = sphi 0, %s292
      %s310 = sphi 0, %s310
      %s312 = sphi 0, %s310
      %s313 = sphi 0, %s312
      %s327 = sphi 0, %s313
      %s331 = sphi 0, %s331
      %s333 = sphi 0, %s331
      %s334 = sphi 0, %s333
      %s348 = sphi 0, %s334
      %s352 = sphi 0, %s352
      %s354 = sphi 0, %s352
      %s355 = sphi 0, %s354
      %s369 = sphi 0, %s355
      %s375 = sphi 0, %s377
      %s378 = sphi 0, %s375
      %s379 = sphi 0, %s378
      %s395 = sphi 0, %s379
      %s401 = sphi 0, %s403
      %s404 = sphi 0, %s401
      %s405 = sphi 0, %s404
      %s421 = sphi 0, %s405
      %s427 = sphi 0, %s429
      %s430 = sphi 0, %s427
      %s431 = sphi 0, %s430
      %s447 = sphi 0, %s431
    $region4: #{transformer_forward.7} parent=1 // loop_header_branch
      %33 = sbr.rel (%p31) target = $region8
    $region5: #{transformer_forward.7} parent=1 // loop_body
      %s35 = ssub.s32 %s30, 1
      %s36 = ssub.s32 %s30, 2
      %s37 = sadd.s32 %s30, 1
      %s38 = ssub.s32 %s30, %s37
      %p39 = scmp.eq.s32.totalorder %s38, 0
      %s41 = sadd.s32 %s40, 1
      %s42 = scalar_select %p39, %s40, %s41
      %p45 = pneg %p39
      %p46 = scmp.eq.s32.totalorder %s30, 1
      %p47 = por %p45, %p46
      %p48 = scmp.ne.s32.totalorder %s40, %s43
      %p49 = scmp.eq.s32.totalorder %s30, 0
      %p50 = por %p48, %p49
      %p51 = scmp.ne.s32.totalorder %s40, %s43
      %p52 = scmp.eq.s32.totalorder %s35, 1
      %p53 = por %p51, %p52
      %p54 = scmp.ne.s32.totalorder %s43, %s44
      %p55 = scmp.eq.s32.totalorder %s35, 0
      %p56 = por %p54, %p55
      %p57 = scmp.ne.s32.totalorder %s43, %s44
      %p58 = scmp.eq.s32.totalorder %s36, 1
      %p59 = por %p57, %p58
      %p61 = scmp.ne.s32.totalorder %s44, %s60
      %p62 = scmp.eq.s32.totalorder %s36, 0
      %p63 = por %p61, %p62
      %s64 = ssub.s32 %s30, %s37
      %p65 = scmp.eq.s32.totalorder %s64, 0
      %s67 = sadd.s32 %s66, 1
      %s68 = scalar_select %p65, %s66, %s67
      %p71 = pneg %p65
      %p72 = scmp.eq.s32.totalorder %s30, 1
      %p73 = por %p71, %p72
      %p74 = scmp.ne.s32.totalorder %s66, %s69
      %p75 = scmp.eq.s32.totalorder %s30, 0
      %p76 = por %p74, %p75
      %p77 = scmp.ne.s32.totalorder %s66, %s69
      %p78 = scmp.eq.s32.totalorder %s35, 1
      %p79 = por %p77, %p78
      %p80 = scmp.ne.s32.totalorder %s69, %s70
      %p81 = scmp.eq.s32.totalorder %s35, 0
      %p82 = por %p80, %p81
      %p83 = scmp.ne.s32.totalorder %s69, %s70
      %p84 = scmp.eq.s32.totalorder %s36, 1
      %p85 = por %p83, %p84
      %p87 = scmp.ne.s32.totalorder %s70, %s86
      %p88 = scmp.eq.s32.totalorder %s36, 0
      %p89 = por %p87, %p88
      %s90 = ssub.s32 %s30, %s37
      %p91 = scmp.eq.s32.totalorder %s90, 0
      %s93 = sadd.s32 %s92, 1
      %s94 = scalar_select %p91, %s92, %s93
      %p97 = pneg %p91
      %p98 = scmp.eq.s32.totalorder %s30, 1
      %p99 = por %p97, %p98
      %p100 = scmp.ne.s32.totalorder %s92, %s95
      %p101 = scmp.eq.s32.totalorder %s30, 0
      %p102 = por %p100, %p101
      %p103 = scmp.ne.s32.totalorder %s92, %s95
      %p104 = scmp.eq.s32.totalorder %s35, 1
      %p105 = por %p103, %p104
      %p106 = scmp.ne.s32.totalorder %s95, %s96
      %p107 = scmp.eq.s32.totalorder %s35, 0
      %p108 = por %p106, %p107
      %p109 = scmp.ne.s32.totalorder %s95, %s96
      %p110 = scmp.eq.s32.totalorder %s36, 1
      %p111 = por %p109, %p110
      %p113 = scmp.ne.s32.totalorder %s96, %s112
      %p114 = scmp.eq.s32.totalorder %s36, 0
      %p115 = por %p113, %p114
      %s116 = ssub.s32 %s30, %s37
      %p117 = scmp.eq.s32.totalorder %s116, 0
      %s119 = sadd.s32 %s118, 1
      %s120 = scalar_select %p117, %s118, %s119
      %p123 = pneg %p117
      %p124 = scmp.eq.s32.totalorder %s30, 1
      %p125 = por %p123, %p124
      %p126 = scmp.ne.s32.totalorder %s118, %s121
      %p127 = scmp.eq.s32.totalorder %s30, 0
      %p128 = por %p126, %p127
      %p129 = scmp.ne.s32.totalorder %s118, %s121
      %p130 = scmp.eq.s32.totalorder %s35, 1
      %p131 = por %p129, %p130
      %p132 = scmp.ne.s32.totalorder %s121, %s122
      %p133 = scmp.eq.s32.totalorder %s35, 0
      %p134 = por %p132, %p133
      %p135 = scmp.ne.s32.totalorder %s121, %s122
      %p136 = scmp.eq.s32.totalorder %s36, 1
      %p137 = por %p135, %p136
      %p139 = scmp.ne.s32.totalorder %s122, %s138
      %p140 = scmp.eq.s32.totalorder %s36, 0
      %p141 = por %p139, %p140
      %s143 = sadd.s32 %s142, 1
      %p146 = scmp.eq.s32.totalorder %s30, 1
      %p147 = scmp.ne.s32.totalorder %s142, %s144
      %p148 = scmp.eq.s32.totalorder %s30, 0
      %p149 = por %p147, %p148
      %p150 = scmp.ne.s32.totalorder %s142, %s144
      %p151 = scmp.eq.s32.totalorder %s35, 1
      %p152 = por %p150, %p151
      %p153 = scmp.ne.s32.totalorder %s144, %s145
      %p154 = scmp.eq.s32.totalorder %s35, 0
      %p155 = por %p153, %p154
      %p156 = scmp.ne.s32.totalorder %s144, %s145
      %p157 = scmp.eq.s32.totalorder %s36, 1
      %p158 = por %p156, %p157
      %p160 = scmp.ne.s32.totalorder %s145, %s159
      %p161 = scmp.eq.s32.totalorder %s36, 0
      %p162 = por %p160, %p161
      %s164 = sadd.s32 %s163, 1
      %p167 = scmp.eq.s32.totalorder %s30, 1
      %p168 = scmp.ne.s32.totalorder %s163, %s165
      %p169 = scmp.eq.s32.totalorder %s30, 0
      %p170 = por %p168, %p169
      %p171 = scmp.ne.s32.totalorder %s163, %s165
      %p172 = scmp.eq.s32.totalorder %s35, 1
      %p173 = por %p171, %p172
      %p174 = scmp.ne.s32.totalorder %s165, %s166
      %p175 = scmp.eq.s32.totalorder %s35, 0
      %p176 = por %p174, %p175
      %p177 = scmp.ne.s32.totalorder %s165, %s166
      %p178 = scmp.eq.s32.totalorder %s36, 1
      %p179 = por %p177, %p178
      %p181 = scmp.ne.s32.totalorder %s166, %s180
      %p182 = scmp.eq.s32.totalorder %s36, 0
      %p183 = por %p181, %p182
      %s185 = sadd.s32 %s184, 1
      %p188 = scmp.eq.s32.totalorder %s30, 1
      %p189 = scmp.ne.s32.totalorder %s184, %s186
      %p190 = scmp.eq.s32.totalorder %s30, 0
      %p191 = por %p189, %p190
      %p192 = scmp.ne.s32.totalorder %s184, %s186
      %p193 = scmp.eq.s32.totalorder %s35, 1
      %p194 = por %p192, %p193
      %p195 = scmp.ne.s32.totalorder %s186, %s187
      %p196 = scmp.eq.s32.totalorder %s35, 0
      %p197 = por %p195, %p196
      %p198 = scmp.ne.s32.totalorder %s186, %s187
      %p199 = scmp.eq.s32.totalorder %s36, 1
      %p200 = por %p198, %p199
      %p202 = scmp.ne.s32.totalorder %s187, %s201
      %p203 = scmp.eq.s32.totalorder %s36, 0
      %p204 = por %p202, %p203
      %s206 = sadd.s32 %s205, 1
      %p209 = scmp.eq.s32.totalorder %s30, 1
      %p210 = scmp.ne.s32.totalorder %s205, %s207
      %p211 = scmp.eq.s32.totalorder %s30, 0
      %p212 = por %p210, %p211
      %p213 = scmp.ne.s32.totalorder %s205, %s207
      %p214 = scmp.eq.s32.totalorder %s35, 1
      %p215 = por %p213, %p214
      %p216 = scmp.ne.s32.totalorder %s207, %s208
      %p217 = scmp.eq.s32.totalorder %s35, 0
      %p218 = por %p216, %p217
      %p219 = scmp.ne.s32.totalorder %s207, %s208
      %p220 = scmp.eq.s32.totalorder %s36, 1
      %p221 = por %p219, %p220
      %p223 = scmp.ne.s32.totalorder %s208, %s222
      %p224 = scmp.eq.s32.totalorder %s36, 0
      %p225 = por %p223, %p224
      %s227 = sadd.s32 %s226, 1
      %p230 = scmp.eq.s32.totalorder %s30, 1
      %p231 = scmp.ne.s32.totalorder %s226, %s228
      %p232 = scmp.eq.s32.totalorder %s30, 0
      %p233 = por %p231, %p232
      %p234 = scmp.ne.s32.totalorder %s226, %s228
      %p235 = scmp.eq.s32.totalorder %s35, 1
      %p236 = por %p234, %p235
      %p237 = scmp.ne.s32.totalorder %s228, %s229
      %p238 = scmp.eq.s32.totalorder %s35, 0
      %p239 = por %p237, %p238
      %p240 = scmp.ne.s32.totalorder %s228, %s229
      %p241 = scmp.eq.s32.totalorder %s36, 1
      %p242 = por %p240, %p241
      %p244 = scmp.ne.s32.totalorder %s229, %s243
      %p245 = scmp.eq.s32.totalorder %s36, 0
      %p246 = por %p244, %p245
      %s248 = sadd.s32 %s247, 1
      %p251 = scmp.eq.s32.totalorder %s30, 1
      %p252 = scmp.ne.s32.totalorder %s247, %s249
      %p253 = scmp.eq.s32.totalorder %s30, 0
      %p254 = por %p252, %p253
      %p255 = scmp.ne.s32.totalorder %s247, %s249
      %p256 = scmp.eq.s32.totalorder %s35, 1
      %p257 = por %p255, %p256
      %p258 = scmp.ne.s32.totalorder %s249, %s250
      %p259 = scmp.eq.s32.totalorder %s35, 0
      %p260 = por %p258, %p259
      %p261 = scmp.ne.s32.totalorder %s249, %s250
      %p262 = scmp.eq.s32.totalorder %s36, 1
      %p263 = por %p261, %p262
      %p265 = scmp.ne.s32.totalorder %s250, %s264
      %p266 = scmp.eq.s32.totalorder %s36, 0
      %p267 = por %p265, %p266
      %s269 = sadd.s32 %s268, 1
      %p272 = scmp.eq.s32.totalorder %s30, 1
      %p273 = scmp.ne.s32.totalorder %s268, %s270
      %p274 = scmp.eq.s32.totalorder %s30, 0
      %p275 = por %p273, %p274
      %p276 = scmp.ne.s32.totalorder %s268, %s270
      %p277 = scmp.eq.s32.totalorder %s35, 1
      %p278 = por %p276, %p277
      %p279 = scmp.ne.s32.totalorder %s270, %s271
      %p280 = scmp.eq.s32.totalorder %s35, 0
      %p281 = por %p279, %p280
      %p282 = scmp.ne.s32.totalorder %s270, %s271
      %p283 = scmp.eq.s32.totalorder %s36, 1
      %p284 = por %p282, %p283
      %p286 = scmp.ne.s32.totalorder %s271, %s285
      %p287 = scmp.eq.s32.totalorder %s36, 0
      %p288 = por %p286, %p287
      %s290 = sadd.s32 %s289, 1
      %p293 = scmp.eq.s32.totalorder %s30, 1
      %p294 = scmp.ne.s32.totalorder %s289, %s291
      %p295 = scmp.eq.s32.totalorder %s30, 0
      %p296 = por %p294, %p295
      %p297 = scmp.ne.s32.totalorder %s289, %s291
      %p298 = scmp.eq.s32.totalorder %s35, 1
      %p299 = por %p297, %p298
      %p300 = scmp.ne.s32.totalorder %s291, %s292
      %p301 = scmp.eq.s32.totalorder %s35, 0
      %p302 = por %p300, %p301
      %p303 = scmp.ne.s32.totalorder %s291, %s292
      %p304 = scmp.eq.s32.totalorder %s36, 1
      %p305 = por %p303, %p304
      %p307 = scmp.ne.s32.totalorder %s292, %s306
      %p308 = scmp.eq.s32.totalorder %s36, 0
      %p309 = por %p307, %p308
      %s311 = sadd.s32 %s310, 1
      %p314 = scmp.eq.s32.totalorder %s30, 1
      %p315 = scmp.ne.s32.totalorder %s310, %s312
      %p316 = scmp.eq.s32.totalorder %s30, 0
      %p317 = por %p315, %p316
      %p318 = scmp.ne.s32.totalorder %s310, %s312
      %p319 = scmp.eq.s32.totalorder %s35, 1
      %p320 = por %p318, %p319
      %p321 = scmp.ne.s32.totalorder %s312, %s313
      %p322 = scmp.eq.s32.totalorder %s35, 0
      %p323 = por %p321, %p322
      %p324 = scmp.ne.s32.totalorder %s312, %s313
      %p325 = scmp.eq.s32.totalorder %s36, 1
      %p326 = por %p324, %p325
      %p328 = scmp.ne.s32.totalorder %s313, %s327
      %p329 = scmp.eq.s32.totalorder %s36, 0
      %p330 = por %p328, %p329
      %s332 = sadd.s32 %s331, 1
      %p335 = scmp.eq.s32.totalorder %s30, 1
      %p336 = scmp.ne.s32.totalorder %s331, %s333
      %p337 = scmp.eq.s32.totalorder %s30, 0
      %p338 = por %p336, %p337
      %p339 = scmp.ne.s32.totalorder %s331, %s333
      %p340 = scmp.eq.s32.totalorder %s35, 1
      %p341 = por %p339, %p340
      %p342 = scmp.ne.s32.totalorder %s333, %s334
      %p343 = scmp.eq.s32.totalorder %s35, 0
      %p344 = por %p342, %p343
      %p345 = scmp.ne.s32.totalorder %s333, %s334
      %p346 = scmp.eq.s32.totalorder %s36, 1
      %p347 = por %p345, %p346
      %p349 = scmp.ne.s32.totalorder %s334, %s348
      %p350 = scmp.eq.s32.totalorder %s36, 0
      %p351 = por %p349, %p350
      %s353 = sadd.s32 %s352, 1
      %p356 = scmp.eq.s32.totalorder %s30, 1
      %p357 = scmp.ne.s32.totalorder %s352, %s354
      %p358 = scmp.eq.s32.totalorder %s30, 0
      %p359 = por %p357, %p358
      %p360 = scmp.ne.s32.totalorder %s352, %s354
      %p361 = scmp.eq.s32.totalorder %s35, 1
      %p362 = por %p360, %p361
      %p363 = scmp.ne.s32.totalorder %s354, %s355
      %p364 = scmp.eq.s32.totalorder %s35, 0
      %p365 = por %p363, %p364
      %p366 = scmp.ne.s32.totalorder %s354, %s355
      %p367 = scmp.eq.s32.totalorder %s36, 1
      %p368 = por %p366, %p367
      %p370 = scmp.ne.s32.totalorder %s355, %s369
      %p371 = scmp.eq.s32.totalorder %s36, 0
      %p372 = por %p370, %p371
      %s373 = ssub.s32 %s30, %s37
      %p374 = scmp.eq.s32.totalorder %s373, 0
      %s376 = sadd.s32 %s375, 1
      %s377 = scalar_select %p374, %s375, %s376
      %p380 = pneg %p374
      %p381 = scmp.eq.s32.totalorder %s30, 1
      %p382 = por %p380, %p381
      %p383 = scmp.ne.s32.totalorder %s375, %s378
      %p384 = scmp.eq.s32.totalorder %s30, 0
      %p385 = por %p383, %p384
      %p386 = scmp.ne.s32.totalorder %s375, %s378
      %p387 = scmp.eq.s32.totalorder %s35, 1
      %p388 = por %p386, %p387
      %p389 = scmp.ne.s32.totalorder %s378, %s379
      %p390 = scmp.eq.s32.totalorder %s35, 0
      %p391 = por %p389, %p390
      %p392 = scmp.ne.s32.totalorder %s378, %s379
      %p393 = scmp.eq.s32.totalorder %s36, 1
      %p394 = por %p392, %p393
      %p396 = scmp.ne.s32.totalorder %s379, %s395
      %p397 = scmp.eq.s32.totalorder %s36, 0
      %p398 = por %p396, %p397
      %s399 = ssub.s32 %s30, %s37
      %p400 = scmp.eq.s32.totalorder %s399, 0
      %s402 = sadd.s32 %s401, 1
      %s403 = scalar_select %p400, %s401, %s402
      %p406 = pneg %p400
      %p407 = scmp.eq.s32.totalorder %s30, 1
      %p408 = por %p406, %p407
      %p409 = scmp.ne.s32.totalorder %s401, %s404
      %p410 = scmp.eq.s32.totalorder %s30, 0
      %p411 = por %p409, %p410
      %p412 = scmp.ne.s32.totalorder %s401, %s404
      %p413 = scmp.eq.s32.totalorder %s35, 1
      %p414 = por %p412, %p413
      %p415 = scmp.ne.s32.totalorder %s404, %s405
      %p416 = scmp.eq.s32.totalorder %s35, 0
      %p417 = por %p415, %p416
      %p418 = scmp.ne.s32.totalorder %s404, %s405
      %p419 = scmp.eq.s32.totalorder %s36, 1
      %p420 = por %p418, %p419
      %p422 = scmp.ne.s32.totalorder %s405, %s421
      %p423 = scmp.eq.s32.totalorder %s36, 0
      %p424 = por %p422, %p423
      %s425 = ssub.s32 %s30, %s37
      %p426 = scmp.eq.s32.totalorder %s425, 0
      %s428 = sadd.s32 %s427, 1
      %s429 = scalar_select %p426, %s427, %s428
      %p432 = pneg %p426
      %p433 = scmp.eq.s32.totalorder %s30, 1
      %p434 = por %p432, %p433
      %p435 = scmp.ne.s32.totalorder %s427, %s430
      %p436 = scmp.eq.s32.totalorder %s30, 0
      %p437 = por %p435, %p436
      %p438 = scmp.ne.s32.totalorder %s427, %s430
      %p439 = scmp.eq.s32.totalorder %s35, 1
      %p440 = por %p438, %p439
      %p441 = scmp.ne.s32.totalorder %s430, %s431
      %p442 = scmp.eq.s32.totalorder %s35, 0
      %p443 = por %p441, %p442
      %p444 = scmp.ne.s32.totalorder %s430, %s431
      %p445 = scmp.eq.s32.totalorder %s36, 1
      %p446 = por %p444, %p445
      %p448 = scmp.ne.s32.totalorder %s431, %s447
      %p449 = scmp.eq.s32.totalorder %s36, 0
      %p450 = por %p448, %p449
      %p451 = scmp.le.s32.totalorder 1, %s30
      %p452 = scmp.lt.s32.totalorder %s30, 3
      %p453 = pnand %p451, %p452
      %p454 = pneg %p453
      // Predicated region
      $region9: #{transformer_forward.7} parent=5 // pred_check
        _
      $region10: #{transformer_forward.7} parent=5 // pred_check_branch
        %456 = sbr.rel (%p453) target = $region12
      $region11: #{transformer_forward.7} parent=5 // pred_region
        %s457 = ssub.s32 %s30, 1
        // Predicated region
        $region13: #{transformer_forward.7} parent=11 // pred_check
          %p458 = pneg %p155
        $region14: #{transformer_forward.7} parent=11 // pred_check_branch
          %460 = sbr.rel (%p458) target = $region16
        $region15: #{transformer_forward.7} parent=11 // pred_region
          _
        $region16: #{transformer_forward.7} parent=11 // pred_fallthru
          _
        // Predicated region
        $region17: #{transformer_forward.7} parent=11 // pred_check
          %p461 = pneg %p176
        $region18: #{transformer_forward.7} parent=11 // pred_check_branch
          %463 = sbr.rel (%p461) target = $region20
        $region19: #{transformer_forward.7} parent=11 // pred_region
          _
        $region20: #{transformer_forward.7} parent=11 // pred_fallthru
          _
        // Predicated region
        $region21: #{transformer_forward.7} parent=11 // pred_check
          %p464 = pneg %p197
        $region22: #{transformer_forward.7} parent=11 // pred_check_branch
          %466 = sbr.rel (%p464) target = $region24
        $region23: #{transformer_forward.7} parent=11 // pred_region
          _
        $region24: #{transformer_forward.7} parent=11 // pred_fallthru
          _
        // Predicated region
        $region25: #{transformer_forward.7} parent=11 // pred_check
          %p467 = pneg %p218
        $region26: #{transformer_forward.7} parent=11 // pred_check_branch
          %469 = sbr.rel (%p467) target = $region28
        $region27: #{transformer_forward.7} parent=11 // pred_region
          _
        $region28: #{transformer_forward.7} parent=11 // pred_fallthru
          _
        // Predicated region
        $region29: #{transformer_forward.7} parent=11 // pred_check
          %p470 = pneg %p239
        $region30: #{transformer_forward.7} parent=11 // pred_check_branch
          %472 = sbr.rel (%p470) target = $region32
        $region31: #{transformer_forward.7} parent=11 // pred_region
          _
        $region32: #{transformer_forward.7} parent=11 // pred_fallthru
          _
        // Predicated region
        $region33: #{transformer_forward.7} parent=11 // pred_check
          %p473 = pneg %p260
        $region34: #{transformer_forward.7} parent=11 // pred_check_branch
          %475 = sbr.rel (%p473) target = $region36
        $region35: #{transformer_forward.7} parent=11 // pred_region
          _
        $region36: #{transformer_forward.7} parent=11 // pred_fallthru
          _
        // Predicated region
        $region37: #{transformer_forward.7} parent=11 // pred_check
          %p476 = pneg %p281
        $region38: #{transformer_forward.7} parent=11 // pred_check_branch
          %478 = sbr.rel (%p476) target = $region40
        $region39: #{transformer_forward.7} parent=11 // pred_region
          _
        $region40: #{transformer_forward.7} parent=11 // pred_fallthru
          _
        // Predicated region
        $region41: #{transformer_forward.7} parent=11 // pred_check
          %p479 = pneg %p302
        $region42: #{transformer_forward.7} parent=11 // pred_check_branch
          %481 = sbr.rel (%p479) target = $region44
        $region43: #{transformer_forward.7} parent=11 // pred_region
          _
        $region44: #{transformer_forward.7} parent=11 // pred_fallthru
          _
        // Predicated region
        $region45: #{transformer_forward.7} parent=11 // pred_check
          %p482 = pneg %p323
        $region46: #{transformer_forward.7} parent=11 // pred_check_branch
          %484 = sbr.rel (%p482) target = $region48
        $region47: #{transformer_forward.7} parent=11 // pred_region
          _
        $region48: #{transformer_forward.7} parent=11 // pred_fallthru
          _
        // Predicated region
        $region49: #{transformer_forward.7} parent=11 // pred_check
          %p485 = pneg %p344
        $region50: #{transformer_forward.7} parent=11 // pred_check_branch
          %487 = sbr.rel (%p485) target = $region52
        $region51: #{transformer_forward.7} parent=11 // pred_region
          _
        $region52: #{transformer_forward.7} parent=11 // pred_fallthru
          _
        // Predicated region
        $region53: #{transformer_forward.7} parent=11 // pred_check
          %p488 = pneg %p365
        $region54: #{transformer_forward.7} parent=11 // pred_check_branch
          %490 = sbr.rel (%p488) target = $region56
        $region55: #{transformer_forward.7} parent=11 // pred_region
          _
        $region56: #{transformer_forward.7} parent=11 // pred_fallthru
          _
      $region12: #{transformer_forward.7} parent=5 // pred_fallthru
        _
      %p491 = scmp.lt.s32.totalorder %s30, 2
      // Predicated region
      $region57: #{transformer_forward.7} parent=5 // pred_check
        %p492 = pneg %p491
      $region58: #{transformer_forward.7} parent=5 // pred_check_branch
        %494 = sbr.rel (%p492) target = $region60
      $region59: #{transformer_forward.7} parent=5 // pred_region
        // Predicated region
        $region61: #{transformer_forward.7} parent=59 // pred_check
          %p495 = pneg %p50
        $region62: #{transformer_forward.7} parent=59 // pred_check_branch
          %497 = sbr.rel (%p495) target = $region64
        $region63: #{transformer_forward.7} parent=59 // pred_region
          %p498 = scmp.lt.s32.totalorder %s30, 1
          %s499 = scalar_select %p498, %s30, 1
          %s500 = smul.addr %s499, 4
          %s501 = scalar_lea.vmem %s0, %s500
        $region64: #{transformer_forward.7} parent=59 // pred_fallthru
          _
        // Predicated region
        $region65: #{transformer_forward.7} parent=59 // pred_check
          %p502 = pneg %p76
        $region66: #{transformer_forward.7} parent=59 // pred_check_branch
          %504 = sbr.rel (%p502) target = $region68
        $region67: #{transformer_forward.7} parent=59 // pred_region
          %p505 = scmp.lt.s32.totalorder %s30, 1
          %s506 = scalar_select %p505, %s30, 1
          %s507 = smul.addr %s506, 4
          %s508 = scalar_lea.vmem %s1, %s507
        $region68: #{transformer_forward.7} parent=59 // pred_fallthru
          _
        // Predicated region
        $region69: #{transformer_forward.7} parent=59 // pred_check
          %p509 = pneg %p102
        $region70: #{transformer_forward.7} parent=59 // pred_check_branch
          %511 = sbr.rel (%p509) target = $region72
        $region71: #{transformer_forward.7} parent=59 // pred_region
          %p512 = scmp.lt.s32.totalorder %s30, 1
          %s513 = scalar_select %p512, %s30, 1
          %s514 = scalar_lea.vmem %s2, %s513
        $region72: #{transformer_forward.7} parent=59 // pred_fallthru
          _
        // Predicated region
        $region73: #{transformer_forward.7} parent=59 // pred_check
          %p515 = pneg %p128
        $region74: #{transformer_forward.7} parent=59 // pred_check_branch
          %517 = sbr.rel (%p515) target = $region76
        $region75: #{transformer_forward.7} parent=59 // pred_region
          %p518 = scmp.lt.s32.totalorder %s30, 1
          %s519 = scalar_select %p518, %s30, 1
          %s520 = scalar_lea.vmem %s3, %s519
        $region76: #{transformer_forward.7} parent=59 // pred_fallthru
          _
      $region60: #{transformer_forward.7} parent=5 // pred_fallthru
        _
      %p521 = scmp.le.s32.totalorder 1, %s30
      %p522 = scmp.lt.s32.totalorder %s30, 3
      %p523 = pnand %p521, %p522
      %p524 = pneg %p523
      // Predicated region
      $region77: #{transformer_forward.7} parent=5 // pred_check
        _
      $region78: #{transformer_forward.7} parent=5 // pred_check_branch
        %526 = sbr.rel (%p523) target = $region80
      $region79: #{transformer_forward.7} parent=5 // pred_region
        %s527 = ssub.s32 %s30, 1
        %p528 = scmp.lt.s32.totalorder %s35, 1
        %s529 = scalar_select %p528, %s35, 1
        %s530 = smul.addr %s529, 4
        %s531 = scalar_lea.vmem %s0, %s530
        %p532 = pneg %p56
        %p533 = pneg %p53
        %p534 = scmp.lt.s32.totalorder %s35, 1
        %s535 = scalar_select %p534, %s35, 1
        %s536 = smul.addr %s535, 4
        %s537 = scalar_lea.vmem %s1, %s536
        %p538 = pneg %p82
        %p539 = pneg %p79
        %p540 = scmp.lt.s32.totalorder %s35, 1
        %s541 = scalar_select %p540, %s35, 1
        %s542 = scalar_lea.vmem %s2, %s541
        %p543 = pneg %p108
        %p544 = pneg %p105
        %p545 = scmp.lt.s32.totalorder %s35, 1
        %s546 = scalar_select %p545, %s35, 1
        %s547 = scalar_lea.vmem %s3, %s546
        %p548 = pneg %p134
        %p549 = pneg %p131
        %p550 = pneg %p155
        %p551 = pneg %p152
        %p552 = pneg %p176
        %p553 = pneg %p173
        %p554 = pneg %p197
        %p555 = pneg %p194
        %p556 = pneg %p218
        %p557 = pneg %p215
        %p558 = pneg %p239
        %p559 = pneg %p236
        %p560 = pneg %p260
        %p561 = pneg %p257
        %p562 = pneg %p281
        %p563 = pneg %p278
        %p564 = pneg %p302
        %p565 = pneg %p299
        %p566 = pneg %p323
        %p567 = pneg %p320
        %p568 = pneg %p344
        %p569 = pneg %p341
        %p570 = pneg %p365
        %p571 = pneg %p362
        %p572 = pneg %p391
        %p573 = pneg %p388
        %p574 = scmp.lt.s32.totalorder %s35, 1
        %s575 = scalar_select %p574, %s35, 1
        %s576 = smul.addr %s575, 4
        %s577 = scalar_lea.vmem %s15, %s576
        %p578 = pneg %p417
        %p579 = pneg %p414
        %s580 = sand.u32 %s404, 1
        %s581 = scalar_lea.sflag [#allocation4], %s580
        %s582 = sand.u32 %s404, 1
        %s583 = smul.addr %s582, 16
        %s584 = scalar_lea.vmem [#allocation3], %s583
        %p585 = pneg %p443
        %p586 = pneg %p440
        %s587 = sand.u32 %s430, 1
        %s588 = scalar_lea.sflag [#allocation6], %s587
        %s589 = sand.u32 %s430, 1
        %s590 = smul.addr %s589, 16
        %s591 = scalar_lea.vmem [#allocation5], %s590
        %p592 = scmp.lt.s32.totalorder %s35, 1
        %s593 = scalar_select %p592, %s35, 1
        %s594 = smul.addr %s593, 4
        %s595 = scalar_lea.vmem %s0, %s594
        %p596 = scmp.lt.s32.totalorder %s35, 1
        %s597 = scalar_select %p596, %s35, 1
        %s598 = smul.addr %s597, 4
        %s599 = scalar_lea.vmem %s1, %s598
        %p600 = scmp.lt.s32.totalorder %s35, 1
        %s601 = scalar_select %p600, %s35, 1
        %s602 = scalar_lea.vmem %s2, %s601
        %p603 = scmp.lt.s32.totalorder %s35, 1
        %s604 = scalar_select %p603, %s35, 1
        %s605 = scalar_lea.vmem %s3, %s604
        %p606 = scmp.lt.s32.totalorder %s35, 1
        %s607 = scalar_select %p606, %s35, 1
        %s608 = smul.addr %s607, 4
        %s609 = scalar_lea.vmem %s15, %s608
        %v611 = vld [vmem:[%s595] sm:$0xf]
        %v612 = vunpack.c.l.bf16 %v611
        %v613 = vld [vmem:[%s599] sm:$0xf]
        %v614 = vld [vmem:[%s14] sm:$0xff]
        %v615 = vld [vmem:[%s14 + $0x8] sm:$0x3]
        %v616 = vlaneseq
        %v617 = vshrl.u32 %v616, 7
        %v618 = vlaneseq
        %v619 = vand.u32 %v618, 127
        %vm620 = vcmp.gt.s32.totalorder %v619, %v617
        %v621 = vld [vmem:[%s602] sm:$0x1]
        %vm622 = vcmp.gt.f32.partialorder %v621, 0.5
        %v623 = vsel %vm622, 1, 0
        %v624 = vlaneseq
        %v625 = vshrl.u32 %v624, 7
        %v626 = vsub.s32 0, %v625
        %v627 = vrot.slane %v623, %v626
        %vm628 = vcmp.eq.s32.totalorder %v627, 1
        %vm629 = vmor %vm620, %vm628
        %v630 = vld [vmem:[%s4] sm:$0xf]
        %v631 = vld [vmem:[%s4 + $0x4] sm:$0xf]
        %v632 = vld [vmem:[%s4 + $0x8] sm:$0xf]
        %v633 = vld [vmem:[%s4 + $0xc] sm:$0xf]
        %v634 = vld [vmem:[%s5] sm:$0x1]
        %v636 = vlaneseq
        %v637 = vshrl.u32 %v636, 7
        %v638 = vsub.s32 0, %v637
        %v639 = vrot.slane %v634, %v638
        %v645 = vunpack.c.l.b16 %v630
        %v646 = vunpack.c.l.b16 %v631
        %v647 = vunpack.c.l.b16 %v632
        %v648 = vunpack.c.l.b16 %v633
        %v649 = vpack.c.b16 %v646, %v645
        %v650 = vpack.c.b16 %v648, %v647
        %vm653 = vcmask 261120
        %v655 = vsel %vm653, %v611, 0
        %657 = vmatprep.subr.bf16.mxu0 0
        %658 = vmatpush1.bf16.msra.mxu0 0
        %659 = vmatprep.subr.bf16.mxu0 0
        %660 = vmatpush1.bf16.msra.mxu0 0
        %661 = vmatprep.subr.bf16.mxu0 0
        %662 = vmatpush1.bf16.msra.mxu0 0
        %663 = vmatprep.subr.bf16.mxu0 0
        %664 = vmatpush1.bf16.msra.mxu0 0
        %665 = vmatprep.subr.bf16.mxu0 0
        %666 = vmatpush1.bf16.msra.mxu0 0
        %667 = vmatprep.subr.bf16.mxu0 0
        %668 = vmatpush1.bf16.msra.mxu0 0
        %669 = vmatprep.subr.bf16.mxu0 0
        %670 = vmatpush1.bf16.msra.mxu0 %v650
        %671 = vmatprep.subr.bf16.mxu0 0
        %672 = vmatpush1.bf16.msra.mxu0 %v649
        %673 = vmatprep.subr.bf16.mxu0 0
        %674 = vmatpush2.bf16.msra.mxu0 0
        %675 = vmatprep.subr.bf16.mxu0 0
        %676 = vmatpush2.bf16.msra.mxu0 0
        %677 = vmatprep.subr.bf16.mxu0 0
        %678 = vmatpush2.bf16.msra.mxu0 0
        %679 = vmatprep.subr.bf16.mxu0 0
        %680 = vmatpush2.bf16.msra.mxu0 0
        %681 = vmatprep.subr.bf16.mxu0 0
        %682 = vmatpush2.bf16.msra.mxu0 0
        %683 = vmatprep.subr.bf16.mxu0 0
        %684 = vmatpush2.bf16.msra.mxu0 0
        %685 = vmatprep.subr.bf16.mxu0 0
        %686 = vmatpush2.bf16.msra.mxu0 0
        %687 = vmatprep.subr.bf16.mxu0 0
        %688 = vmatpush2.bf16.msra.mxu0 0
        %689 = vmatprep.mubr.bf16.mxu0 0
        %690 = vmatmul.mubr.bf16.gmra.mxu0 %v655
        %v691 = vpop.f32.mrf.mxu0
        %v692 = vadd.f32 %v639, %v691
        %v693 = vpop.f32.mrf.mxu0
        %v694 = vpop.f32.mrf.mxu0
        %v695 = vpop.f32.mrf.mxu0
        %696 = vdwg.mxu0
        %v697 = vpack.c.bf16 %v692, %v692
        %699 = vrot.lane.b32.xlu0 %v697, 96
        %v700 = vpop.permute.xlu0 %699
        %vm701 = vcmask 64512
        %v703 = vsel %vm701, %v697, 0
        %v706 = vsel %vm701, %v700, 0
        %708 = vmatprep.subr.bf16.mxu0 0
        %709 = vmatpush1.bf16.xpose.msra.mxu0 0
        %710 = vmatprep.subr.bf16.mxu0 0
        %711 = vmatpush1.bf16.xpose.msra.mxu0 0
        %712 = vmatprep.subr.bf16.mxu0 0
        %713 = vmatpush1.bf16.xpose.msra.mxu0 0
        %714 = vmatprep.subr.bf16.mxu0 0
        %715 = vmatpush1.bf16.xpose.msra.mxu0 0
        %716 = vmatprep.subr.bf16.mxu0 0
        %717 = vmatpush1.bf16.xpose.msra.mxu0 0
        %718 = vmatprep.subr.bf16.mxu0 0
        %719 = vmatpush1.bf16.xpose.msra.mxu0 0
        %720 = vmatprep.subr.bf16.mxu0 0
        %721 = vmatpush1.bf16.xpose.msra.mxu0 0
        %722 = vmatprep.subr.bf16.mxu0 0
        %723 = vmatpush1.bf16.xpose.msra.mxu0 %v706
        %724 = vmatprep.subr.bf16.mxu0 0
        %725 = vmatpush2.bf16.xpose.msra.mxu0 0
        %726 = vmatprep.subr.bf16.mxu0 0
        %727 = vmatpush2.bf16.xpose.msra.mxu0 0
        %728 = vmatprep.subr.bf16.mxu0 0
        %729 = vmatpush2.bf16.xpose.msra.mxu0 0
        %730 = vmatprep.subr.bf16.mxu0 0
        %731 = vmatpush2.bf16.xpose.msra.mxu0 0
        %732 = vmatprep.subr.bf16.mxu0 0
        %733 = vmatpush2.bf16.xpose.msra.mxu0 0
        %734 = vmatprep.subr.bf16.mxu0 0
        %735 = vmatpush2.bf16.xpose.msra.mxu0 0
        %736 = vmatprep.subr.bf16.mxu0 0
        %737 = vmatpush2.bf16.xpose.msra.mxu0 0
        %738 = vmatprep.subr.bf16.mxu0 0
        %739 = vmatpush2.bf16.xpose.msra.mxu0 0
        %740 = vmatprep.mubr.bf16.mxu0 0
        %741 = vmatmul.mubr.bf16.gmra.mxu0 %v703
        %v742 = vpop.f32.mrf.mxu0
        %v743 = vadd.f32 0.0, %v742
        %v744 = vpop.f32.mrf.mxu0
        %v745 = vpop.f32.mrf.mxu0
        %v746 = vpop.f32.mrf.mxu0
        %747 = vdwg.mxu0
        %748 = vrot.lane.b32.xlu0 %v697, 120
        %v749 = vpop.permute.xlu0 %748
        %750 = vrot.lane.b32.xlu0 %v697, 88
        %v751 = vpop.permute.xlu0 %750
        %v753 = vsel %vm701, %v749, 0
        %v756 = vsel %vm701, %v751, 0
        %758 = vmatprep.subr.bf16.mxu0 0
        %759 = vmatpush1.bf16.xpose.msra.mxu0 0
        %760 = vmatprep.subr.bf16.mxu0 0
        %761 = vmatpush1.bf16.xpose.msra.mxu0 0
        %762 = vmatprep.subr.bf16.mxu0 0
        %763 = vmatpush1.bf16.xpose.msra.mxu0 0
        %764 = vmatprep.subr.bf16.mxu0 0
        %765 = vmatpush1.bf16.xpose.msra.mxu0 0
        %766 = vmatprep.subr.bf16.mxu0 0
        %767 = vmatpush1.bf16.xpose.msra.mxu0 0
        %768 = vmatprep.subr.bf16.mxu0 0
        %769 = vmatpush1.bf16.xpose.msra.mxu0 0
        %770 = vmatprep.subr.bf16.mxu0 0
        %771 = vmatpush1.bf16.xpose.msra.mxu0 0
        %772 = vmatprep.subr.bf16.mxu0 0
        %773 = vmatpush1.bf16.xpose.msra.mxu0 %v756
        %774 = vmatprep.subr.bf16.mxu0 0
        %775 = vmatpush2.bf16.xpose.msra.mxu0 0
        %776 = vmatprep.subr.bf16.mxu0 0
        %777 = vmatpush2.bf16.xpose.msra.mxu0 0
        %778 = vmatprep.subr.bf16.mxu0 0
        %779 = vmatpush2.bf16.xpose.msra.mxu0 0
        %780 = vmatprep.subr.bf16.mxu0 0
        %781 = vmatpush2.bf16.xpose.msra.mxu0 0
        %782 = vmatprep.subr.bf16.mxu0 0
        %783 = vmatpush2.bf16.xpose.msra.mxu0 0
        %784 = vmatprep.subr.bf16.mxu0 0
        %785 = vmatpush2.bf16.xpose.msra.mxu0 0
        %786 = vmatprep.subr.bf16.mxu0 0
        %787 = vmatpush2.bf16.xpose.msra.mxu0 0
        %788 = vmatprep.subr.bf16.mxu0 0
        %789 = vmatpush2.bf16.xpose.msra.mxu0 0
        %790 = vmatprep.mubr.bf16.mxu0 0
        %791 = vmatmul.mubr.bf16.gmra.mxu0 %v753
        %v792 = vpop.f32.mrf.mxu0
        %v793 = vadd.f32 0.0, %v792
        %v794 = vpop.f32.mrf.mxu0
        %v795 = vpop.f32.mrf.mxu0
        %v796 = vpop.f32.mrf.mxu0
        %797 = vdwg.mxu0
        %798 = vrot.lane.b32.xlu0 %v697, 112
        %v799 = vpop.permute.xlu0 %798
        %800 = vrot.lane.b32.xlu0 %v697, 80
        %v801 = vpop.permute.xlu0 %800
        %v803 = vsel %vm701, %v799, 0
        %v806 = vsel %vm701, %v801, 0
        %808 = vmatprep.subr.bf16.mxu0 0
        %809 = vmatpush1.bf16.xpose.msra.mxu0 0
        %810 = vmatprep.subr.bf16.mxu0 0
        %811 = vmatpush1.bf16.xpose.msra.mxu0 0
        %812 = vmatprep.subr.bf16.mxu0 0
        %813 = vmatpush1.bf16.xpose.msra.mxu0 0
        %814 = vmatprep.subr.bf16.mxu0 0
        %815 = vmatpush1.bf16.xpose.msra.mxu0 0
        %816 = vmatprep.subr.bf16.mxu0 0
        %817 = vmatpush1.bf16.xpose.msra.mxu0 0
        %818 = vmatprep.subr.bf16.mxu0 0
        %819 = vmatpush1.bf16.xpose.msra.mxu0 0
        %820 = vmatprep.subr.bf16.mxu0 0
        %821 = vmatpush1.bf16.xpose.msra.mxu0 0
        %822 = vmatprep.subr.bf16.mxu0 0
        %823 = vmatpush1.bf16.xpose.msra.mxu0 %v806
        %824 = vmatprep.subr.bf16.mxu0 0
        %825 = vmatpush2.bf16.xpose.msra.mxu0 0
        %826 = vmatprep.subr.bf16.mxu0 0
        %827 = vmatpush2.bf16.xpose.msra.mxu0 0
        %828 = vmatprep.subr.bf16.mxu0 0
        %829 = vmatpush2.bf16.xpose.msra.mxu0 0
        %830 = vmatprep.subr.bf16.mxu0 0
        %831 = vmatpush2.bf16.xpose.msra.mxu0 0
        %832 = vmatprep.subr.bf16.mxu0 0
        %833 = vmatpush2.bf16.xpose.msra.mxu0 0
        %834 = vmatprep.subr.bf16.mxu0 0
        %835 = vmatpush2.bf16.xpose.msra.mxu0 0
        %836 = vmatprep.subr.bf16.mxu0 0
        %837 = vmatpush2.bf16.xpose.msra.mxu0 0
        %838 = vmatprep.subr.bf16.mxu0 0
        %839 = vmatpush2.bf16.xpose.msra.mxu0 0
        %840 = vmatprep.mubr.bf16.mxu0 0
        %841 = vmatmul.mubr.bf16.gmra.mxu0 %v803
        %v842 = vpop.f32.mrf.mxu0
        %v843 = vadd.f32 0.0, %v842
        %v844 = vpop.f32.mrf.mxu0
        %v845 = vpop.f32.mrf.mxu0
        %v846 = vpop.f32.mrf.mxu0
        %847 = vdwg.mxu0
        %848 = vrot.lane.b32.xlu0 %v697, 104
        %v849 = vpop.permute.xlu0 %848
        %850 = vrot.lane.b32.xlu0 %v697, 72
        %v851 = vpop.permute.xlu0 %850
        %v853 = vsel %vm701, %v849, 0
        %v856 = vsel %vm701, %v851, 0
        %858 = vmatprep.subr.bf16.mxu0 0
        %859 = vmatpush1.bf16.xpose.msra.mxu0 0
        %860 = vmatprep.subr.bf16.mxu0 0
        %861 = vmatpush1.bf16.xpose.msra.mxu0 0
        %862 = vmatprep.subr.bf16.mxu0 0
        %863 = vmatpush1.bf16.xpose.msra.mxu0 0
        %864 = vmatprep.subr.bf16.mxu0 0
        %865 = vmatpush1.bf16.xpose.msra.mxu0 0
        %866 = vmatprep.subr.bf16.mxu0 0
        %867 = vmatpush1.bf16.xpose.msra.mxu0 0
        %868 = vmatprep.subr.bf16.mxu0 0
        %869 = vmatpush1.bf16.xpose.msra.mxu0 0
        %870 = vmatprep.subr.bf16.mxu0 0
        %871 = vmatpush1.bf16.xpose.msra.mxu0 0
        %872 = vmatprep.subr.bf16.mxu0 0
        %873 = vmatpush1.bf16.xpose.msra.mxu0 %v856
        %874 = vmatprep.subr.bf16.mxu0 0
        %875 = vmatpush2.bf16.xpose.msra.mxu0 0
        %876 = vmatprep.subr.bf16.mxu0 0
        %877 = vmatpush2.bf16.xpose.msra.mxu0 0
        %878 = vmatprep.subr.bf16.mxu0 0
        %879 = vmatpush2.bf16.xpose.msra.mxu0 0
        %880 = vmatprep.subr.bf16.mxu0 0
        %881 = vmatpush2.bf16.xpose.msra.mxu0 0
        %882 = vmatprep.subr.bf16.mxu0 0
        %883 = vmatpush2.bf16.xpose.msra.mxu0 0
        %884 = vmatprep.subr.bf16.mxu0 0
        %885 = vmatpush2.bf16.xpose.msra.mxu0 0
        %886 = vmatprep.subr.bf16.mxu0 0
        %887 = vmatpush2.bf16.xpose.msra.mxu0 0
        %888 = vmatprep.subr.bf16.mxu0 0
        %889 = vmatpush2.bf16.xpose.msra.mxu0 0
        %890 = vmatprep.mubr.bf16.mxu0 0
        %891 = vmatmul.mubr.bf16.gmra.mxu0 %v853
        %v892 = vpop.f32.mrf.mxu0
        %v893 = vadd.f32 0.0, %v892
        %v894 = vpop.f32.mrf.mxu0
        %v895 = vpop.f32.mrf.mxu0
        %v896 = vpop.f32.mrf.mxu0
        %897 = vdwg.mxu0
        %v898 = vmul.f32 %v743, 0.35355338
        %v899 = vmul.f32 %v793, 0.35355338
        %v900 = vmul.f32 %v843, 0.35355338
        %v901 = vmul.f32 %v893, 0.35355338
        %v902 = vsel %vm629, 1, 0
        %vm903 = vcmp.eq.s32.totalorder %v902, 1
        %v904 = vsel %vm903, -1e+30, %v898
        %v905 = vsel %vm903, -1e+30, %v899
        %v906 = vsel %vm903, -1e+30, %v900
        %v907 = vsel %vm903, -1e+30, %v901
        %v908 = vsel %vm701, %v904, -inf
        %909 = vmax.xlane.f32.xlu0 %v908
        %v910 = vpop.xlane.xlu0 %909
        %v911 = vsel %vm701, %v905, -inf
        %912 = vmax.xlane.f32.xlu0 %v911
        %v913 = vpop.xlane.xlu0 %912
        %v914 = vsel %vm701, %v906, -inf
        %915 = vmax.xlane.f32.xlu0 %v914
        %v916 = vpop.xlane.xlu0 %915
        %v917 = vsel %vm701, %v907, -inf
        %918 = vmax.xlane.f32.xlu0 %v917
        %v919 = vpop.xlane.xlu0 %918
        %v920 = vsub.f32 %v904, %v910
        %v921 = vsub.f32 %v905, %v913
        %v922 = vsub.f32 %v906, %v916
        %v923 = vsub.f32 %v907, %v919
        %v924 = vmul.f32 %v920, 1.442695
        %v925 = vpow.pop %v924
        %v926 = vmul.f32 %v921, 1.442695
        %v927 = vpow.pop %v926
        %v928 = vmul.f32 %v922, 1.442695
        %v929 = vpow.pop %v928
        %v930 = vmul.f32 %v923, 1.442695
        %v931 = vpow.pop %v930
        %v932 = vsel %vm701, %v925, 0.0
        %933 = vadd.xlane.f32.xlu0 %v932
        %v934 = vpop.xlane.xlu0 %933
        %v935 = vsel %vm701, %v927, 0.0
        %936 = vadd.xlane.f32.xlu0 %v935
        %v937 = vpop.xlane.xlu0 %936
        %v938 = vsel %vm701, %v929, 0.0
        %939 = vadd.xlane.f32.xlu0 %v938
        %v940 = vpop.xlane.xlu0 %939
        %v941 = vsel %vm701, %v931, 0.0
        %942 = vadd.xlane.f32.xlu0 %v941
        %v943 = vpop.xlane.xlu0 %942
        %v944 = vrcp.pop %v934
        %v945 = vmul.f32 %v925, %v944
        %v946 = vrcp.pop %v937
        %v947 = vmul.f32 %v927, %v946
        %v948 = vrcp.pop %v940
        %v949 = vmul.f32 %v929, %v948
        %v950 = vrcp.pop %v943
        %v951 = vmul.f32 %v931, %v950
        %v952 = vpack.c.bf16 %v945, %v945
        %v953 = vpack.c.bf16 %v947, %v947
        %v954 = vpack.c.bf16 %v949, %v949
        %v955 = vpack.c.bf16 %v951, %v951
        %vm956 = vcmask 60416
        %957 = vst.msk [vmem:[%s584] sm:$0xf] %vm956, %v952
        %958 = vst.msk [vmem:[%s584 + $0x4] sm:$0xf] %vm956, %v953
        %959 = vst.msk [vmem:[%s584 + $0x8] sm:$0xf] %vm956, %v954
        %960 = vst.msk [vmem:[%s584 + $0xc] sm:$0xf] %vm956, %v955
        %961 = vrot.lane.b32.xlu0 %v697, 64
        %v962 = vpop.permute.xlu0 %961
        %v964 = vsel %vm701, %v952, 0
        %vm966 = vcmask 1043456
        %v968 = vsel %vm966, %v962, 0
        %970 = vmatprep.subr.bf16.mxu0 0
        %971 = vmatpush1.bf16.msra.mxu0 0
        %972 = vmatprep.subr.bf16.mxu0 0
        %973 = vmatpush1.bf16.msra.mxu0 0
        %974 = vmatprep.subr.bf16.mxu0 0
        %975 = vmatpush1.bf16.msra.mxu0 0
        %976 = vmatprep.subr.bf16.mxu0 0
        %977 = vmatpush1.bf16.msra.mxu0 0
        %978 = vmatprep.subr.bf16.mxu0 0
        %979 = vmatpush1.bf16.msra.mxu0 0
        %980 = vmatprep.subr.bf16.mxu0 0
        %981 = vmatpush1.bf16.msra.mxu0 0
        %982 = vmatprep.subr.bf16.mxu0 0
        %983 = vmatpush1.bf16.msra.mxu0 0
        %984 = vmatprep.subr.bf16.mxu0 0
        %985 = vmatpush1.bf16.msra.mxu0 %v968
        %986 = vmatprep.subr.bf16.mxu0 0
        %987 = vmatpush2.bf16.msra.mxu0 0
        %988 = vmatprep.subr.bf16.mxu0 0
        %989 = vmatpush2.bf16.msra.mxu0 0
        %990 = vmatprep.subr.bf16.mxu0 0
        %991 = vmatpush2.bf16.msra.mxu0 0
        %992 = vmatprep.subr.bf16.mxu0 0
        %993 = vmatpush2.bf16.msra.mxu0 0
        %994 = vmatprep.subr.bf16.mxu0 0
        %995 = vmatpush2.bf16.msra.mxu0 0
        %996 = vmatprep.subr.bf16.mxu0 0
        %997 = vmatpush2.bf16.msra.mxu0 0
        %998 = vmatprep.subr.bf16.mxu0 0
        %999 = vmatpush2.bf16.msra.mxu0 0
        %1000 = vmatprep.subr.bf16.mxu0 0
        %1001 = vmatpush2.bf16.msra.mxu0 0
        %1002 = vmatprep.mubr.bf16.mxu0 0
        %1003 = vmatmul.mubr.bf16.gmra.mxu0 %v964
        %v1004 = vpop.f32.mrf.mxu0
        %v1005 = vadd.f32 0.0, %v1004
        %v1006 = vpop.f32.mrf.mxu0
        %v1007 = vpop.f32.mrf.mxu0
        %v1008 = vpop.f32.mrf.mxu0
        %1009 = vdwg.mxu0
        %1010 = vst.msk [vmem:[#allocation2] sm:$0xff] %vm701, %v1005
        %1011 = vrot.lane.b32.xlu0 %v697, 56
        %v1012 = vpop.permute.xlu0 %1011
        %v1014 = vsel %vm701, %v953, 0
        %v1017 = vsel %vm966, %v1012, 0
        %1019 = vmatprep.subr.bf16.mxu0 0
        %1020 = vmatpush1.bf16.msra.mxu0 0
        %1021 = vmatprep.subr.bf16.mxu0 0
        %1022 = vmatpush1.bf16.msra.mxu0 0
        %1023 = vmatprep.subr.bf16.mxu0 0
        %1024 = vmatpush1.bf16.msra.mxu0 0
        %1025 = vmatprep.subr.bf16.mxu0 0
        %1026 = vmatpush1.bf16.msra.mxu0 0
        %1027 = vmatprep.subr.bf16.mxu0 0
        %1028 = vmatpush1.bf16.msra.mxu0 0
        %1029 = vmatprep.subr.bf16.mxu0 0
        %1030 = vmatpush1.bf16.msra.mxu0 0
        %1031 = vmatprep.subr.bf16.mxu0 0
        %1032 = vmatpush1.bf16.msra.mxu0 0
        %1033 = vmatprep.subr.bf16.mxu0 0
        %1034 = vmatpush1.bf16.msra.mxu0 %v1017
        %1035 = vmatprep.subr.bf16.mxu0 0
        %1036 = vmatpush2.bf16.msra.mxu0 0
        %1037 = vmatprep.subr.bf16.mxu0 0
        %1038 = vmatpush2.bf16.msra.mxu0 0
        %1039 = vmatprep.subr.bf16.mxu0 0
        %1040 = vmatpush2.bf16.msra.mxu0 0
        %1041 = vmatprep.subr.bf16.mxu0 0
        %1042 = vmatpush2.bf16.msra.mxu0 0
        %1043 = vmatprep.subr.bf16.mxu0 0
        %1044 = vmatpush2.bf16.msra.mxu0 0
        %1045 = vmatprep.subr.bf16.mxu0 0
        %1046 = vmatpush2.bf16.msra.mxu0 0
        %1047 = vmatprep.subr.bf16.mxu0 0
        %1048 = vmatpush2.bf16.msra.mxu0 0
        %1049 = vmatprep.subr.bf16.mxu0 0
        %1050 = vmatpush2.bf16.msra.mxu0 0
        %1051 = vmatprep.mubr.bf16.mxu0 0
        %1052 = vmatmul.mubr.bf16.gmra.mxu0 %v1014
        %v1053 = vpop.f32.mrf.mxu0
        %v1054 = vadd.f32 0.0, %v1053
        %v1055 = vpop.f32.mrf.mxu0
        %v1056 = vpop.f32.mrf.mxu0
        %v1057 = vpop.f32.mrf.mxu0
        %1058 = vdwg.mxu0
        %1060 = vrot.lane.b32.xlu0 %v1054, 8
        %v1061 = vpop.permute.xlu0 %1060
        %vm1063 = vcmask 130112
        %1064 = vst.msk [vmem:[#allocation2] sm:$0xff] %vm1063, %v1061
        %1065 = vrot.lane.b32.xlu0 %v697, 48
        %v1066 = vpop.permute.xlu0 %1065
        %v1068 = vsel %vm701, %v954, 0
        %v1071 = vsel %vm966, %v1066, 0
        %1073 = vmatprep.subr.bf16.mxu0 0
        %1074 = vmatpush1.bf16.msra.mxu0 0
        %1075 = vmatprep.subr.bf16.mxu0 0
        %1076 = vmatpush1.bf16.msra.mxu0 0
        %1077 = vmatprep.subr.bf16.mxu0 0
        %1078 = vmatpush1.bf16.msra.mxu0 0
        %1079 = vmatprep.subr.bf16.mxu0 0
        %1080 = vmatpush1.bf16.msra.mxu0 0
        %1081 = vmatprep.subr.bf16.mxu0 0
        %1082 = vmatpush1.bf16.msra.mxu0 0
        %1083 = vmatprep.subr.bf16.mxu0 0
        %1084 = vmatpush1.bf16.msra.mxu0 0
        %1085 = vmatprep.subr.bf16.mxu0 0
        %1086 = vmatpush1.bf16.msra.mxu0 0
        %1087 = vmatprep.subr.bf16.mxu0 0
        %1088 = vmatpush1.bf16.msra.mxu0 %v1071
        %1089 = vmatprep.subr.bf16.mxu0 0
        %1090 = vmatpush2.bf16.msra.mxu0 0
        %1091 = vmatprep.subr.bf16.mxu0 0
        %1092 = vmatpush2.bf16.msra.mxu0 0
        %1093 = vmatprep.subr.bf16.mxu0 0
        %1094 = vmatpush2.bf16.msra.mxu0 0
        %1095 = vmatprep.subr.bf16.mxu0 0
        %1096 = vmatpush2.bf16.msra.mxu0 0
        %1097 = vmatprep.subr.bf16.mxu0 0
        %1098 = vmatpush2.bf16.msra.mxu0 0
        %1099 = vmatprep.subr.bf16.mxu0 0
        %1100 = vmatpush2.bf16.msra.mxu0 0
        %1101 = vmatprep.subr.bf16.mxu0 0
        %1102 = vmatpush2.bf16.msra.mxu0 0
        %1103 = vmatprep.subr.bf16.mxu0 0
        %1104 = vmatpush2.bf16.msra.mxu0 0
        %1105 = vmatprep.mubr.bf16.mxu0 0
        %1106 = vmatmul.mubr.bf16.gmra.mxu0 %v1068
        %v1107 = vpop.f32.mrf.mxu0
        %v1108 = vadd.f32 0.0, %v1107
        %v1109 = vpop.f32.mrf.mxu0
        %v1110 = vpop.f32.mrf.mxu0
        %v1111 = vpop.f32.mrf.mxu0
        %1112 = vdwg.mxu0
        %1114 = vrot.lane.b32.xlu0 %v1108, 16
        %v1115 = vpop.permute.xlu0 %1114
        %vm1117 = vcmask 195712
        %1118 = vst.msk [vmem:[#allocation2] sm:$0xff] %vm1117, %v1115
        %1119 = vrot.lane.b32.xlu0 %v697, 40
        %v1120 = vpop.permute.xlu0 %1119
        %v1122 = vsel %vm701, %v955, 0
        %v1125 = vsel %vm966, %v1120, 0
        %1127 = vmatprep.subr.bf16.mxu0 0
        %1128 = vmatpush1.bf16.msra.mxu0 0
        %1129 = vmatprep.subr.bf16.mxu0 0
        %1130 = vmatpush1.bf16.msra.mxu0 0
        %1131 = vmatprep.subr.bf16.mxu0 0
        %1132 = vmatpush1.bf16.msra.mxu0 0
        %1133 = vmatprep.subr.bf16.mxu0 0
        %1134 = vmatpush1.bf16.msra.mxu0 0
        %1135 = vmatprep.subr.bf16.mxu0 0
        %1136 = vmatpush1.bf16.msra.mxu0 0
        %1137 = vmatprep.subr.bf16.mxu0 0
        %1138 = vmatpush1.bf16.msra.mxu0 0
        %1139 = vmatprep.subr.bf16.mxu0 0
        %1140 = vmatpush1.bf16.msra.mxu0 0
        %1141 = vmatprep.subr.bf16.mxu0 0
        %1142 = vmatpush1.bf16.msra.mxu0 %v1125
        %1143 = vmatprep.subr.bf16.mxu0 0
        %1144 = vmatpush2.bf16.msra.mxu0 0
        %1145 = vmatprep.subr.bf16.mxu0 0
        %1146 = vmatpush2.bf16.msra.mxu0 0
        %1147 = vmatprep.subr.bf16.mxu0 0
        %1148 = vmatpush2.bf16.msra.mxu0 0
        %1149 = vmatprep.subr.bf16.mxu0 0
        %1150 = vmatpush2.bf16.msra.mxu0 0
        %1151 = vmatprep.subr.bf16.mxu0 0
        %1152 = vmatpush2.bf16.msra.mxu0 0
        %1153 = vmatprep.subr.bf16.mxu0 0
        %1154 = vmatpush2.bf16.msra.mxu0 0
        %1155 = vmatprep.subr.bf16.mxu0 0
        %1156 = vmatpush2.bf16.msra.mxu0 0
        %1157 = vmatprep.subr.bf16.mxu0 0
        %1158 = vmatpush2.bf16.msra.mxu0 0
        %1159 = vmatprep.mubr.bf16.mxu0 0
        %1160 = vmatmul.mubr.bf16.gmra.mxu0 %v1122
        %v1161 = vpop.f32.mrf.mxu0
        %v1162 = vadd.f32 0.0, %v1161
        %v1163 = vpop.f32.mrf.mxu0
        %v1164 = vpop.f32.mrf.mxu0
        %v1165 = vpop.f32.mrf.mxu0
        %1166 = vdwg.mxu0
        %1168 = vrot.lane.b32.xlu0 %v1162, 24
        %v1169 = vpop.permute.xlu0 %1168
        %vm1171 = vcmask 261312
        %1172 = vst.msk [vmem:[#allocation2] sm:$0xff] %vm1171, %v1169
        %v1173 = vld [vmem:[#allocation2] sm:$0xff]
        %v1174 = vpack.c.bf16 %v1173, %v1173
        %v1175 = vld [vmem:[%s6] sm:$0xf]
        %v1176 = vld [vmem:[%s6 + $0x4] sm:$0xf]
        %v1177 = vld [vmem:[%s6 + $0x8] sm:$0xf]
        %v1178 = vld [vmem:[%s6 + $0xc] sm:$0xf]
        %v1179 = vlaneseq
        %v1180 = vshrl.u32 %v1179, 7
        %v1181 = vsub.s32 0, %v1180
        %v1182 = vrot.slane %v614, %v1181
        %v1187 = vunpack.c.l.b16 %v1175
        %v1188 = vunpack.c.l.b16 %v1176
        %v1189 = vunpack.c.l.b16 %v1177
        %v1190 = vunpack.c.l.b16 %v1178
        %v1191 = vpack.c.b16 %v1188, %v1187
        %v1192 = vpack.c.b16 %v1190, %v1189
        %v1196 = vsel %vm653, %v1174, 0
        %1198 = vmatprep.subr.bf16.mxu0 0
        %1199 = vmatpush1.bf16.msra.mxu0 0
        %1200 = vmatprep.subr.bf16.mxu0 0
        %1201 = vmatpush1.bf16.msra.mxu0 0
        %1202 = vmatprep.subr.bf16.mxu0 0
        %1203 = vmatpush1.bf16.msra.mxu0 0
        %1204 = vmatprep.subr.bf16.mxu0 0
        %1205 = vmatpush1.bf16.msra.mxu0 0
        %1206 = vmatprep.subr.bf16.mxu0 0
        %1207 = vmatpush1.bf16.msra.mxu0 0
        %1208 = vmatprep.subr.bf16.mxu0 0
        %1209 = vmatpush1.bf16.msra.mxu0 0
        %1210 = vmatprep.subr.bf16.mxu0 0
        %1211 = vmatpush1.bf16.msra.mxu0 %v1192
        %1212 = vmatprep.subr.bf16.mxu0 0
        %1213 = vmatpush1.bf16.msra.mxu0 %v1191
        %1214 = vmatprep.subr.bf16.mxu0 0
        %1215 = vmatpush2.bf16.msra.mxu0 0
        %1216 = vmatprep.subr.bf16.mxu0 0
        %1217 = vmatpush2.bf16.msra.mxu0 0
        %1218 = vmatprep.subr.bf16.mxu0 0
        %1219 = vmatpush2.bf16.msra.mxu0 0
        %1220 = vmatprep.subr.bf16.mxu0 0
        %1221 = vmatpush2.bf16.msra.mxu0 0
        %1222 = vmatprep.subr.bf16.mxu0 0
        %1223 = vmatpush2.bf16.msra.mxu0 0
        %1224 = vmatprep.subr.bf16.mxu0 0
        %1225 = vmatpush2.bf16.msra.mxu0 0
        %1226 = vmatprep.subr.bf16.mxu0 0
        %1227 = vmatpush2.bf16.msra.mxu0 0
        %1228 = vmatprep.subr.bf16.mxu0 0
        %1229 = vmatpush2.bf16.msra.mxu0 0
        %1230 = vmatprep.mubr.bf16.mxu0 0
        %1231 = vmatmul.mubr.bf16.gmra.mxu0 %v1196
        %v1232 = vpop.f32.mrf.mxu0
        %v1233 = vadd.f32 %v1182, %v1232
        %v1234 = vpop.f32.mrf.mxu0
        %v1235 = vpop.f32.mrf.mxu0
        %v1236 = vpop.f32.mrf.mxu0
        %1237 = vdwg.mxu0
        %v1238 = vadd.f32 %v1233, %v612
        %v1239 = vsel %vm653, %v1238, 0.0
        %1240 = vadd.xlane.f32.xlu0 %v1239
        %v1241 = vpop.xlane.xlu0 %1240
        %v1242 = vrcp.pop 32.0
        %v1243 = vmul.f32 %v1241, %v1242
        %v1244 = vsub.f32 %v1238, %v1243
        %v1245 = vmul.f32 %v1244, %v1244
        %v1246 = vsel %vm653, %v1245, 0.0
        %1247 = vadd.xlane.f32.xlu0 %v1246
        %v1248 = vpop.xlane.xlu0 %1247
        %v1249 = vmul.f32 %v1248, %v1242
        %v1250 = vadd.f32 %v1249, 1e-05
        %v1251 = vrsqrt.pop %v1250
        %v1252 = vmul.f32 %v1244, %v1251
        %v1253 = vlaneseq
        %v1254 = vshrl.u32 %v1253, 7
        %v1255 = vsub.s32 1, %v1254
        %v1256 = vrot.slane %v614, %v1255
        %v1257 = vmul.f32 %v1252, %v1256
        %v1258 = vlaneseq
        %v1259 = vshrl.u32 %v1258, 7
        %v1260 = vsub.s32 2, %v1259
        %v1261 = vrot.slane %v614, %v1260
        %v1262 = vadd.f32 %v1257, %v1261
        %v1263 = vld [vmem:[%s605] sm:$0x1]
        %vm1264 = vcmp.gt.f32.partialorder %v1263, 0.5
        %v1265 = vpack.c.bf16 %v1262, %v1262
        %v1266 = vld [vmem:[%s7] sm:$0xf]
        %v1267 = vld [vmem:[%s7 + $0x4] sm:$0xf]
        %v1268 = vld [vmem:[%s7 + $0x8] sm:$0xf]
        %v1269 = vld [vmem:[%s7 + $0xc] sm:$0xf]
        %v1270 = vlaneseq
        %v1271 = vshrl.u32 %v1270, 7
        %v1272 = vsub.s32 3, %v1271
        %v1273 = vrot.slane %v614, %v1272
        %v1278 = vunpack.c.l.b16 %v1266
        %v1279 = vunpack.c.l.b16 %v1267
        %v1280 = vunpack.c.l.b16 %v1268
        %v1281 = vunpack.c.l.b16 %v1269
        %v1282 = vpack.c.b16 %v1279, %v1278
        %v1283 = vpack.c.b16 %v1281, %v1280
        %v1287 = vsel %vm653, %v1265, 0
        %1289 = vmatprep.subr.bf16.mxu0 0
        %1290 = vmatpush1.bf16.msra.mxu0 0
        %1291 = vmatprep.subr.bf16.mxu0 0
        %1292 = vmatpush1.bf16.msra.mxu0 0
        %1293 = vmatprep.subr.bf16.mxu0 0
        %1294 = vmatpush1.bf16.msra.mxu0 0
        %1295 = vmatprep.subr.bf16.mxu0 0
        %1296 = vmatpush1.bf16.msra.mxu0 0
        %1297 = vmatprep.subr.bf16.mxu0 0
        %1298 = vmatpush1.bf16.msra.mxu0 0
        %1299 = vmatprep.subr.bf16.mxu0 0
        %1300 = vmatpush1.bf16.msra.mxu0 0
        %1301 = vmatprep.subr.bf16.mxu0 0
        %1302 = vmatpush1.bf16.msra.mxu0 %v1283
        %1303 = vmatprep.subr.bf16.mxu0 0
        %1304 = vmatpush1.bf16.msra.mxu0 %v1282
        %1305 = vmatprep.subr.bf16.mxu0 0
        %1306 = vmatpush2.bf16.msra.mxu0 0
        %1307 = vmatprep.subr.bf16.mxu0 0
        %1308 = vmatpush2.bf16.msra.mxu0 0
        %1309 = vmatprep.subr.bf16.mxu0 0
        %1310 = vmatpush2.bf16.msra.mxu0 0
        %1311 = vmatprep.subr.bf16.mxu0 0
        %1312 = vmatpush2.bf16.msra.mxu0 0
        %1313 = vmatprep.subr.bf16.mxu0 0
        %1314 = vmatpush2.bf16.msra.mxu0 0
        %1315 = vmatprep.subr.bf16.mxu0 0
        %1316 = vmatpush2.bf16.msra.mxu0 0
        %1317 = vmatprep.subr.bf16.mxu0 0
        %1318 = vmatpush2.bf16.msra.mxu0 0
        %1319 = vmatprep.subr.bf16.mxu0 0
        %1320 = vmatpush2.bf16.msra.mxu0 0
        %1321 = vmatprep.mubr.bf16.mxu0 0
        %1322 = vmatmul.mubr.bf16.gmra.mxu0 %v1287
        %v1323 = vpop.f32.mrf.mxu0
        %v1324 = vadd.f32 %v1273, %v1323
        %v1325 = vpop.f32.mrf.mxu0
        %v1326 = vpop.f32.mrf.mxu0
        %v1327 = vpop.f32.mrf.mxu0
        %1328 = vdwg.mxu0
        %v1329 = vld [vmem:[%s8] sm:$0xf]
        %v1330 = vld [vmem:[%s8 + $0x4] sm:$0xf]
        %v1331 = vld [vmem:[%s8 + $0x8] sm:$0xf]
        %v1332 = vld [vmem:[%s8 + $0xc] sm:$0xf]
        %v1333 = vld [vmem:[%s9] sm:$0x1]
        %v1335 = vlaneseq
        %v1336 = vshrl.u32 %v1335, 7
        %v1337 = vsub.s32 0, %v1336
        %v1338 = vrot.slane %v1333, %v1337
        %v1344 = vunpack.c.l.b16 %v1329
        %v1345 = vunpack.c.l.b16 %v1330
        %v1346 = vunpack.c.l.b16 %v1331
        %v1347 = vunpack.c.l.b16 %v1332
        %v1348 = vpack.c.b16 %v1345, %v1344
        %v1349 = vpack.c.b16 %v1347, %v1346
        %v1353 = vsel %vm653, %v613, 0
        %1355 = vmatprep.subr.bf16.mxu0 0
        %1356 = vmatpush1.bf16.msra.mxu0 0
        %1357 = vmatprep.subr.bf16.mxu0 0
        %1358 = vmatpush1.bf16.msra.mxu0 0
        %1359 = vmatprep.subr.bf16.mxu0 0
        %1360 = vmatpush1.bf16.msra.mxu0 0
        %1361 = vmatprep.subr.bf16.mxu0 0
        %1362 = vmatpush1.bf16.msra.mxu0 0
        %1363 = vmatprep.subr.bf16.mxu0 0
        %1364 = vmatpush1.bf16.msra.mxu0 0
        %1365 = vmatprep.subr.bf16.mxu0 0
        %1366 = vmatpush1.bf16.msra.mxu0 0
        %1367 = vmatprep.subr.bf16.mxu0 0
        %1368 = vmatpush1.bf16.msra.mxu0 %v1349
        %1369 = vmatprep.subr.bf16.mxu0 0
        %1370 = vmatpush1.bf16.msra.mxu0 %v1348
        %1371 = vmatprep.subr.bf16.mxu0 0
        %1372 = vmatpush2.bf16.msra.mxu0 0
        %1373 = vmatprep.subr.bf16.mxu0 0
        %1374 = vmatpush2.bf16.msra.mxu0 0
        %1375 = vmatprep.subr.bf16.mxu0 0
        %1376 = vmatpush2.bf16.msra.mxu0 0
        %1377 = vmatprep.subr.bf16.mxu0 0
        %1378 = vmatpush2.bf16.msra.mxu0 0
        %1379 = vmatprep.subr.bf16.mxu0 0
        %1380 = vmatpush2.bf16.msra.mxu0 0
        %1381 = vmatprep.subr.bf16.mxu0 0
        %1382 = vmatpush2.bf16.msra.mxu0 0
        %1383 = vmatprep.subr.bf16.mxu0 0
        %1384 = vmatpush2.bf16.msra.mxu0 0
        %1385 = vmatprep.subr.bf16.mxu0 0
        %1386 = vmatpush2.bf16.msra.mxu0 0
        %1387 = vmatprep.mubr.bf16.mxu0 0
        %1388 = vmatmul.mubr.bf16.gmra.mxu0 %v1353
        %v1389 = vpop.f32.mrf.mxu0
        %v1390 = vadd.f32 %v1338, %v1389
        %v1391 = vpop.f32.mrf.mxu0
        %v1392 = vpop.f32.mrf.mxu0
        %v1393 = vpop.f32.mrf.mxu0
        %1394 = vdwg.mxu0
        %v1395 = vpack.c.bf16 %v1324, %v1324
        %v1396 = vpack.c.bf16 %v1390, %v1390
        %v1398 = vsel %vm701, %v1395, 0
        %v1401 = vsel %vm701, %v1396, 0
        %1403 = vmatprep.subr.bf16.mxu0 0
        %1404 = vmatpush1.bf16.xpose.msra.mxu0 0
        %1405 = vmatprep.subr.bf16.mxu0 0
        %1406 = vmatpush1.bf16.xpose.msra.mxu0 0
        %1407 = vmatprep.subr.bf16.mxu0 0
        %1408 = vmatpush1.bf16.xpose.msra.mxu0 0
        %1409 = vmatprep.subr.bf16.mxu0 0
        %1410 = vmatpush1.bf16.xpose.msra.mxu0 0
        %1411 = vmatprep.subr.bf16.mxu0 0
        %1412 = vmatpush1.bf16.xpose.msra.mxu0 0
        %1413 = vmatprep.subr.bf16.mxu0 0
        %1414 = vmatpush1.bf16.xpose.msra.mxu0 0
        %1415 = vmatprep.subr.bf16.mxu0 0
        %1416 = vmatpush1.bf16.xpose.msra.mxu0 0
        %1417 = vmatprep.subr.bf16.mxu0 0
        %1418 = vmatpush1.bf16.xpose.msra.mxu0 %v1401
        %1419 = vmatprep.subr.bf16.mxu0 0
        %1420 = vmatpush2.bf16.xpose.msra.mxu0 0
        %1421 = vmatprep.subr.bf16.mxu0 0
        %1422 = vmatpush2.bf16.xpose.msra.mxu0 0
        %1423 = vmatprep.subr.bf16.mxu0 0
        %1424 = vmatpush2.bf16.xpose.msra.mxu0 0
        %1425 = vmatprep.subr.bf16.mxu0 0
        %1426 = vmatpush2.bf16.xpose.msra.mxu0 0
        %1427 = vmatprep.subr.bf16.mxu0 0
        %1428 = vmatpush2.bf16.xpose.msra.mxu0 0
        %1429 = vmatprep.subr.bf16.mxu0 0
        %1430 = vmatpush2.bf16.xpose.msra.mxu0 0
        %1431 = vmatprep.subr.bf16.mxu0 0
        %1432 = vmatpush2.bf16.xpose.msra.mxu0 0
        %1433 = vmatprep.subr.bf16.mxu0 0
        %1434 = vmatpush2.bf16.xpose.msra.mxu0 0
        %1435 = vmatprep.mubr.bf16.mxu0 0
        %1436 = vmatmul.mubr.bf16.gmra.mxu0 %v1398
        %v1437 = vpop.f32.mrf.mxu0
        %v1438 = vadd.f32 0.0, %v1437
        %v1439 = vpop.f32.mrf.mxu0
        %v1440 = vpop.f32.mrf.mxu0
        %v1441 = vpop.f32.mrf.mxu0
        %1442 = vdwg.mxu0
        %1444 = vrot.lane.b32.xlu0 %v1395, 120
        %v1445 = vpop.permute.xlu0 %1444
        %1447 = vrot.lane.b32.xlu0 %v1396, 120
        %v1448 = vpop.permute.xlu0 %1447
        %v1450 = vsel %vm701, %v1445, 0
        %v1453 = vsel %vm701, %v1448, 0
        %1455 = vmatprep.subr.bf16.mxu0 0
        %1456 = vmatpush1.bf16.xpose.msra.mxu0 0
        %1457 = vmatprep.subr.bf16.mxu0 0
        %1458 = vmatpush1.bf16.xpose.msra.mxu0 0
        %1459 = vmatprep.subr.bf16.mxu0 0
        %1460 = vmatpush1.bf16.xpose.msra.mxu0 0
        %1461 = vmatprep.subr.bf16.mxu0 0
        %1462 = vmatpush1.bf16.xpose.msra.mxu0 0
        %1463 = vmatprep.subr.bf16.mxu0 0
        %1464 = vmatpush1.bf16.xpose.msra.mxu0 0
        %1465 = vmatprep.subr.bf16.mxu0 0
        %1466 = vmatpush1.bf16.xpose.msra.mxu0 0
        %1467 = vmatprep.subr.bf16.mxu0 0
        %1468 = vmatpush1.bf16.xpose.msra.mxu0 0
        %1469 = vmatprep.subr.bf16.mxu0 0
        %1470 = vmatpush1.bf16.xpose.msra.mxu0 %v1453
        %1471 = vmatprep.subr.bf16.mxu0 0
        %1472 = vmatpush2.bf16.xpose.msra.mxu0 0
        %1473 = vmatprep.subr.bf16.mxu0 0
        %1474 = vmatpush2.bf16.xpose.msra.mxu0 0
        %1475 = vmatprep.subr.bf16.mxu0 0
        %1476 = vmatpush2.bf16.xpose.msra.mxu0 0
        %1477 = vmatprep.subr.bf16.mxu0 0
        %1478 = vmatpush2.bf16.xpose.msra.mxu0 0
        %1479 = vmatprep.subr.bf16.mxu0 0
        %1480 = vmatpush2.bf16.xpose.msra.mxu0 0
        %1481 = vmatprep.subr.bf16.mxu0 0
        %1482 = vmatpush2.bf16.xpose.msra.mxu0 0
        %1483 = vmatprep.subr.bf16.mxu0 0
        %1484 = vmatpush2.bf16.xpose.msra.mxu0 0
        %1485 = vmatprep.subr.bf16.mxu0 0
        %1486 = vmatpush2.bf16.xpose.msra.mxu0 0
        %1487 = vmatprep.mubr.bf16.mxu0 0
        %1488 = vmatmul.mubr.bf16.gmra.mxu0 %v1450
        %v1489 = vpop.f32.mrf.mxu0
        %v1490 = vadd.f32 0.0, %v1489
        %v1491 = vpop.f32.mrf.mxu0
        %v1492 = vpop.f32.mrf.mxu0
        %v1493 = vpop.f32.mrf.mxu0
        %1494 = vdwg.mxu0
        %1495 = vrot.lane.b32.xlu0 %v1395, 112
        %v1496 = vpop.permute.xlu0 %1495
        %1497 = vrot.lane.b32.xlu0 %v1396, 112
        %v1498 = vpop.permute.xlu0 %1497
        %v1500 = vsel %vm701, %v1496, 0
        %v1503 = vsel %vm701, %v1498, 0
        %1505 = vmatprep.subr.bf16.mxu0 0
        %1506 = vmatpush1.bf16.xpose.msra.mxu0 0
        %1507 = vmatprep.subr.bf16.mxu0 0
        %1508 = vmatpush1.bf16.xpose.msra.mxu0 0
        %1509 = vmatprep.subr.bf16.mxu0 0
        %1510 = vmatpush1.bf16.xpose.msra.mxu0 0
        %1511 = vmatprep.subr.bf16.mxu0 0
        %1512 = vmatpush1.bf16.xpose.msra.mxu0 0
        %1513 = vmatprep.subr.bf16.mxu0 0
        %1514 = vmatpush1.bf16.xpose.msra.mxu0 0
        %1515 = vmatprep.subr.bf16.mxu0 0
        %1516 = vmatpush1.bf16.xpose.msra.mxu0 0
        %1517 = vmatprep.subr.bf16.mxu0 0
        %1518 = vmatpush1.bf16.xpose.msra.mxu0 0
        %1519 = vmatprep.subr.bf16.mxu0 0
        %1520 = vmatpush1.bf16.xpose.msra.mxu0 %v1503
        %1521 = vmatprep.subr.bf16.mxu0 0
        %1522 = vmatpush2.bf16.xpose.msra.mxu0 0
        %1523 = vmatprep.subr.bf16.mxu0 0
        %1524 = vmatpush2.bf16.xpose.msra.mxu0 0
        %1525 = vmatprep.subr.bf16.mxu0 0
        %1526 = vmatpush2.bf16.xpose.msra.mxu0 0
        %1527 = vmatprep.subr.bf16.mxu0 0
        %1528 = vmatpush2.bf16.xpose.msra.mxu0 0
        %1529 = vmatprep.subr.bf16.mxu0 0
        %1530 = vmatpush2.bf16.xpose.msra.mxu0 0
        %1531 = vmatprep.subr.bf16.mxu0 0
        %1532 = vmatpush2.bf16.xpose.msra.mxu0 0
        %1533 = vmatprep.subr.bf16.mxu0 0
        %1534 = vmatpush2.bf16.xpose.msra.mxu0 0
        %1535 = vmatprep.subr.bf16.mxu0 0
        %1536 = vmatpush2.bf16.xpose.msra.mxu0 0
        %1537 = vmatprep.mubr.bf16.mxu0 0
        %1538 = vmatmul.mubr.bf16.gmra.mxu0 %v1500
        %v1539 = vpop.f32.mrf.mxu0
        %v1540 = vadd.f32 0.0, %v1539
        %v1541 = vpop.f32.mrf.mxu0
        %v1542 = vpop.f32.mrf.mxu0
        %v1543 = vpop.f32.mrf.mxu0
        %1544 = vdwg.mxu0
        %1545 = vrot.lane.b32.xlu0 %v1395, 104
        %v1546 = vpop.permute.xlu0 %1545
        %1547 = vrot.lane.b32.xlu0 %v1396, 104
        %v1548 = vpop.permute.xlu0 %1547
        %v1550 = vsel %vm701, %v1546, 0
        %v1553 = vsel %vm701, %v1548, 0
        %1555 = vmatprep.subr.bf16.mxu0 0
        %1556 = vmatpush1.bf16.xpose.msra.mxu0 0
        %1557 = vmatprep.subr.bf16.mxu0 0
        %1558 = vmatpush1.bf16.xpose.msra.mxu0 0
        %1559 = vmatprep.subr.bf16.mxu0 0
        %1560 = vmatpush1.bf16.xpose.msra.mxu0 0
        %1561 = vmatprep.subr.bf16.mxu0 0
        %1562 = vmatpush1.bf16.xpose.msra.mxu0 0
        %1563 = vmatprep.subr.bf16.mxu0 0
        %1564 = vmatpush1.bf16.xpose.msra.mxu0 0
        %1565 = vmatprep.subr.bf16.mxu0 0
        %1566 = vmatpush1.bf16.xpose.msra.mxu0 0
        %1567 = vmatprep.subr.bf16.mxu0 0
        %1568 = vmatpush1.bf16.xpose.msra.mxu0 0
        %1569 = vmatprep.subr.bf16.mxu0 0
        %1570 = vmatpush1.bf16.xpose.msra.mxu0 %v1553
        %1571 = vmatprep.subr.bf16.mxu0 0
        %1572 = vmatpush2.bf16.xpose.msra.mxu0 0
        %1573 = vmatprep.subr.bf16.mxu0 0
        %1574 = vmatpush2.bf16.xpose.msra.mxu0 0
        %1575 = vmatprep.subr.bf16.mxu0 0
        %1576 = vmatpush2.bf16.xpose.msra.mxu0 0
        %1577 = vmatprep.subr.bf16.mxu0 0
        %1578 = vmatpush2.bf16.xpose.msra.mxu0 0
        %1579 = vmatprep.subr.bf16.mxu0 0
        %1580 = vmatpush2.bf16.xpose.msra.mxu0 0
        %1581 = vmatprep.subr.bf16.mxu0 0
        %1582 = vmatpush2.bf16.xpose.msra.mxu0 0
        %1583 = vmatprep.subr.bf16.mxu0 0
        %1584 = vmatpush2.bf16.xpose.msra.mxu0 0
        %1585 = vmatprep.subr.bf16.mxu0 0
        %1586 = vmatpush2.bf16.xpose.msra.mxu0 0
        %1587 = vmatprep.mubr.bf16.mxu0 0
        %1588 = vmatmul.mubr.bf16.gmra.mxu0 %v1550
        %v1589 = vpop.f32.mrf.mxu0
        %v1590 = vadd.f32 0.0, %v1589
        %v1591 = vpop.f32.mrf.mxu0
        %v1592 = vpop.f32.mrf.mxu0
        %v1593 = vpop.f32.mrf.mxu0
        %1594 = vdwg.mxu0
        %v1595 = vmul.f32 %v1438, 0.35355338
        %v1596 = vmul.f32 %v1490, 0.35355338
        %v1597 = vmul.f32 %v1540, 0.35355338
        %v1598 = vmul.f32 %v1590, 0.35355338
        %v1599 = vsel %vm1264, 1, 0
        %v1600 = vlaneseq
        %v1601 = vshrl.u32 %v1600, 7
        %v1602 = vsub.s32 0, %v1601
        %v1603 = vrot.slane %v1599, %v1602
        %vm1604 = vcmp.eq.s32.totalorder %v1603, 1
        %v1605 = vsel %vm1604, -1e+30, %v1595
        %v1606 = vsel %vm1604, -1e+30, %v1596
        %v1607 = vsel %vm1604, -1e+30, %v1597
        %v1608 = vsel %vm1604, -1e+30, %v1598
        %v1609 = vsel %vm701, %v1605, -inf
        %1610 = vmax.xlane.f32.xlu0 %v1609
        %v1611 = vpop.xlane.xlu0 %1610
        %v1612 = vsel %vm701, %v1606, -inf
        %1613 = vmax.xlane.f32.xlu0 %v1612
        %v1614 = vpop.xlane.xlu0 %1613
        %v1615 = vsel %vm701, %v1607, -inf
        %1616 = vmax.xlane.f32.xlu0 %v1615
        %v1617 = vpop.xlane.xlu0 %1616
        %v1618 = vsel %vm701, %v1608, -inf
        %1619 = vmax.xlane.f32.xlu0 %v1618
        %v1620 = vpop.xlane.xlu0 %1619
        %v1621 = vsub.f32 %v1605, %v1611
        %v1622 = vsub.f32 %v1606, %v1614
        %v1623 = vsub.f32 %v1607, %v1617
        %v1624 = vsub.f32 %v1608, %v1620
        %v1625 = vmul.f32 %v1621, 1.442695
        %v1626 = vpow.pop %v1625
        %v1627 = vmul.f32 %v1622, 1.442695
        %v1628 = vpow.pop %v1627
        %v1629 = vmul.f32 %v1623, 1.442695
        %v1630 = vpow.pop %v1629
        %v1631 = vmul.f32 %v1624, 1.442695
        %v1632 = vpow.pop %v1631
        %v1633 = vsel %vm701, %v1626, 0.0
        %1634 = vadd.xlane.f32.xlu0 %v1633
        %v1635 = vpop.xlane.xlu0 %1634
        %v1636 = vsel %vm701, %v1628, 0.0
        %1637 = vadd.xlane.f32.xlu0 %v1636
        %v1638 = vpop.xlane.xlu0 %1637
        %v1639 = vsel %vm701, %v1630, 0.0
        %1640 = vadd.xlane.f32.xlu0 %v1639
        %v1641 = vpop.xlane.xlu0 %1640
        %v1642 = vsel %vm701, %v1632, 0.0
        %1643 = vadd.xlane.f32.xlu0 %v1642
        %v1644 = vpop.xlane.xlu0 %1643
        %v1645 = vrcp.pop %v1635
        %v1646 = vmul.f32 %v1626, %v1645
        %v1647 = vrcp.pop %v1638
        %v1648 = vmul.f32 %v1628, %v1647
        %v1649 = vrcp.pop %v1641
        %v1650 = vmul.f32 %v1630, %v1649
        %v1651 = vrcp.pop %v1644
        %v1652 = vmul.f32 %v1632, %v1651
        %v1653 = vpack.c.bf16 %v1646, %v1646
        %v1654 = vpack.c.bf16 %v1648, %v1648
        %v1655 = vpack.c.bf16 %v1650, %v1650
        %v1656 = vpack.c.bf16 %v1652, %v1652
        %1657 = vst.msk [vmem:[%s591] sm:$0xf] %vm956, %v1653
        %1658 = vst.msk [vmem:[%s591 + $0x4] sm:$0xf] %vm956, %v1654
        %1659 = vst.msk [vmem:[%s591 + $0x8] sm:$0xf] %vm956, %v1655
        %1660 = vst.msk [vmem:[%s591 + $0xc] sm:$0xf] %vm956, %v1656
        %1661 = vrot.lane.b32.xlu0 %v1396, 96
        %v1662 = vpop.permute.xlu0 %1661
        %v1664 = vsel %vm701, %v1653, 0
        %v1667 = vsel %vm966, %v1662, 0
        %1669 = vmatprep.subr.bf16.mxu0 0
        %1670 = vmatpush1.bf16.msra.mxu0 0
        %1671 = vmatprep.subr.bf16.mxu0 0
        %1672 = vmatpush1.bf16.msra.mxu0 0
        %1673 = vmatprep.subr.bf16.mxu0 0
        %1674 = vmatpush1.bf16.msra.mxu0 0
        %1675 = vmatprep.subr.bf16.mxu0 0
        %1676 = vmatpush1.bf16.msra.mxu0 0
        %1677 = vmatprep.subr.bf16.mxu0 0
        %1678 = vmatpush1.bf16.msra.mxu0 0
        %1679 = vmatprep.subr.bf16.mxu0 0
        %1680 = vmatpush1.bf16.msra.mxu0 0
        %1681 = vmatprep.subr.bf16.mxu0 0
        %1682 = vmatpush1.bf16.msra.mxu0 0
        %1683 = vmatprep.subr.bf16.mxu0 0
        %1684 = vmatpush1.bf16.msra.mxu0 %v1667
        %1685 = vmatprep.subr.bf16.mxu0 0
        %1686 = vmatpush2.bf16.msra.mxu0 0
        %1687 = vmatprep.subr.bf16.mxu0 0
        %1688 = vmatpush2.bf16.msra.mxu0 0
        %1689 = vmatprep.subr.bf16.mxu0 0
        %1690 = vmatpush2.bf16.msra.mxu0 0
        %1691 = vmatprep.subr.bf16.mxu0 0
        %1692 = vmatpush2.bf16.msra.mxu0 0
        %1693 = vmatprep.subr.bf16.mxu0 0
        %1694 = vmatpush2.bf16.msra.mxu0 0
        %1695 = vmatprep.subr.bf16.mxu0 0
        %1696 = vmatpush2.bf16.msra.mxu0 0
        %1697 = vmatprep.subr.bf16.mxu0 0
        %1698 = vmatpush2.bf16.msra.mxu0 0
        %1699 = vmatprep.subr.bf16.mxu0 0
        %1700 = vmatpush2.bf16.msra.mxu0 0
        %1701 = vmatprep.mubr.bf16.mxu0 0
        %1702 = vmatmul.mubr.bf16.gmra.mxu0 %v1664
        %v1703 = vpop.f32.mrf.mxu0
        %v1704 = vadd.f32 0.0, %v1703
        %v1705 = vpop.f32.mrf.mxu0
        %v1706 = vpop.f32.mrf.mxu0
        %v1707 = vpop.f32.mrf.mxu0
        %1708 = vdwg.mxu0
        %1709 = vst.msk [vmem:[#allocation2] sm:$0xff] %vm701, %v1704
        %1710 = vrot.lane.b32.xlu0 %v1396, 88
        %v1711 = vpop.permute.xlu0 %1710
        %v1713 = vsel %vm701, %v1654, 0
        %v1716 = vsel %vm966, %v1711, 0
        %1718 = vmatprep.subr.bf16.mxu0 0
        %1719 = vmatpush1.bf16.msra.mxu0 0
        %1720 = vmatprep.subr.bf16.mxu0 0
        %1721 = vmatpush1.bf16.msra.mxu0 0
        %1722 = vmatprep.subr.bf16.mxu0 0
        %1723 = vmatpush1.bf16.msra.mxu0 0
        %1724 = vmatprep.subr.bf16.mxu0 0
        %1725 = vmatpush1.bf16.msra.mxu0 0
        %1726 = vmatprep.subr.bf16.mxu0 0
        %1727 = vmatpush1.bf16.msra.mxu0 0
        %1728 = vmatprep.subr.bf16.mxu0 0
        %1729 = vmatpush1.bf16.msra.mxu0 0
        %1730 = vmatprep.subr.bf16.mxu0 0
        %1731 = vmatpush1.bf16.msra.mxu0 0
        %1732 = vmatprep.subr.bf16.mxu0 0
        %1733 = vmatpush1.bf16.msra.mxu0 %v1716
        %1734 = vmatprep.subr.bf16.mxu0 0
        %1735 = vmatpush2.bf16.msra.mxu0 0
        %1736 = vmatprep.subr.bf16.mxu0 0
        %1737 = vmatpush2.bf16.msra.mxu0 0
        %1738 = vmatprep.subr.bf16.mxu0 0
        %1739 = vmatpush2.bf16.msra.mxu0 0
        %1740 = vmatprep.subr.bf16.mxu0 0
        %1741 = vmatpush2.bf16.msra.mxu0 0
        %1742 = vmatprep.subr.bf16.mxu0 0
        %1743 = vmatpush2.bf16.msra.mxu0 0
        %1744 = vmatprep.subr.bf16.mxu0 0
        %1745 = vmatpush2.bf16.msra.mxu0 0
        %1746 = vmatprep.subr.bf16.mxu0 0
        %1747 = vmatpush2.bf16.msra.mxu0 0
        %1748 = vmatprep.subr.bf16.mxu0 0
        %1749 = vmatpush2.bf16.msra.mxu0 0
        %1750 = vmatprep.mubr.bf16.mxu0 0
        %1751 = vmatmul.mubr.bf16.gmra.mxu0 %v1713
        %v1752 = vpop.f32.mrf.mxu0
        %v1753 = vadd.f32 0.0, %v1752
        %v1754 = vpop.f32.mrf.mxu0
        %v1755 = vpop.f32.mrf.mxu0
        %v1756 = vpop.f32.mrf.mxu0
        %1757 = vdwg.mxu0
        %1759 = vrot.lane.b32.xlu0 %v1753, 8
        %v1760 = vpop.permute.xlu0 %1759
        %1762 = vst.msk [vmem:[#allocation2] sm:$0xff] %vm1063, %v1760
        %1763 = vrot.lane.b32.xlu0 %v1396, 80
        %v1764 = vpop.permute.xlu0 %1763
        %v1766 = vsel %vm701, %v1655, 0
        %v1769 = vsel %vm966, %v1764, 0
        %1771 = vmatprep.subr.bf16.mxu0 0
        %1772 = vmatpush1.bf16.msra.mxu0 0
        %1773 = vmatprep.subr.bf16.mxu0 0
        %1774 = vmatpush1.bf16.msra.mxu0 0
        %1775 = vmatprep.subr.bf16.mxu0 0
        %1776 = vmatpush1.bf16.msra.mxu0 0
        %1777 = vmatprep.subr.bf16.mxu0 0
        %1778 = vmatpush1.bf16.msra.mxu0 0
        %1779 = vmatprep.subr.bf16.mxu0 0
        %1780 = vmatpush1.bf16.msra.mxu0 0
        %1781 = vmatprep.subr.bf16.mxu0 0
        %1782 = vmatpush1.bf16.msra.mxu0 0
        %1783 = vmatprep.subr.bf16.mxu0 0
        %1784 = vmatpush1.bf16.msra.mxu0 0
        %1785 = vmatprep.subr.bf16.mxu0 0
        %1786 = vmatpush1.bf16.msra.mxu0 %v1769
        %1787 = vmatprep.subr.bf16.mxu0 0
        %1788 = vmatpush2.bf16.msra.mxu0 0
        %1789 = vmatprep.subr.bf16.mxu0 0
        %1790 = vmatpush2.bf16.msra.mxu0 0
        %1791 = vmatprep.subr.bf16.mxu0 0
        %1792 = vmatpush2.bf16.msra.mxu0 0
        %1793 = vmatprep.subr.bf16.mxu0 0
        %1794 = vmatpush2.bf16.msra.mxu0 0
        %1795 = vmatprep.subr.bf16.mxu0 0
        %1796 = vmatpush2.bf16.msra.mxu0 0
        %1797 = vmatprep.subr.bf16.mxu0 0
        %1798 = vmatpush2.bf16.msra.mxu0 0
        %1799 = vmatprep.subr.bf16.mxu0 0
        %1800 = vmatpush2.bf16.msra.mxu0 0
        %1801 = vmatprep.subr.bf16.mxu0 0
        %1802 = vmatpush2.bf16.msra.mxu0 0
        %1803 = vmatprep.mubr.bf16.mxu0 0
        %1804 = vmatmul.mubr.bf16.gmra.mxu0 %v1766
        %v1805 = vpop.f32.mrf.mxu0
        %v1806 = vadd.f32 0.0, %v1805
        %v1807 = vpop.f32.mrf.mxu0
        %v1808 = vpop.f32.mrf.mxu0
        %v1809 = vpop.f32.mrf.mxu0
        %1810 = vdwg.mxu0
        %1812 = vrot.lane.b32.xlu0 %v1806, 16
        %v1813 = vpop.permute.xlu0 %1812
        %1815 = vst.msk [vmem:[#allocation2] sm:$0xff] %vm1117, %v1813
        %1816 = vrot.lane.b32.xlu0 %v1396, 72
        %v1817 = vpop.permute.xlu0 %1816
        %v1819 = vsel %vm701, %v1656, 0
        %v1822 = vsel %vm966, %v1817, 0
        %1824 = vmatprep.subr.bf16.mxu0 0
        %1825 = vmatpush1.bf16.msra.mxu0 0
        %1826 = vmatprep.subr.bf16.mxu0 0
        %1827 = vmatpush1.bf16.msra.mxu0 0
        %1828 = vmatprep.subr.bf16.mxu0 0
        %1829 = vmatpush1.bf16.msra.mxu0 0
        %1830 = vmatprep.subr.bf16.mxu0 0
        %1831 = vmatpush1.bf16.msra.mxu0 0
        %1832 = vmatprep.subr.bf16.mxu0 0
        %1833 = vmatpush1.bf16.msra.mxu0 0
        %1834 = vmatprep.subr.bf16.mxu0 0
        %1835 = vmatpush1.bf16.msra.mxu0 0
        %1836 = vmatprep.subr.bf16.mxu0 0
        %1837 = vmatpush1.bf16.msra.mxu0 0
        %1838 = vmatprep.subr.bf16.mxu0 0
        %1839 = vmatpush1.bf16.msra.mxu0 %v1822
        %1840 = vmatprep.subr.bf16.mxu0 0
        %1841 = vmatpush2.bf16.msra.mxu0 0
        %1842 = vmatprep.subr.bf16.mxu0 0
        %1843 = vmatpush2.bf16.msra.mxu0 0
        %1844 = vmatprep.subr.bf16.mxu0 0
        %1845 = vmatpush2.bf16.msra.mxu0 0
        %1846 = vmatprep.subr.bf16.mxu0 0
        %1847 = vmatpush2.bf16.msra.mxu0 0
        %1848 = vmatprep.subr.bf16.mxu0 0
        %1849 = vmatpush2.bf16.msra.mxu0 0
        %1850 = vmatprep.subr.bf16.mxu0 0
        %1851 = vmatpush2.bf16.msra.mxu0 0
        %1852 = vmatprep.subr.bf16.mxu0 0
        %1853 = vmatpush2.bf16.msra.mxu0 0
        %1854 = vmatprep.subr.bf16.mxu0 0
        %1855 = vmatpush2.bf16.msra.mxu0 0
        %1856 = vmatprep.mubr.bf16.mxu0 0
        %1857 = vmatmul.mubr.bf16.gmra.mxu0 %v1819
        %v1858 = vpop.f32.mrf.mxu0
        %v1859 = vadd.f32 0.0, %v1858
        %v1860 = vpop.f32.mrf.mxu0
        %v1861 = vpop.f32.mrf.mxu0
        %v1862 = vpop.f32.mrf.mxu0
        %1863 = vdwg.mxu0
        %1865 = vrot.lane.b32.xlu0 %v1859, 24
        %v1866 = vpop.permute.xlu0 %1865
        %1868 = vst.msk [vmem:[#allocation2] sm:$0xff] %vm1171, %v1866
        %v1869 = vld [vmem:[#allocation2] sm:$0xff]
        %v1870 = vpack.c.bf16 %v1869, %v1869
        %v1871 = vld [vmem:[%s10] sm:$0xf]
        %v1872 = vld [vmem:[%s10 + $0x4] sm:$0xf]
        %v1873 = vld [vmem:[%s10 + $0x8] sm:$0xf]
        %v1874 = vld [vmem:[%s10 + $0xc] sm:$0xf]
        %v1875 = vlaneseq
        %v1876 = vshrl.u32 %v1875, 7
        %v1877 = vsub.s32 4, %v1876
        %v1878 = vrot.slane %v614, %v1877
        %v1883 = vunpack.c.l.b16 %v1871
        %v1884 = vunpack.c.l.b16 %v1872
        %v1885 = vunpack.c.l.b16 %v1873
        %v1886 = vunpack.c.l.b16 %v1874
        %v1887 = vpack.c.b16 %v1884, %v1883
        %v1888 = vpack.c.b16 %v1886, %v1885
        %v1892 = vsel %vm653, %v1870, 0
        %1894 = vmatprep.subr.bf16.mxu0 0
        %1895 = vmatpush1.bf16.msra.mxu0 0
        %1896 = vmatprep.subr.bf16.mxu0 0
        %1897 = vmatpush1.bf16.msra.mxu0 0
        %1898 = vmatprep.subr.bf16.mxu0 0
        %1899 = vmatpush1.bf16.msra.mxu0 0
        %1900 = vmatprep.subr.bf16.mxu0 0
        %1901 = vmatpush1.bf16.msra.mxu0 0
        %1902 = vmatprep.subr.bf16.mxu0 0
        %1903 = vmatpush1.bf16.msra.mxu0 0
        %1904 = vmatprep.subr.bf16.mxu0 0
        %1905 = vmatpush1.bf16.msra.mxu0 0
        %1906 = vmatprep.subr.bf16.mxu0 0
        %1907 = vmatpush1.bf16.msra.mxu0 %v1888
        %1908 = vmatprep.subr.bf16.mxu0 0
        %1909 = vmatpush1.bf16.msra.mxu0 %v1887
        %1910 = vmatprep.subr.bf16.mxu0 0
        %1911 = vmatpush2.bf16.msra.mxu0 0
        %1912 = vmatprep.subr.bf16.mxu0 0
        %1913 = vmatpush2.bf16.msra.mxu0 0
        %1914 = vmatprep.subr.bf16.mxu0 0
        %1915 = vmatpush2.bf16.msra.mxu0 0
        %1916 = vmatprep.subr.bf16.mxu0 0
        %1917 = vmatpush2.bf16.msra.mxu0 0
        %1918 = vmatprep.subr.bf16.mxu0 0
        %1919 = vmatpush2.bf16.msra.mxu0 0
        %1920 = vmatprep.subr.bf16.mxu0 0
        %1921 = vmatpush2.bf16.msra.mxu0 0
        %1922 = vmatprep.subr.bf16.mxu0 0
        %1923 = vmatpush2.bf16.msra.mxu0 0
        %1924 = vmatprep.subr.bf16.mxu0 0
        %1925 = vmatpush2.bf16.msra.mxu0 0
        %1926 = vmatprep.mubr.bf16.mxu0 0
        %1927 = vmatmul.mubr.bf16.gmra.mxu0 %v1892
        %v1928 = vpop.f32.mrf.mxu0
        %v1929 = vadd.f32 %v1878, %v1928
        %v1930 = vpop.f32.mrf.mxu0
        %v1931 = vpop.f32.mrf.mxu0
        %v1932 = vpop.f32.mrf.mxu0
        %1933 = vdwg.mxu0
        %v1934 = vadd.f32 %v1929, %v1262
        %v1935 = vsel %vm653, %v1934, 0.0
        %1936 = vadd.xlane.f32.xlu0 %v1935
        %v1937 = vpop.xlane.xlu0 %1936
        %v1938 = vmul.f32 %v1937, %v1242
        %v1939 = vsub.f32 %v1934, %v1938
        %v1940 = vmul.f32 %v1939, %v1939
        %v1941 = vsel %vm653, %v1940, 0.0
        %1942 = vadd.xlane.f32.xlu0 %v1941
        %v1943 = vpop.xlane.xlu0 %1942
        %v1944 = vmul.f32 %v1943, %v1242
        %v1945 = vadd.f32 %v1944, 1e-05
        %v1946 = vrsqrt.pop %v1945
        %v1947 = vmul.f32 %v1939, %v1946
        %v1948 = vlaneseq
        %v1949 = vshrl.u32 %v1948, 7
        %v1950 = vsub.s32 5, %v1949
        %v1951 = vrot.slane %v614, %v1950
        %v1952 = vmul.f32 %v1947, %v1951
        %v1953 = vlaneseq
        %v1954 = vshrl.u32 %v1953, 7
        %v1955 = vsub.s32 6, %v1954
        %v1956 = vrot.slane %v614, %v1955
        %v1957 = vadd.f32 %v1952, %v1956
        %v1958 = vpack.c.bf16 %v1957, %v1957
        %v1959 = vld [vmem:[%s11] sm:$0xf]
        %v1960 = vld [vmem:[%s11 + $0x4] sm:$0xf]
        %v1961 = vld [vmem:[%s11 + $0x8] sm:$0xf]
        %v1962 = vld [vmem:[%s11 + $0xc] sm:$0xf]
        %v1963 = vld [vmem:[%s12] sm:$0x1]
        %v1965 = vlaneseq
        %v1966 = vshrl.u32 %v1965, 7
        %v1967 = vsub.s32 0, %v1966
        %v1968 = vrot.slane %v1963, %v1967
        %v1974 = vunpack.c.l.b16 %v1959
        %v1975 = vunpack.c.l.b16 %v1960
        %v1976 = vunpack.c.l.b16 %v1961
        %v1977 = vunpack.c.l.b16 %v1962
        %v1978 = vpack.c.b16 %v1975, %v1974
        %v1979 = vpack.c.b16 %v1977, %v1976
        %v1983 = vsel %vm653, %v1958, 0
        %1985 = vmatprep.subr.bf16.mxu0 0
        %1986 = vmatpush1.bf16.msra.mxu0 0
        %1987 = vmatprep.subr.bf16.mxu0 0
        %1988 = vmatpush1.bf16.msra.mxu0 0
        %1989 = vmatprep.subr.bf16.mxu0 0
        %1990 = vmatpush1.bf16.msra.mxu0 0
        %1991 = vmatprep.subr.bf16.mxu0 0
        %1992 = vmatpush1.bf16.msra.mxu0 0
        %1993 = vmatprep.subr.bf16.mxu0 0
        %1994 = vmatpush1.bf16.msra.mxu0 0
        %1995 = vmatprep.subr.bf16.mxu0 0
        %1996 = vmatpush1.bf16.msra.mxu0 0
        %1997 = vmatprep.subr.bf16.mxu0 0
        %1998 = vmatpush1.bf16.msra.mxu0 %v1979
        %1999 = vmatprep.subr.bf16.mxu0 0
        %2000 = vmatpush1.bf16.msra.mxu0 %v1978
        %2001 = vmatprep.subr.bf16.mxu0 0
        %2002 = vmatpush2.bf16.msra.mxu0 0
        %2003 = vmatprep.subr.bf16.mxu0 0
        %2004 = vmatpush2.bf16.msra.mxu0 0
        %2005 = vmatprep.subr.bf16.mxu0 0
        %2006 = vmatpush2.bf16.msra.mxu0 0
        %2007 = vmatprep.subr.bf16.mxu0 0
        %2008 = vmatpush2.bf16.msra.mxu0 0
        %2009 = vmatprep.subr.bf16.mxu0 0
        %2010 = vmatpush2.bf16.msra.mxu0 0
        %2011 = vmatprep.subr.bf16.mxu0 0
        %2012 = vmatpush2.bf16.msra.mxu0 0
        %2013 = vmatprep.subr.bf16.mxu0 0
        %2014 = vmatpush2.bf16.msra.mxu0 0
        %2015 = vmatprep.subr.bf16.mxu0 0
        %2016 = vmatpush2.bf16.msra.mxu0 0
        %2017 = vmatprep.mubr.bf16.mxu0 0
        %2018 = vmatmul.mubr.bf16.gmra.mxu0 %v1983
        %v2019 = vpop.f32.mrf.mxu0
        %v2020 = vadd.f32 %v1968, %v2019
        %v2021 = vpop.f32.mrf.mxu0
        %v2022 = vpop.f32.mrf.mxu0
        %v2023 = vpop.f32.mrf.mxu0
        %2024 = vdwg.mxu0
        %v2025 = vmax.f32 %v2020, 0.0
        %v2026 = vpack.c.bf16 %v2025, %v2025
        %v2027 = vld [vmem:[%s13] sm:$0xf]
        %v2028 = vld [vmem:[%s13 + $0x4] sm:$0xf]
        %v2029 = vld [vmem:[%s13 + $0x8] sm:$0xf]
        %v2030 = vld [vmem:[%s13 + $0xc] sm:$0xf]
        %v2031 = vld [vmem:[%s13 + $0x10] sm:$0xf]
        %v2032 = vld [vmem:[%s13 + $0x14] sm:$0xf]
        %v2033 = vld [vmem:[%s13 + $0x18] sm:$0xf]
        %v2034 = vld [vmem:[%s13 + $0x1c] sm:$0xf]
        %v2035 = vlaneseq
        %v2036 = vshrl.u32 %v2035, 7
        %v2037 = vsub.s32 7, %v2036
        %v2038 = vrot.slane %v614, %v2037
        %v2047 = vunpack.c.l.b16 %v2027
        %v2048 = vunpack.c.l.b16 %v2028
        %v2049 = vunpack.c.l.b16 %v2029
        %v2050 = vunpack.c.l.b16 %v2030
        %v2051 = vunpack.c.l.b16 %v2031
        %v2052 = vunpack.c.l.b16 %v2032
        %v2053 = vunpack.c.l.b16 %v2033
        %v2054 = vunpack.c.l.b16 %v2034
        %v2055 = vpack.c.b16 %v2048, %v2047
        %v2056 = vpack.c.b16 %v2050, %v2049
        %v2057 = vpack.c.b16 %v2052, %v2051
        %v2058 = vpack.c.b16 %v2054, %v2053
        %vm2063 = vcmask 523264
        %v2065 = vsel %vm2063, %v2026, 0
        %2067 = vmatprep.subr.bf16.mxu0 0
        %2068 = vmatpush1.bf16.msra.mxu0 0
        %2069 = vmatprep.subr.bf16.mxu0 0
        %2070 = vmatpush1.bf16.msra.mxu0 0
        %2071 = vmatprep.subr.bf16.mxu0 0
        %2072 = vmatpush1.bf16.msra.mxu0 0
        %2073 = vmatprep.subr.bf16.mxu0 0
        %2074 = vmatpush1.bf16.msra.mxu0 0
        %2075 = vmatprep.subr.bf16.mxu0 0
        %2076 = vmatpush1.bf16.msra.mxu0 %v2058
        %2077 = vmatprep.subr.bf16.mxu0 0
        %2078 = vmatpush1.bf16.msra.mxu0 %v2057
        %2079 = vmatprep.subr.bf16.mxu0 0
        %2080 = vmatpush1.bf16.msra.mxu0 %v2056
        %2081 = vmatprep.subr.bf16.mxu0 0
        %2082 = vmatpush1.bf16.msra.mxu0 %v2055
        %2083 = vmatprep.subr.bf16.mxu0 0
        %2084 = vmatpush2.bf16.msra.mxu0 0
        %2085 = vmatprep.subr.bf16.mxu0 0
        %2086 = vmatpush2.bf16.msra.mxu0 0
        %2087 = vmatprep.subr.bf16.mxu0 0
        %2088 = vmatpush2.bf16.msra.mxu0 0
        %2089 = vmatprep.subr.bf16.mxu0 0
        %2090 = vmatpush2.bf16.msra.mxu0 0
        %2091 = vmatprep.subr.bf16.mxu0 0
        %2092 = vmatpush2.bf16.msra.mxu0 0
        %2093 = vmatprep.subr.bf16.mxu0 0
        %2094 = vmatpush2.bf16.msra.mxu0 0
        %2095 = vmatprep.subr.bf16.mxu0 0
        %2096 = vmatpush2.bf16.msra.mxu0 0
        %2097 = vmatprep.subr.bf16.mxu0 0
        %2098 = vmatpush2.bf16.msra.mxu0 0
        %2099 = vmatprep.mubr.bf16.mxu0 0
        %2100 = vmatmul.mubr.bf16.gmra.mxu0 %v2065
        %v2101 = vpop.f32.mrf.mxu0
        %v2102 = vadd.f32 %v2038, %v2101
        %v2103 = vpop.f32.mrf.mxu0
        %v2104 = vpop.f32.mrf.mxu0
        %v2105 = vpop.f32.mrf.mxu0
        %2106 = vdwg.mxu0
        %v2107 = vadd.f32 %v2102, %v1957
        %v2108 = vsel %vm653, %v2107, 0.0
        %2109 = vadd.xlane.f32.xlu0 %v2108
        %v2110 = vpop.xlane.xlu0 %2109
        %v2111 = vmul.f32 %v2110, %v1242
        %v2112 = vsub.f32 %v2107, %v2111
        %v2113 = vmul.f32 %v2112, %v2112
        %v2114 = vsel %vm653, %v2113, 0.0
        %2115 = vadd.xlane.f32.xlu0 %v2114
        %v2116 = vpop.xlane.xlu0 %2115
        %v2117 = vmul.f32 %v2116, %v1242
        %v2118 = vadd.f32 %v2117, 1e-05
        %v2119 = vrsqrt.pop %v2118
        %v2120 = vmul.f32 %v2112, %v2119
        %v2121 = vlaneseq
        %v2122 = vshrl.u32 %v2121, 7
        %v2123 = vsub.s32 0, %v2122
        %v2124 = vrot.slane %v615, %v2123
        %v2125 = vmul.f32 %v2120, %v2124
        %v2126 = vlaneseq
        %v2127 = vshrl.u32 %v2126, 7
        %v2128 = vsub.s32 1, %v2127
        %v2129 = vrot.slane %v615, %v2128
        %v2130 = vadd.f32 %v2125, %v2129
        %v2131 = vpack.c.bf16 %v2130, %v2130
        %vm2132 = vcmask 257024
        %2133 = vst.msk [vmem:[%s609] sm:$0xf] %vm2132, %v2131
        %p2134 = scmp.lt.s32.totalorder %s35, 1
        %s2135 = scalar_select %p2134, %s35, 1
        %s2136 = smul.addr %s2135, 4
        %s2137 = scalar_lea.vmem %s15, %s2136
        %s2138 = sand.u32 %s404, 1
        %s2139 = scalar_lea.sflag [#allocation4], %s2138
        %s2140 = sand.u32 %s404, 1
        %s2141 = smul.addr %s2140, 16
        %s2142 = scalar_lea.vmem [#allocation3], %s2141
        %s2143 = sand.u32 %s430, 1
        %s2144 = scalar_lea.sflag [#allocation6], %s2143
        %s2145 = sand.u32 %s430, 1
        %s2146 = smul.addr %s2145, 16
        %s2147 = scalar_lea.vmem [#allocation5], %s2146
        // Predicated region
        $region81: #{transformer_forward.7} parent=79 // pred_check
          %p2148 = pneg %p388
        $region82: #{transformer_forward.7} parent=79 // pred_check_branch
          %2150 = sbr.rel (%p2148) target = $region84
        $region83: #{transformer_forward.7} parent=79 // pred_region
          _
        $region84: #{transformer_forward.7} parent=79 // pred_fallthru
          _
        // Predicated region
        $region85: #{transformer_forward.7} parent=79 // pred_check
          %p2151 = pneg %p414
        $region86: #{transformer_forward.7} parent=79 // pred_check_branch
          %2153 = sbr.rel (%p2151) target = $region88
        $region87: #{transformer_forward.7} parent=79 // pred_region
          %s2155 = ssub.s32 256, 256
          %2156 = vsyncadd %s2139, %s2155
          %s2157 = smul.addr %s35, 4
          %s2158 = smul.addr %s2157, 64
          %s2159 = scalar_lea.hbm %s16, %s2158
          %s2160 = sshll.u32 %s2142, 4
          %s2161 = int_to_ptr.vmem [resolvable:$true] %s2160
          %2166 = dma.vmem_to_hbm [thread:$0]  %s2161, 256, %s2159, %s2139, 64, 64, 4
        $region88: #{transformer_forward.7} parent=79 // pred_fallthru
          _
        // Predicated region
        $region89: #{transformer_forward.7} parent=79 // pred_check
          %p2167 = pneg %p440
        $region90: #{transformer_forward.7} parent=79 // pred_check_branch
          %2169 = sbr.rel (%p2167) target = $region92
        $region91: #{transformer_forward.7} parent=79 // pred_region
          %s2171 = ssub.s32 256, 256
          %2172 = vsyncadd %s2144, %s2171
          %s2173 = smul.addr %s35, 4
          %s2174 = smul.addr %s2173, 64
          %s2175 = scalar_lea.hbm %s17, %s2174
          %s2176 = sshll.u32 %s2147, 4
          %s2177 = int_to_ptr.vmem [resolvable:$true] %s2176
          %2182 = dma.vmem_to_hbm [thread:$0]  %s2177, 256, %s2175, %s2144, 64, 64, 4
        $region92: #{transformer_forward.7} parent=79 // pred_fallthru
          _
      $region80: #{transformer_forward.7} parent=5 // pred_fallthru
        _
      %p2183 = scmp.le.s32.totalorder 2, %s30
      // Predicated region
      $region93: #{transformer_forward.7} parent=5 // pred_check
        %p2184 = pneg %p2183
      $region94: #{transformer_forward.7} parent=5 // pred_check_branch
        %2186 = sbr.rel (%p2184) target = $region96
      $region95: #{transformer_forward.7} parent=5 // pred_region
        %s2187 = ssub.s32 %s30, 2
        // Predicated region
        $region97: #{transformer_forward.7} parent=95 // pred_check
          %p2188 = pneg %p394
        $region98: #{transformer_forward.7} parent=95 // pred_check_branch
          %2190 = sbr.rel (%p2188) target = $region100
        $region99: #{transformer_forward.7} parent=95 // pred_region
          %p2191 = scmp.lt.s32.totalorder %s36, 1
          %s2192 = scalar_select %p2191, %s36, 1
          %s2193 = smul.addr %s2192, 4
          %s2194 = scalar_lea.vmem %s15, %s2193
        $region100: #{transformer_forward.7} parent=95 // pred_fallthru
          _
        // Predicated region
        $region101: #{transformer_forward.7} parent=95 // pred_check
          %p2195 = pneg %p420
        $region102: #{transformer_forward.7} parent=95 // pred_check_branch
          %2197 = sbr.rel (%p2195) target = $region104
        $region103: #{transformer_forward.7} parent=95 // pred_region
          %s2198 = sand.u32 %s405, 1
          %s2199 = scalar_lea.sflag [#allocation4], %s2198
          %s2200 = sand.u32 %s405, 1
          %s2201 = smul.addr %s2200, 16
          %s2202 = scalar_lea.vmem [#allocation3], %s2201
          %2203 = dma.done %s2199, 256
        $region104: #{transformer_forward.7} parent=95 // pred_fallthru
          _
        // Predicated region
        $region105: #{transformer_forward.7} parent=95 // pred_check
          %p2204 = pneg %p446
        $region106: #{transformer_forward.7} parent=95 // pred_check_branch
          %2206 = sbr.rel (%p2204) target = $region108
        $region107: #{transformer_forward.7} parent=95 // pred_region
          %s2207 = sand.u32 %s431, 1
          %s2208 = scalar_lea.sflag [#allocation6], %s2207
          %s2209 = sand.u32 %s431, 1
          %s2210 = smul.addr %s2209, 16
          %s2211 = scalar_lea.vmem [#allocation5], %s2210
          %2212 = dma.done %s2208, 256
        $region108: #{transformer_forward.7} parent=95 // pred_fallthru
          _
      $region96: #{transformer_forward.7} parent=5 // pred_fallthru
        _
    $region6: #{transformer_forward.7} parent=1 // loop_footer
      %s34 = sadd.s32 1, %s30
    $region7: #{transformer_forward.7} parent=1 // loop_footer_branch
      %29 = sbr.rel target = $region3
    $region8: #{transformer_forward.7} parent=1 // loop_exit
      _
    %2213 = vsyncpa [#allocation4], 1
    %s2214 = scalar_lea.sflag [#allocation4], 1
    %2215 = vsyncpa %s2214, 1
    %2216 = vsyncpa [#allocation6], 1
    %s2217 = scalar_lea.sflag [#allocation6], 1
    %2218 = vsyncpa %s2217, 1

</llo_original>
